<compile_context>
chip_gen: v5e
topology: v5e:2x2
jax: 0.10.0
libtpu: 0.0.40
codegen_flags: <defaults>
</compile_context>

<pallas_src>
import functools
import math

import jax
import jax.numpy as jnp
from jax.experimental import pallas as pl
from jax.experimental.pallas import tpu as pltpu


# ----------------------------------------------------------------------------
# Static model configuration (Python constants -> never traced; fixes the
# previous "heads/dim_head inside the params pytree became tracers" bug).
# ----------------------------------------------------------------------------
NUM_CLASSES = 11
B, T = 2, 8
NUM_PATCHES = 8
DEPTH = 2
HEADS, DIM_HEAD = 2, 8
MLP_DIM = 32          # accepted by ConvTransformer but unused by its layers
CONV_K = 3
EXPANSION = 4
GN_GROUPS = 10        # GroupNorm(10, ...) => dim and 4*dim must be % 10 == 0

# raw per-time-step input dims (flattened)
IMU_IN, KP_IN, E4_IN, BBOX_IN = 24, 12, 6, 8
# embedding dims (e4acc embedding dim = 0 -> contributes nothing)
IMU_DIM, KP_DIM, E4_DIM, BBOX_DIM = 10, 10, 0, 10
HT_DIM, PRINTER_DIM = 5, 5
DIM = IMU_DIM + E4_DIM + BBOX_DIM + KP_DIM + HT_DIM + PRINTER_DIM   # 40
HIDDEN = DIM * EXPANSION                                            # 160
INNER = HEADS * DIM_HEAD                                            # 16
K_IN = IMU_IN + BBOX_IN + KP_IN + 2 + 2                             # 48
OUT_PAD = 128   # lane-dense output slab: [head(11) | feat(40) | zeros]


# ----------------------------------------------------------------------------
# In-kernel helpers (operate on jnp arrays already loaded from VMEM refs)
# ----------------------------------------------------------------------------
def _layer_norm(x, gamma, beta, eps=1e-5):
    mu = jnp.mean(x, axis=-1, keepdims=True)
    var = jnp.mean(jnp.square(x - mu), axis=-1, keepdims=True)
    return (x - mu) * jax.lax.rsqrt(var + eps) * gamma + beta


def _softmax_last(x):
    m = jnp.max(x, axis=-1, keepdims=True)
    e = jnp.exp(x - m)
    return e / jnp.sum(e, axis=-1, keepdims=True)


def _gelu(x):
    # TODO(synk): tanh-approximate GELU (routes to the EUP slot); nn.GELU's
    # exact erf variant differs by ~1e-3 and erf lowering is avoided on purpose.
    return jax.nn.gelu(x, approximate=True)


def _membership(c_dim, num_groups):
    """(C,G) and (G,C) 0/1 group-membership matrices built from 2-D iota."""
    gs = c_dim // num_groups
    c_idx = jax.lax.broadcasted_iota(jnp.int32, (c_dim, num_groups), 0)
    g_idx = jax.lax.broadcasted_iota(jnp.int32, (c_dim, num_groups), 1)
    m = jnp.logical_and(c_idx >= g_idx * gs, c_idx < (g_idx + 1) * gs)
    g_t = jax.lax.broadcasted_iota(jnp.int32, (num_groups, c_dim), 0)
    c_t = jax.lax.broadcasted_iota(jnp.int32, (num_groups, c_dim), 1)
    mt = jnp.logical_and(c_t >= g_t * gs, c_t < (g_t + 1) * gs)
    return m.astype(jnp.float32), mt.astype(jnp.float32)


def _group_norm(x, gamma, beta, m, mt, num_groups, eps=1e-5):
    """GroupNorm over (group-channels x T) for one sample; x is (T, C)."""
    t, c = x.shape
    gs = c // num_groups
    n = float(t * gs)
    col_sum = jnp.sum(x, axis=0, keepdims=True)                              # (1, C)
    mean_c = jnp.dot(jnp.dot(col_sum, m, preferred_element_type=jnp.float32) / n,
                     mt, preferred_element_type=jnp.float32)                 # (1, C)
    d = x - mean_c
    sq_sum = jnp.sum(d * d, axis=0, keepdims=True)
    var_c = jnp.dot(jnp.dot(sq_sum, m, preferred_element_type=jnp.float32) / n,
                    mt, preferred_element_type=jnp.float32)
    return d * jax.lax.rsqrt(var_c + eps) * gamma + beta


# ----------------------------------------------------------------------------
# The fused whole-forward kernel: one grid step == one batch sample
# ----------------------------------------------------------------------------
def _forward_kernel(*refs, depth, heads, dim_head, num_groups):
    (x_ref, w_emb, b_emb, pos,
     a_ln_g, a_ln_b, w_q, w_k, w_v, w_o, b_o,
     c_ln_g, c_ln_b,
     w_c1, b_c1, gn1_g, gn1_b,
     w_c2, b_c2, gn2_g, gn2_b,
     w_c3, b_c3, gn3_g, gn3_b,
     lnf_g, lnf_b, w_slab, b_slab,
     out_ref) = refs

    f32 = jnp.float32
    x_in = x_ref[0]                       # (T, K_IN)
    t = x_in.shape[0]
    dim = w_emb.shape[1]
    hidden = w_c1.shape[2]
    scale = float(dim_head) ** -0.5

    # group-membership matrices (hidden and dim widths), built once
    m_h, mt_h = _membership(hidden, num_groups)
    m_d, mt_d = _membership(dim, num_groups)

    # (T,T) shift matrices implementing the k=3 'same' Conv1d time taps
    r = jax.lax.broadcasted_iota(jnp.int32, (t, t), 0)
    c = jax.lax.broadcasted_iota(jnp.int32, (t, t), 1)
    s_prev = (c == r - 1).astype(f32)     # row t picks x[t-1] (0 at boundary)
    s_next = (c == r + 1).astype(f32)     # row t picks x[t+1] (0 at boundary)

    # fused block-diagonal embedding (incl. ht/printer one-hot cols) + pos emb
    x = jnp.dot(x_in, w_emb[...], preferred_element_type=f32) + b_emb[...] + pos[...]

    for l in range(depth):
        # ---------- PreNorm(Attention) + residual ----------
        h = _layer_norm(x, a_ln_g[l], a_ln_b[l])
        attn = b_o[l]                                         # to_out bias (1, dim)
        for hd in range(heads):
            q = jnp.dot(h, w_q[l, hd], preferred_element_type=f32)   # (T, dh)
            k = jnp.dot(h, w_k[l, hd], preferred_element_type=f32)
            v = jnp.dot(h, w_v[l, hd], preferred_element_type=f32)
            s = jax.lax.dot_general(q, k, (((1,), (1,)), ((), ())),
                                    preferred_element_type=f32) * scale
            p = _softmax_last(s)
            o = jnp.dot(p, v, preferred_element_type=f32)             # (T, dh)
            attn = attn + jnp.dot(o, w_o[l, hd], preferred_element_type=f32)
        x = x + attn

        # ---------- PreNorm(ConvLayer) + residual ----------
        h = _layer_norm(x, c_ln_g[l], c_ln_b[l])
        # Conv1d(dim, hidden, k=1) -> GroupNorm -> GELU
        y = jnp.dot(h, w_c1[l], preferred_element_type=f32) + b_c1[l]
        y = _gelu(_group_norm(y, gn1_g[l], gn1_b[l], m_h, mt_h, num_groups))
        # Conv1d(hidden, hidden, k=3, padding='same') as 3 shifted matmuls
        y_prev = jnp.dot(s_prev, y, preferred_element_type=f32)
        y_next = jnp.dot(s_next, y, preferred_element_type=f32)
        y = (jnp.dot(y_prev, w_c2[l, 0], preferred_element_type=f32)
             + jnp.dot(y, w_c2[l, 1], preferred_element_type=f32)
             + jnp.dot(y_next, w_c2[l, 2], preferred_element_type=f32)
             + b_c2[l])
        y = _gelu(_group_norm(y, gn2_g[l], gn2_b[l], m_h, mt_h, num_groups))
        # Conv1d(hidden, dim, k=1) -> GroupNorm
        y = jnp.dot(y, w_c3[l], preferred_element_type=f32) + b_c3[l]
        y = _group_norm(y, gn3_g[l], gn3_b[l], m_d, mt_d, num_groups)
        x = x + y

    feat = _layer_norm(x, lnf_g[...], lnf_b[...])
    # one lane-dense store: [linear_head(feat) | feat | zero pad] via a single
    # matmul (w_slab holds the head weights plus an identity block)
    out_ref[0] = jnp.dot(feat, w_slab[...], preferred_element_type=f32) + b_slab[...]


# ----------------------------------------------------------------------------
# Deterministic synthetic parameters, packed into kernel-friendly arrays
# ----------------------------------------------------------------------------
class KeyGen:
    def __init__(self, seed):
        self.key = jax.random.PRNGKey(seed)

    def __call__(self):
        self.key, sub = jax.random.split(self.key)
        return sub


def init_params(seed=0):
    kg = KeyGen(seed)

    def unif(shape, fan_in):
        s = 1.0 / math.sqrt(fan_in)
        return jax.random.uniform(kg(), shape, jnp.float32, -s, s)

    # --- Embedding module (per-stream Linear weights as (in, out); tables) ---
    w_imu, b_imu = unif((IMU_IN, IMU_DIM), IMU_IN), unif((IMU_DIM,), IMU_IN)
    w_bbox, b_bbox = unif((BBOX_IN, BBOX_DIM), BBOX_IN), unif((BBOX_DIM,), BBOX_IN)
    w_kp, b_kp = unif((KP_IN, KP_DIM), KP_IN), unif((KP_DIM,), KP_IN)
    ht_tab = jax.random.normal(kg(), (2, HT_DIM), jnp.float32)
    pr_tab = jax.random.normal(kg(), (2, PRINTER_DIM), jnp.float32)
    # e4acc embedding dim = 0 -> nn.Linear(6, 0) contributes nothing to concat

    # fused block-diagonal embedding weight over the concatenated input
    # input cols:  [imu(24) | bbox(8) | keypoint(12) | ht 1-hot(2) | printer 1-hot(2)]
    # output cols: [imu(10) | bbox(10) | keypoint(10) | ht(5) | printer(5)]  (concat order)
    w_emb = jnp.zeros((K_IN, DIM), jnp.float32)
    w_emb = w_emb.at[0:IMU_IN, 0:IMU_DIM].set(w_imu)
    r0, c0 = IMU_IN, IMU_DIM
    w_emb = w_emb.at[r0:r0 + BBOX_IN, c0:c0 + BBOX_DIM].set(w_bbox)
    r0, c0 = r0 + BBOX_IN, c0 + BBOX_DIM
    w_emb = w_emb.at[r0:r0 + KP_IN, c0:c0 + KP_DIM].set(w_kp)
    r0, c0 = r0 + KP_IN, c0 + KP_DIM
    w_emb = w_emb.at[r0:r0 + 2, c0:c0 + HT_DIM].set(ht_tab)
    r0, c0 = r0 + 2, c0 + HT_DIM
    w_emb = w_emb.at[r0:r0 + 2, c0:c0 + PRINTER_DIM].set(pr_tab)
    b_emb = jnp.concatenate(
        [b_imu, b_bbox, b_kp,
         jnp.zeros((HT_DIM,), jnp.float32),
         jnp.zeros((PRINTER_DIM,), jnp.float32)]).reshape(1, DIM)

    pos = jax.random.normal(kg(), (NUM_PATCHES + 1, DIM), jnp.float32)

    # --- ConvTransformer layers (stacked along a leading depth axis) ---
    L = DEPTH
    w_q, w_k, w_v, w_o, b_o = [], [], [], [], []
    w_c1, b_c1, w_c2, b_c2, w_c3, b_c3 = [], [], [], [], [], []
    for _ in range(L):
        wqkv = unif((DIM, 3 * INNER), DIM)                 # Linear(dim, inner*3, bias=False)
        qp, kp, vp = jnp.split(wqkv, 3, axis=1)            # each (DIM, INNER)
        w_q.append(qp.reshape(DIM, HEADS, DIM_HEAD).transpose(1, 0, 2))
        w_k.append(kp.reshape(DIM, HEADS, DIM_HEAD).transpose(1, 0, 2))
        w_v.append(vp.reshape(DIM, HEADS, DIM_HEAD).transpose(1, 0, 2))
        wo = unif((INNER, DIM), INNER)                     # to_out Linear
        w_o.append(wo.reshape(HEADS, DIM_HEAD, DIM))
        b_o.append(unif((1, DIM), INNER))
        w_c1.append(unif((DIM, HIDDEN), DIM))              # Conv1d(dim, hidden, 1) as (Cin, Cout)
        b_c1.append(unif((1, HIDDEN), DIM))
        w_c2.append(unif((CONV_K, HIDDEN, HIDDEN), HIDDEN * CONV_K))  # taps (k, Cin, Cout)
        b_c2.append(unif((1, HIDDEN), HIDDEN * CONV_K))
        w_c3.append(unif((HIDDEN, DIM), HIDDEN))           # Conv1d(hidden, dim, 1)
        b_c3.append(unif((1, DIM), HIDDEN))

    params = {
        "w_emb": w_emb, "b_emb": b_emb, "pos": pos,
        "a_ln_g": jnp.ones((L, 1, DIM), jnp.float32),
        "a_ln_b": jnp.zeros((L, 1, DIM), jnp.float32),
        "w_q": jnp.stack(w_q), "w_k": jnp.stack(w_k), "w_v": jnp.stack(w_v),
        "w_o": jnp.stack(w_o), "b_o": jnp.stack(b_o),
        "c_ln_g": jnp.ones((L, 1, DIM), jnp.float32),
        "c_ln_b": jnp.zeros((L, 1, DIM), jnp.float32),
        "w_c1": jnp.stack(w_c1), "b_c1": jnp.stack(b_c1),
        "gn1_g": jnp.ones((L, 1, HIDDEN), jnp.float32),
        "gn1_b": jnp.zeros((L, 1, HIDDEN), jnp.float32),
        "w_c2": jnp.stack(w_c2), "b_c2": jnp.stack(b_c2),
        "gn2_g": jnp.ones((L, 1, HIDDEN), jnp.float32),
        "gn2_b": jnp.zeros((L, 1, HIDDEN), jnp.float32),
        "w_c3": jnp.stack(w_c3), "b_c3": jnp.stack(b_c3),
        "gn3_g": jnp.ones((L, 1, DIM), jnp.float32),
        "gn3_b": jnp.zeros((L, 1, DIM), jnp.float32),
        "lnf_g": jnp.ones((1, DIM), jnp.float32),
        "lnf_b": jnp.zeros((1, DIM), jnp.float32),
    }

    # final linear head folded into a lane-dense (DIM, 128) output slab:
    # cols [0:11] = head weights, cols [11:51] = identity (copies feat), rest 0.
    w_head = unif((DIM, NUM_CLASSES), DIM)
    b_head = unif((NUM_CLASSES,), DIM)
    w_slab = jnp.zeros((DIM, OUT_PAD), jnp.float32)
    w_slab = w_slab.at[:, :NUM_CLASSES].set(w_head)
    w_slab = w_slab.at[:, NUM_CLASSES:NUM_CLASSES + DIM].set(jnp.eye(DIM, dtype=jnp.float32))
    b_slab = jnp.zeros((1, OUT_PAD), jnp.float32)
    b_slab = b_slab.at[:, :NUM_CLASSES].set(b_head.reshape(1, NUM_CLASSES))
    params["w_slab"] = w_slab
    params["b_slab"] = b_slab
    return params


# ----------------------------------------------------------------------------
# Host wrapper: one pallas_call for the whole forward pass
# ----------------------------------------------------------------------------
def _const_index_map(ndim):
    return lambda i: (0,) * ndim


def model_forward(params, imu, keypoint, e4acc, bbox, ht, printer):
    del e4acc  # e4acc embedding dim is 0 -> nn.Linear(6, 0) output is empty
    b, t = imu.shape[0], imu.shape[1]

    # concatenated raw features; ht/printer nn.Embedding(2, .) lookups become
    # one-hot columns of the fused block-diagonal embedding matmul.
    x_in = jnp.concatenate([
        imu.reshape(b, t, -1).astype(jnp.float32),        # 'b t f d   -> b t (f d)'
        bbox.reshape(b, t, -1).astype(jnp.float32),
        keypoint.reshape(b, t, -1).astype(jnp.float32),   # 'b t f d n -> b t (f d n)'
        jax.nn.one_hot(ht, 2, dtype=jnp.float32),
        jax.nn.one_hot(printer, 2, dtype=jnp.float32),
    ], axis=-1)

    plist = [
        params["w_emb"], params["b_emb"], params["pos"][:t],
        params["a_ln_g"], params["a_ln_b"],
        params["w_q"], params["w_k"], params["w_v"], params["w_o"], params["b_o"],
        params["c_ln_g"], params["c_ln_b"],
        params["w_c1"], params["b_c1"], params["gn1_g"], params["gn1_b"],
        params["w_c2"], params["b_c2"], params["gn2_g"], params["gn2_b"],
        params["w_c3"], params["b_c3"], params["gn3_g"], params["gn3_b"],
        params["lnf_g"], params["lnf_b"], params["w_slab"], params["b_slab"],
    ]

    kernel = functools.partial(_forward_kernel, depth=DEPTH, heads=HEADS,
                               dim_head=DIM_HEAD, num_groups=GN_GROUPS)

    out = pl.pallas_call(
        kernel,
        out_shape=jax.ShapeDtypeStruct((b, t, OUT_PAD), jnp.float32),
        grid=(b,),
        in_specs=[pl.BlockSpec((1, t, x_in.shape[-1]), lambda i: (i, 0, 0))]
                 + [pl.BlockSpec(p.shape, _const_index_map(p.ndim)) for p in plist],
        out_specs=pl.BlockSpec((1, t, OUT_PAD), lambda i: (i, 0, 0)),
        compiler_params=pltpu.CompilerParams(dimension_semantics=("parallel",)),
    )(x_in, *plist)

    head = out[:, :, :NUM_CLASSES]
    feat = out[:, :, NUM_CLASSES:NUM_CLASSES + DIM]
    return head, feat


# ----------------------------------------------------------------------------
# Main
# ----------------------------------------------------------------------------
if __name__ == "__main__":
    params = init_params(0)

    key = jax.random.PRNGKey(0)
    k_imu, k_kp, k_e4, k_bbox, k_ht, k_pr = jax.random.split(key, 6)
    imu = jax.random.normal(k_imu, (B, T, 4, 6), jnp.float32)          # b t f d
    keypoint = jax.random.normal(k_kp, (B, T, 2, 2, 3), jnp.float32)   # b t f d n
    e4acc = jax.random.normal(k_e4, (B, T, 2, 3), jnp.float32)         # b t f d (emb dim 0)
    bbox = jax.random.normal(k_bbox, (B, T, 2, 4), jnp.float32)        # b t f d
    ht = jax.random.randint(k_ht, (B, T), 0, 2, jnp.int32)
    printer = jax.random.randint(k_pr, (B, T), 0, 2, jnp.int32)

    fwd = jax.jit(model_forward)
    head, feat = fwd(params, imu, keypoint, e4acc, bbox, ht, printer)
    head = jax.block_until_ready(head)
    feat = jax.block_until_ready(feat)

    assert head.shape == (B, T, NUM_CLASSES)
    assert feat.shape == (B, T, DIM)
    assert bool(jnp.all(jnp.isfinite(head))) and bool(jnp.all(jnp.isfinite(feat)))
    print("KERNEL_OK")
</pallas_src>

<mosaic_0001>
module attributes {stable_mosaic.version = 11 : i64} {
  func.func @_forward_kernel(%arg0: i32, %arg1: memref<1x8x48xf32, #tpu.memory_space<vmem>>, %arg2: memref<48x40xf32, #tpu.memory_space<vmem>>, %arg3: memref<1x40xf32, #tpu.memory_space<vmem>>, %arg4: memref<8x40xf32, #tpu.memory_space<vmem>>, %arg5: memref<2x1x40xf32, #tpu.memory_space<vmem>>, %arg6: memref<2x1x40xf32, #tpu.memory_space<vmem>>, %arg7: memref<2x2x40x8xf32, #tpu.memory_space<vmem>>, %arg8: memref<2x2x40x8xf32, #tpu.memory_space<vmem>>, %arg9: memref<2x2x40x8xf32, #tpu.memory_space<vmem>>, %arg10: memref<2x2x8x40xf32, #tpu.memory_space<vmem>>, %arg11: memref<2x1x40xf32, #tpu.memory_space<vmem>>, %arg12: memref<2x1x40xf32, #tpu.memory_space<vmem>>, %arg13: memref<2x1x40xf32, #tpu.memory_space<vmem>>, %arg14: memref<2x40x160xf32, #tpu.memory_space<vmem>>, %arg15: memref<2x1x160xf32, #tpu.memory_space<vmem>>, %arg16: memref<2x1x160xf32, #tpu.memory_space<vmem>>, %arg17: memref<2x1x160xf32, #tpu.memory_space<vmem>>, %arg18: memref<2x3x160x160xf32, #tpu.memory_space<vmem>>, %arg19: memref<2x1x160xf32, #tpu.memory_space<vmem>>, %arg20: memref<2x1x160xf32, #tpu.memory_space<vmem>>, %arg21: memref<2x1x160xf32, #tpu.memory_space<vmem>>, %arg22: memref<2x160x40xf32, #tpu.memory_space<vmem>>, %arg23: memref<2x1x40xf32, #tpu.memory_space<vmem>>, %arg24: memref<2x1x40xf32, #tpu.memory_space<vmem>>, %arg25: memref<2x1x40xf32, #tpu.memory_space<vmem>>, %arg26: memref<1x40xf32, #tpu.memory_space<vmem>>, %arg27: memref<1x40xf32, #tpu.memory_space<vmem>>, %arg28: memref<40x128xf32, #tpu.memory_space<vmem>>, %arg29: memref<1x128xf32, #tpu.memory_space<vmem>>, %arg30: memref<1x8x128xf32, #tpu.memory_space<vmem>>) attributes {dimension_semantics = [#tpu.dimension_semantics<parallel>], iteration_bounds = array<i64: 2>, scalar_prefetch = 0 : i64, scratch_operands = 0 : i64, tpu.core_type = #tpu.core_type<tc>, window_params = [{transform_indices = @transform_0, window_bounds = array<i64: 1, 8, 48>}, {pipeline_mode = #tpu.pipeline_mode<synchronous>, transform_indices = @transform_1, window_bounds = array<i64: 48, 40>}, {pipeline_mode = #tpu.pipeline_mode<synchronous>, transform_indices = @transform_2, window_bounds = array<i64: 1, 40>}, {pipeline_mode = #tpu.pipeline_mode<synchronous>, transform_indices = @transform_3, window_bounds = array<i64: 8, 40>}, {pipeline_mode = #tpu.pipeline_mode<synchronous>, transform_indices = @transform_4, window_bounds = array<i64: 2, 1, 40>}, {pipeline_mode = #tpu.pipeline_mode<synchronous>, transform_indices = @transform_5, window_bounds = array<i64: 2, 1, 40>}, {pipeline_mode = #tpu.pipeline_mode<synchronous>, transform_indices = @transform_6, window_bounds = array<i64: 2, 2, 40, 8>}, {pipeline_mode = #tpu.pipeline_mode<synchronous>, transform_indices = @transform_7, window_bounds = array<i64: 2, 2, 40, 8>}, {pipeline_mode = #tpu.pipeline_mode<synchronous>, transform_indices = @transform_8, window_bounds = array<i64: 2, 2, 40, 8>}, {pipeline_mode = #tpu.pipeline_mode<synchronous>, transform_indices = @transform_9, window_bounds = array<i64: 2, 2, 8, 40>}, {pipeline_mode = #tpu.pipeline_mode<synchronous>, transform_indices = @transform_10, window_bounds = array<i64: 2, 1, 40>}, {pipeline_mode = #tpu.pipeline_mode<synchronous>, transform_indices = @transform_11, window_bounds = array<i64: 2, 1, 40>}, {pipeline_mode = #tpu.pipeline_mode<synchronous>, transform_indices = @transform_12, window_bounds = array<i64: 2, 1, 40>}, {pipeline_mode = #tpu.pipeline_mode<synchronous>, transform_indices = @transform_13, window_bounds = array<i64: 2, 40, 160>}, {pipeline_mode = #tpu.pipeline_mode<synchronous>, transform_indices = @transform_14, window_bounds = array<i64: 2, 1, 160>}, {pipeline_mode = #tpu.pipeline_mode<synchronous>, transform_indices = @transform_15, window_bounds = array<i64: 2, 1, 160>}, {pipeline_mode = #tpu.pipeline_mode<synchronous>, transform_indices = @transform_16, window_bounds = array<i64: 2, 1, 160>}, {pipeline_mode = #tpu.pipeline_mode<synchronous>, transform_indices = @transform_17, window_bounds = array<i64: 2, 3, 160, 160>}, {pipeline_mode = #tpu.pipeline_mode<synchronous>, transform_indices = @transform_18, window_bounds = array<i64: 2, 1, 160>}, {pipeline_mode = #tpu.pipeline_mode<synchronous>, transform_indices = @transform_19, window_bounds = array<i64: 2, 1, 160>}, {pipeline_mode = #tpu.pipeline_mode<synchronous>, transform_indices = @transform_20, window_bounds = array<i64: 2, 1, 160>}, {pipeline_mode = #tpu.pipeline_mode<synchronous>, transform_indices = @transform_21, window_bounds = array<i64: 2, 160, 40>}, {pipeline_mode = #tpu.pipeline_mode<synchronous>, transform_indices = @transform_22, window_bounds = array<i64: 2, 1, 40>}, {pipeline_mode = #tpu.pipeline_mode<synchronous>, transform_indices = @transform_23, window_bounds = array<i64: 2, 1, 40>}, {pipeline_mode = #tpu.pipeline_mode<synchronous>, transform_indices = @transform_24, window_bounds = array<i64: 2, 1, 40>}, {pipeline_mode = #tpu.pipeline_mode<synchronous>, transform_indices = @transform_25, window_bounds = array<i64: 1, 40>}, {pipeline_mode = #tpu.pipeline_mode<synchronous>, transform_indices = @transform_26, window_bounds = array<i64: 1, 40>}, {pipeline_mode = #tpu.pipeline_mode<synchronous>, transform_indices = @transform_27, window_bounds = array<i64: 40, 128>}, {pipeline_mode = #tpu.pipeline_mode<synchronous>, transform_indices = @transform_28, window_bounds = array<i64: 1, 128>}, {transform_indices = @transform_29, window_bounds = array<i64: 1, 8, 128>}]} {
    %c0 = arith.constant 0 : index
    %c0_0 = arith.constant 0 : index
    %c0_1 = arith.constant 0 : index
    %0 = vector.load %arg1[%c0, %c0_0, %c0_1] : memref<1x8x48xf32, #tpu.memory_space<vmem>>, vector<1x8x48xf32>
    %1 = vector.shape_cast %0 : vector<1x8x48xf32> to vector<8x48xf32>
    %2 = tpu.iota {dimensions = array<i32: 0>} : vector<160x10xi32>
    %3 = tpu.iota {dimensions = array<i32: 1>} : vector<160x10xi32>
    %c16_i32 = arith.constant 16 : i32
    %4 = vector.broadcast %c16_i32 : i32 to vector<160x10xi32>
    %5 = arith.muli %3, %4 : vector<160x10xi32>
    %6 = arith.cmpi sge, %2, %5 : vector<160x10xi32>
    %c1_i32 = arith.constant 1 : i32
    %7 = vector.broadcast %c1_i32 : i32 to vector<160x10xi32>
    %8 = arith.addi %3, %7 : vector<160x10xi32>
    %c16_i32_2 = arith.constant 16 : i32
    %9 = vector.broadcast %c16_i32_2 : i32 to vector<160x10xi32>
    %10 = arith.muli %8, %9 : vector<160x10xi32>
    %11 = arith.cmpi slt, %2, %10 : vector<160x10xi32>
    %12 = arith.andi %6, %11 : vector<160x10xi1>
    %13 = tpu.iota {dimensions = array<i32: 0>} : vector<10x160xi32>
    %14 = tpu.iota {dimensions = array<i32: 1>} : vector<10x160xi32>
    %c16_i32_3 = arith.constant 16 : i32
    %15 = vector.broadcast %c16_i32_3 : i32 to vector<10x160xi32>
    %16 = arith.muli %13, %15 : vector<10x160xi32>
    %17 = arith.cmpi sge, %14, %16 : vector<10x160xi32>
    %c1_i32_4 = arith.constant 1 : i32
    %18 = vector.broadcast %c1_i32_4 : i32 to vector<10x160xi32>
    %19 = arith.addi %13, %18 : vector<10x160xi32>
    %c16_i32_5 = arith.constant 16 : i32
    %20 = vector.broadcast %c16_i32_5 : i32 to vector<10x160xi32>
    %21 = arith.muli %19, %20 : vector<10x160xi32>
    %22 = arith.cmpi slt, %14, %21 : vector<10x160xi32>
    %23 = arith.andi %17, %22 : vector<10x160xi1>
    %24 = arith.extui %12 : vector<160x10xi1> to vector<160x10xi32>
    %25 = arith.sitofp %24 : vector<160x10xi32> to vector<160x10xf32>
    %26 = arith.extui %23 : vector<10x160xi1> to vector<10x160xi32>
    %27 = arith.sitofp %26 : vector<10x160xi32> to vector<10x160xf32>
    %28 = tpu.iota {dimensions = array<i32: 0>} : vector<40x10xi32>
    %29 = tpu.iota {dimensions = array<i32: 1>} : vector<40x10xi32>
    %c4_i32 = arith.constant 4 : i32
    %30 = vector.broadcast %c4_i32 : i32 to vector<40x10xi32>
    %31 = arith.muli %29, %30 : vector<40x10xi32>
    %32 = arith.cmpi sge, %28, %31 : vector<40x10xi32>
    %c1_i32_6 = arith.constant 1 : i32
    %33 = vector.broadcast %c1_i32_6 : i32 to vector<40x10xi32>
    %34 = arith.addi %29, %33 : vector<40x10xi32>
    %c4_i32_7 = arith.constant 4 : i32
    %35 = vector.broadcast %c4_i32_7 : i32 to vector<40x10xi32>
    %36 = arith.muli %34, %35 : vector<40x10xi32>
    %37 = arith.cmpi slt, %28, %36 : vector<40x10xi32>
    %38 = arith.andi %32, %37 : vector<40x10xi1>
    %39 = tpu.iota {dimensions = array<i32: 0>} : vector<10x40xi32>
    %40 = tpu.iota {dimensions = array<i32: 1>} : vector<10x40xi32>
    %c4_i32_8 = arith.constant 4 : i32
    %41 = vector.broadcast %c4_i32_8 : i32 to vector<10x40xi32>
    %42 = arith.muli %39, %41 : vector<10x40xi32>
    %43 = arith.cmpi sge, %40, %42 : vector<10x40xi32>
    %c1_i32_9 = arith.constant 1 : i32
    %44 = vector.broadcast %c1_i32_9 : i32 to vector<10x40xi32>
    %45 = arith.addi %39, %44 : vector<10x40xi32>
    %c4_i32_10 = arith.constant 4 : i32
    %46 = vector.broadcast %c4_i32_10 : i32 to vector<10x40xi32>
    %47 = arith.muli %45, %46 : vector<10x40xi32>
    %48 = arith.cmpi slt, %40, %47 : vector<10x40xi32>
    %49 = arith.andi %43, %48 : vector<10x40xi1>
    %50 = arith.extui %38 : vector<40x10xi1> to vector<40x10xi32>
    %51 = arith.sitofp %50 : vector<40x10xi32> to vector<40x10xf32>
    %52 = arith.extui %49 : vector<10x40xi1> to vector<10x40xi32>
    %53 = arith.sitofp %52 : vector<10x40xi32> to vector<10x40xf32>
    %54 = tpu.iota {dimensions = array<i32: 0>} : vector<8x8xi32>
    %55 = tpu.iota {dimensions = array<i32: 1>} : vector<8x8xi32>
    %c1_i32_11 = arith.constant 1 : i32
    %56 = vector.broadcast %c1_i32_11 : i32 to vector<8x8xi32>
    %57 = arith.subi %54, %56 : vector<8x8xi32>
    %58 = arith.cmpi eq, %55, %57 : vector<8x8xi32>
    %59 = arith.extui %58 : vector<8x8xi1> to vector<8x8xi32>
    %60 = arith.sitofp %59 : vector<8x8xi32> to vector<8x8xf32>
    %c1_i32_12 = arith.constant 1 : i32
    %61 = vector.broadcast %c1_i32_12 : i32 to vector<8x8xi32>
    %62 = arith.addi %54, %61 : vector<8x8xi32>
    %63 = arith.cmpi eq, %55, %62 : vector<8x8xi32>
    %64 = arith.extui %63 : vector<8x8xi1> to vector<8x8xi32>
    %65 = arith.sitofp %64 : vector<8x8xi32> to vector<8x8xf32>
    %c0_13 = arith.constant 0 : index
    %c0_14 = arith.constant 0 : index
    %66 = vector.load %arg2[%c0_13, %c0_14] : memref<48x40xf32, #tpu.memory_space<vmem>>, vector<48x40xf32>
    %cst = arith.constant dense<0.000000e+00> : vector<8x40xf32>
    %67 = tpu.matmul %1, %66, %cst {dimension_numbers = #tpu.dot_dimension_numbers<[1], [0], [0], [1], [0, 0, 1, 1], [], []>} : vector<8x48xf32>, vector<48x40xf32>, vector<8x40xf32> -> vector<8x40xf32>
    %c0_15 = arith.constant 0 : index
    %c0_16 = arith.constant 0 : index
    %68 = vector.load %arg3[%c0_15, %c0_16] : memref<1x40xf32, #tpu.memory_space<vmem>>, vector<1x40xf32>
    %69 = vector.broadcast %68 : vector<1x40xf32> to vector<8x40xf32>
    %70 = arith.addf %67, %69 : vector<8x40xf32>
    %c0_17 = arith.constant 0 : index
    %c0_18 = arith.constant 0 : index
    %71 = vector.load %arg4[%c0_17, %c0_18] : memref<8x40xf32, #tpu.memory_space<vmem>>, vector<8x40xf32>
    %72 = arith.addf %70, %71 : vector<8x40xf32>
    %c0_19 = arith.constant 0 : index
    %c0_20 = arith.constant 0 : index
    %c0_21 = arith.constant 0 : index
    %73 = vector.load %arg5[%c0_19, %c0_20, %c0_21] : memref<2x1x40xf32, #tpu.memory_space<vmem>>, vector<1x1x40xf32>
    %74 = vector.shape_cast %73 : vector<1x1x40xf32> to vector<1x40xf32>
    %c0_22 = arith.constant 0 : index
    %c0_23 = arith.constant 0 : index
    %c0_24 = arith.constant 0 : index
    %75 = vector.load %arg6[%c0_22, %c0_23, %c0_24] : memref<2x1x40xf32, #tpu.memory_space<vmem>>, vector<1x1x40xf32>
    %76 = vector.shape_cast %75 : vector<1x1x40xf32> to vector<1x40xf32>
    %cst_25 = arith.constant dense<0.000000e+00> : vector<8xf32>
    %77 = vector.multi_reduction <add>, %72, %cst_25 [1] : vector<8x40xf32> to vector<8xf32>
    %78 = vector.shape_cast %77 : vector<8xf32> to vector<8x1xf32>
    %cst_26 = arith.constant 4.000000e+01 : f32
    %79 = vector.broadcast %cst_26 : f32 to vector<8x1xf32>
    %80 = arith.divf %78, %79 : vector<8x1xf32>
    %81 = vector.broadcast %80 : vector<8x1xf32> to vector<8x40xf32>
    %82 = arith.subf %72, %81 : vector<8x40xf32>
    %83 = arith.mulf %82, %82 : vector<8x40xf32>
    %cst_27 = arith.constant dense<0.000000e+00> : vector<8xf32>
    %84 = vector.multi_reduction <add>, %83, %cst_27 [1] : vector<8x40xf32> to vector<8xf32>
    %85 = vector.shape_cast %84 : vector<8xf32> to vector<8x1xf32>
    %cst_28 = arith.constant 4.000000e+01 : f32
    %86 = vector.broadcast %cst_28 : f32 to vector<8x1xf32>
    %87 = arith.divf %85, %86 : vector<8x1xf32>
    %88 = vector.broadcast %80 : vector<8x1xf32> to vector<8x40xf32>
    %89 = arith.subf %72, %88 : vector<8x40xf32>
    %cst_29 = arith.constant 9.99999974E-6 : f32
    %90 = vector.broadcast %cst_29 : f32 to vector<8x1xf32>
    %91 = arith.addf %87, %90 : vector<8x1xf32>
    %92 = math.rsqrt %91 : vector<8x1xf32>
    %93 = vector.broadcast %92 : vector<8x1xf32> to vector<8x40xf32>
    %94 = arith.mulf %89, %93 : vector<8x40xf32>
    %95 = vector.broadcast %74 : vector<1x40xf32> to vector<8x40xf32>
    %96 = arith.mulf %94, %95 : vector<8x40xf32>
    %97 = vector.broadcast %76 : vector<1x40xf32> to vector<8x40xf32>
    %98 = arith.addf %96, %97 : vector<8x40xf32>
    %c0_30 = arith.constant 0 : index
    %c0_31 = arith.constant 0 : index
    %c0_32 = arith.constant 0 : index
    %99 = vector.load %arg11[%c0_30, %c0_31, %c0_32] : memref<2x1x40xf32, #tpu.memory_space<vmem>>, vector<1x1x40xf32>
    %100 = vector.shape_cast %99 : vector<1x1x40xf32> to vector<1x40xf32>
    %c0_33 = arith.constant 0 : index
    %c0_34 = arith.constant 0 : index
    %c0_35 = arith.constant 0 : index
    %c0_36 = arith.constant 0 : index
    %101 = vector.load %arg7[%c0_33, %c0_34, %c0_35, %c0_36] : memref<2x2x40x8xf32, #tpu.memory_space<vmem>>, vector<1x1x40x8xf32>
    %102 = vector.shape_cast %101 : vector<1x1x40x8xf32> to vector<40x8xf32>
    %cst_37 = arith.constant dense<0.000000e+00> : vector<8x8xf32>
    %103 = tpu.matmul %98, %102, %cst_37 {dimension_numbers = #tpu.dot_dimension_numbers<[1], [0], [0], [1], [0, 0, 1, 1], [], []>} : vector<8x40xf32>, vector<40x8xf32>, vector<8x8xf32> -> vector<8x8xf32>
    %c0_38 = arith.constant 0 : index
    %c0_39 = arith.constant 0 : index
    %c0_40 = arith.constant 0 : index
    %c0_41 = arith.constant 0 : index
    %104 = vector.load %arg8[%c0_38, %c0_39, %c0_40, %c0_41] : memref<2x2x40x8xf32, #tpu.memory_space<vmem>>, vector<1x1x40x8xf32>
    %105 = vector.shape_cast %104 : vector<1x1x40x8xf32> to vector<40x8xf32>
    %cst_42 = arith.constant dense<0.000000e+00> : vector<8x8xf32>
    %106 = tpu.matmul %98, %105, %cst_42 {dimension_numbers = #tpu.dot_dimension_numbers<[1], [0], [0], [1], [0, 0, 1, 1], [], []>} : vector<8x40xf32>, vector<40x8xf32>, vector<8x8xf32> -> vector<8x8xf32>
    %c0_43 = arith.constant 0 : index
    %c0_44 = arith.constant 0 : index
    %c0_45 = arith.constant 0 : index
    %c0_46 = arith.constant 0 : index
    %107 = vector.load %arg9[%c0_43, %c0_44, %c0_45, %c0_46] : memref<2x2x40x8xf32, #tpu.memory_space<vmem>>, vector<1x1x40x8xf32>
    %108 = vector.shape_cast %107 : vector<1x1x40x8xf32> to vector<40x8xf32>
    %cst_47 = arith.constant dense<0.000000e+00> : vector<8x8xf32>
    %109 = tpu.matmul %98, %108, %cst_47 {dimension_numbers = #tpu.dot_dimension_numbers<[1], [0], [0], [1], [0, 0, 1, 1], [], []>} : vector<8x40xf32>, vector<40x8xf32>, vector<8x8xf32> -> vector<8x8xf32>
    %cst_48 = arith.constant dense<0.000000e+00> : vector<8x8xf32>
    %110 = tpu.matmul %103, %106, %cst_48 {dimension_numbers = #tpu.dot_dimension_numbers<[1], [1], [0], [0], [0, 0, 1, 0], [], []>} : vector<8x8xf32>, vector<8x8xf32>, vector<8x8xf32> -> vector<8x8xf32>
    %cst_49 = arith.constant 0.353553385 : f32
    %111 = vector.broadcast %cst_49 : f32 to vector<8x8xf32>
    %112 = arith.mulf %110, %111 : vector<8x8xf32>
    %cst_50 = arith.constant dense<0xFF800000> : vector<8xf32>
    %113 = vector.multi_reduction <maximumf>, %112, %cst_50 [1] : vector<8x8xf32> to vector<8xf32>
    %114 = vector.shape_cast %113 : vector<8xf32> to vector<8x1xf32>
    %115 = vector.broadcast %114 : vector<8x1xf32> to vector<8x8xf32>
    %116 = arith.subf %112, %115 : vector<8x8xf32>
    %117 = math.exp %116 : vector<8x8xf32>
    %cst_51 = arith.constant dense<0.000000e+00> : vector<8xf32>
    %118 = vector.multi_reduction <add>, %117, %cst_51 [1] : vector<8x8xf32> to vector<8xf32>
    %119 = vector.shape_cast %118 : vector<8xf32> to vector<8x1xf32>
    %120 = vector.broadcast %119 : vector<8x1xf32> to vector<8x8xf32>
    %121 = arith.divf %117, %120 : vector<8x8xf32>
    %cst_52 = arith.constant dense<0.000000e+00> : vector<8x8xf32>
    %122 = tpu.matmul %121, %109, %cst_52 {dimension_numbers = #tpu.dot_dimension_numbers<[1], [0], [0], [1], [0, 0, 1, 1], [], []>} : vector<8x8xf32>, vector<8x8xf32>, vector<8x8xf32> -> vector<8x8xf32>
    %c0_53 = arith.constant 0 : index
    %c0_54 = arith.constant 0 : index
    %c0_55 = arith.constant 0 : index
    %c0_56 = arith.constant 0 : index
    %123 = vector.load %arg10[%c0_53, %c0_54, %c0_55, %c0_56] : memref<2x2x8x40xf32, #tpu.memory_space<vmem>>, vector<1x1x8x40xf32>
    %124 = vector.shape_cast %123 : vector<1x1x8x40xf32> to vector<8x40xf32>
    %cst_57 = arith.constant dense<0.000000e+00> : vector<8x40xf32>
    %125 = tpu.matmul %122, %124, %cst_57 {dimension_numbers = #tpu.dot_dimension_numbers<[1], [0], [0], [1], [0, 0, 1, 1], [], []>} : vector<8x8xf32>, vector<8x40xf32>, vector<8x40xf32> -> vector<8x40xf32>
    %126 = vector.broadcast %100 : vector<1x40xf32> to vector<8x40xf32>
    %127 = arith.addf %126, %125 : vector<8x40xf32>
    %c0_58 = arith.constant 0 : index
    %c1 = arith.constant 1 : index
    %c0_59 = arith.constant 0 : index
    %c0_60 = arith.constant 0 : index
    %128 = vector.load %arg7[%c0_58, %c1, %c0_59, %c0_60] : memref<2x2x40x8xf32, #tpu.memory_space<vmem>>, vector<1x1x40x8xf32>
    %129 = vector.shape_cast %128 : vector<1x1x40x8xf32> to vector<40x8xf32>
    %cst_61 = arith.constant dense<0.000000e+00> : vector<8x8xf32>
    %130 = tpu.matmul %98, %129, %cst_61 {dimension_numbers = #tpu.dot_dimension_numbers<[1], [0], [0], [1], [0, 0, 1, 1], [], []>} : vector<8x40xf32>, vector<40x8xf32>, vector<8x8xf32> -> vector<8x8xf32>
    %c0_62 = arith.constant 0 : index
    %c1_63 = arith.constant 1 : index
    %c0_64 = arith.constant 0 : index
    %c0_65 = arith.constant 0 : index
    %131 = vector.load %arg8[%c0_62, %c1_63, %c0_64, %c0_65] : memref<2x2x40x8xf32, #tpu.memory_space<vmem>>, vector<1x1x40x8xf32>
    %132 = vector.shape_cast %131 : vector<1x1x40x8xf32> to vector<40x8xf32>
    %cst_66 = arith.constant dense<0.000000e+00> : vector<8x8xf32>
    %133 = tpu.matmul %98, %132, %cst_66 {dimension_numbers = #tpu.dot_dimension_numbers<[1], [0], [0], [1], [0, 0, 1, 1], [], []>} : vector<8x40xf32>, vector<40x8xf32>, vector<8x8xf32> -> vector<8x8xf32>
    %c0_67 = arith.constant 0 : index
    %c1_68 = arith.constant 1 : index
    %c0_69 = arith.constant 0 : index
    %c0_70 = arith.constant 0 : index
    %134 = vector.load %arg9[%c0_67, %c1_68, %c0_69, %c0_70] : memref<2x2x40x8xf32, #tpu.memory_space<vmem>>, vector<1x1x40x8xf32>
    %135 = vector.shape_cast %134 : vector<1x1x40x8xf32> to vector<40x8xf32>
    %cst_71 = arith.constant dense<0.000000e+00> : vector<8x8xf32>
    %136 = tpu.matmul %98, %135, %cst_71 {dimension_numbers = #tpu.dot_dimension_numbers<[1], [0], [0], [1], [0, 0, 1, 1], [], []>} : vector<8x40xf32>, vector<40x8xf32>, vector<8x8xf32> -> vector<8x8xf32>
    %cst_72 = arith.constant dense<0.000000e+00> : vector<8x8xf32>
    %137 = tpu.matmul %130, %133, %cst_72 {dimension_numbers = #tpu.dot_dimension_numbers<[1], [1], [0], [0], [0, 0, 1, 0], [], []>} : vector<8x8xf32>, vector<8x8xf32>, vector<8x8xf32> -> vector<8x8xf32>
    %cst_73 = arith.constant 0.353553385 : f32
    %138 = vector.broadcast %cst_73 : f32 to vector<8x8xf32>
    %139 = arith.mulf %137, %138 : vector<8x8xf32>
    %cst_74 = arith.constant dense<0xFF800000> : vector<8xf32>
    %140 = vector.multi_reduction <maximumf>, %139, %cst_74 [1] : vector<8x8xf32> to vector<8xf32>
    %141 = vector.shape_cast %140 : vector<8xf32> to vector<8x1xf32>
    %142 = vector.broadcast %141 : vector<8x1xf32> to vector<8x8xf32>
    %143 = arith.subf %139, %142 : vector<8x8xf32>
    %144 = math.exp %143 : vector<8x8xf32>
    %cst_75 = arith.constant dense<0.000000e+00> : vector<8xf32>
    %145 = vector.multi_reduction <add>, %144, %cst_75 [1] : vector<8x8xf32> to vector<8xf32>
    %146 = vector.shape_cast %145 : vector<8xf32> to vector<8x1xf32>
    %147 = vector.broadcast %146 : vector<8x1xf32> to vector<8x8xf32>
    %148 = arith.divf %144, %147 : vector<8x8xf32>
    %cst_76 = arith.constant dense<0.000000e+00> : vector<8x8xf32>
    %149 = tpu.matmul %148, %136, %cst_76 {dimension_numbers = #tpu.dot_dimension_numbers<[1], [0], [0], [1], [0, 0, 1, 1], [], []>} : vector<8x8xf32>, vector<8x8xf32>, vector<8x8xf32> -> vector<8x8xf32>
    %c0_77 = arith.constant 0 : index
    %c1_78 = arith.constant 1 : index
    %c0_79 = arith.constant 0 : index
    %c0_80 = arith.constant 0 : index
    %150 = vector.load %arg10[%c0_77, %c1_78, %c0_79, %c0_80] : memref<2x2x8x40xf32, #tpu.memory_space<vmem>>, vector<1x1x8x40xf32>
    %151 = vector.shape_cast %150 : vector<1x1x8x40xf32> to vector<8x40xf32>
    %cst_81 = arith.constant dense<0.000000e+00> : vector<8x40xf32>
    %152 = tpu.matmul %149, %151, %cst_81 {dimension_numbers = #tpu.dot_dimension_numbers<[1], [0], [0], [1], [0, 0, 1, 1], [], []>} : vector<8x8xf32>, vector<8x40xf32>, vector<8x40xf32> -> vector<8x40xf32>
    %153 = arith.addf %127, %152 : vector<8x40xf32>
    %154 = arith.addf %72, %153 : vector<8x40xf32>
    %c0_82 = arith.constant 0 : index
    %c0_83 = arith.constant 0 : index
    %c0_84 = arith.constant 0 : index
    %155 = vector.load %arg12[%c0_82, %c0_83, %c0_84] : memref<2x1x40xf32, #tpu.memory_space<vmem>>, vector<1x1x40xf32>
    %156 = vector.shape_cast %155 : vector<1x1x40xf32> to vector<1x40xf32>
    %c0_85 = arith.constant 0 : index
    %c0_86 = arith.constant 0 : index
    %c0_87 = arith.constant 0 : index
    %157 = vector.load %arg13[%c0_85, %c0_86, %c0_87] : memref<2x1x40xf32, #tpu.memory_space<vmem>>, vector<1x1x40xf32>
    %158 = vector.shape_cast %157 : vector<1x1x40xf32> to vector<1x40xf32>
    %cst_88 = arith.constant dense<0.000000e+00> : vector<8xf32>
    %159 = vector.multi_reduction <add>, %154, %cst_88 [1] : vector<8x40xf32> to vector<8xf32>
    %160 = vector.shape_cast %159 : vector<8xf32> to vector<8x1xf32>
    %cst_89 = arith.constant 4.000000e+01 : f32
    %161 = vector.broadcast %cst_89 : f32 to vector<8x1xf32>
    %162 = arith.divf %160, %161 : vector<8x1xf32>
    %163 = vector.broadcast %162 : vector<8x1xf32> to vector<8x40xf32>
    %164 = arith.subf %154, %163 : vector<8x40xf32>
    %165 = arith.mulf %164, %164 : vector<8x40xf32>
    %cst_90 = arith.constant dense<0.000000e+00> : vector<8xf32>
    %166 = vector.multi_reduction <add>, %165, %cst_90 [1] : vector<8x40xf32> to vector<8xf32>
    %167 = vector.shape_cast %166 : vector<8xf32> to vector<8x1xf32>
    %cst_91 = arith.constant 4.000000e+01 : f32
    %168 = vector.broadcast %cst_91 : f32 to vector<8x1xf32>
    %169 = arith.divf %167, %168 : vector<8x1xf32>
    %170 = vector.broadcast %162 : vector<8x1xf32> to vector<8x40xf32>
    %171 = arith.subf %154, %170 : vector<8x40xf32>
    %cst_92 = arith.constant 9.99999974E-6 : f32
    %172 = vector.broadcast %cst_92 : f32 to vector<8x1xf32>
    %173 = arith.addf %169, %172 : vector<8x1xf32>
    %174 = math.rsqrt %173 : vector<8x1xf32>
    %175 = vector.broadcast %174 : vector<8x1xf32> to vector<8x40xf32>
    %176 = arith.mulf %171, %175 : vector<8x40xf32>
    %177 = vector.broadcast %156 : vector<1x40xf32> to vector<8x40xf32>
    %178 = arith.mulf %176, %177 : vector<8x40xf32>
    %179 = vector.broadcast %158 : vector<1x40xf32> to vector<8x40xf32>
    %180 = arith.addf %178, %179 : vector<8x40xf32>
    %c0_93 = arith.constant 0 : index
    %c0_94 = arith.constant 0 : index
    %c0_95 = arith.constant 0 : index
    %181 = vector.load %arg14[%c0_93, %c0_94, %c0_95] : memref<2x40x160xf32, #tpu.memory_space<vmem>>, vector<1x40x160xf32>
    %182 = vector.shape_cast %181 : vector<1x40x160xf32> to vector<40x160xf32>
    %cst_96 = arith.constant dense<0.000000e+00> : vector<8x160xf32>
    %183 = tpu.matmul %180, %182, %cst_96 {dimension_numbers = #tpu.dot_dimension_numbers<[1], [0], [0], [1], [0, 0, 1, 1], [], []>} : vector<8x40xf32>, vector<40x160xf32>, vector<8x160xf32> -> vector<8x160xf32>
    %c0_97 = arith.constant 0 : index
    %c0_98 = arith.constant 0 : index
    %c0_99 = arith.constant 0 : index
    %184 = vector.load %arg15[%c0_97, %c0_98, %c0_99] : memref<2x1x160xf32, #tpu.memory_space<vmem>>, vector<1x1x160xf32>
    %185 = vector.shape_cast %184 : vector<1x1x160xf32> to vector<1x160xf32>
    %186 = vector.broadcast %185 : vector<1x160xf32> to vector<8x160xf32>
    %187 = arith.addf %183, %186 : vector<8x160xf32>
    %c0_100 = arith.constant 0 : index
    %c0_101 = arith.constant 0 : index
    %c0_102 = arith.constant 0 : index
    %188 = vector.load %arg16[%c0_100, %c0_101, %c0_102] : memref<2x1x160xf32, #tpu.memory_space<vmem>>, vector<1x1x160xf32>
    %189 = vector.shape_cast %188 : vector<1x1x160xf32> to vector<1x160xf32>
    %c0_103 = arith.constant 0 : index
    %c0_104 = arith.constant 0 : index
    %c0_105 = arith.constant 0 : index
    %190 = vector.load %arg17[%c0_103, %c0_104, %c0_105] : memref<2x1x160xf32, #tpu.memory_space<vmem>>, vector<1x1x160xf32>
    %191 = vector.shape_cast %190 : vector<1x1x160xf32> to vector<1x160xf32>
    %cst_106 = arith.constant dense<0.000000e+00> : vector<160xf32>
    %192 = vector.multi_reduction <add>, %187, %cst_106 [0] : vector<8x160xf32> to vector<160xf32>
    %193 = vector.shape_cast %192 : vector<160xf32> to vector<1x160xf32>
    %cst_107 = arith.constant dense<0.000000e+00> : vector<1x10xf32>
    %194 = tpu.matmul %193, %25, %cst_107 {dimension_numbers = #tpu.dot_dimension_numbers<[1], [0], [0], [1], [0, 0, 1, 1], [], []>} : vector<1x160xf32>, vector<160x10xf32>, vector<1x10xf32> -> vector<1x10xf32>
    %cst_108 = arith.constant 1.280000e+02 : f32
    %195 = vector.broadcast %cst_108 : f32 to vector<1x10xf32>
    %196 = arith.divf %194, %195 : vector<1x10xf32>
    %cst_109 = arith.constant dense<0.000000e+00> : vector<1x160xf32>
    %197 = tpu.matmul %196, %27, %cst_109 {dimension_numbers = #tpu.dot_dimension_numbers<[1], [0], [0], [1], [0, 0, 1, 1], [], []>} : vector<1x10xf32>, vector<10x160xf32>, vector<1x160xf32> -> vector<1x160xf32>
    %198 = vector.broadcast %197 : vector<1x160xf32> to vector<8x160xf32>
    %199 = arith.subf %187, %198 : vector<8x160xf32>
    %200 = arith.mulf %199, %199 : vector<8x160xf32>
    %cst_110 = arith.constant dense<0.000000e+00> : vector<160xf32>
    %201 = vector.multi_reduction <add>, %200, %cst_110 [0] : vector<8x160xf32> to vector<160xf32>
    %202 = vector.shape_cast %201 : vector<160xf32> to vector<1x160xf32>
    %cst_111 = arith.constant dense<0.000000e+00> : vector<1x10xf32>
    %203 = tpu.matmul %202, %25, %cst_111 {dimension_numbers = #tpu.dot_dimension_numbers<[1], [0], [0], [1], [0, 0, 1, 1], [], []>} : vector<1x160xf32>, vector<160x10xf32>, vector<1x10xf32> -> vector<1x10xf32>
    %cst_112 = arith.constant 1.280000e+02 : f32
    %204 = vector.broadcast %cst_112 : f32 to vector<1x10xf32>
    %205 = arith.divf %203, %204 : vector<1x10xf32>
    %cst_113 = arith.constant dense<0.000000e+00> : vector<1x160xf32>
    %206 = tpu.matmul %205, %27, %cst_113 {dimension_numbers = #tpu.dot_dimension_numbers<[1], [0], [0], [1], [0, 0, 1, 1], [], []>} : vector<1x10xf32>, vector<10x160xf32>, vector<1x160xf32> -> vector<1x160xf32>
    %cst_114 = arith.constant 9.99999974E-6 : f32
    %207 = vector.broadcast %cst_114 : f32 to vector<1x160xf32>
    %208 = arith.addf %206, %207 : vector<1x160xf32>
    %209 = math.rsqrt %208 : vector<1x160xf32>
    %210 = vector.broadcast %209 : vector<1x160xf32> to vector<8x160xf32>
    %211 = arith.mulf %199, %210 : vector<8x160xf32>
    %212 = vector.broadcast %189 : vector<1x160xf32> to vector<8x160xf32>
    %213 = arith.mulf %211, %212 : vector<8x160xf32>
    %214 = vector.broadcast %191 : vector<1x160xf32> to vector<8x160xf32>
    %215 = arith.addf %213, %214 : vector<8x160xf32>
    %216 = arith.mulf %215, %215 : vector<8x160xf32>
    %217 = arith.mulf %215, %216 : vector<8x160xf32>
    %cst_115 = arith.constant 4.471500e-02 : f32
    %218 = vector.broadcast %cst_115 : f32 to vector<8x160xf32>
    %219 = arith.mulf %218, %217 : vector<8x160xf32>
    %220 = arith.addf %215, %219 : vector<8x160xf32>
    %cst_116 = arith.constant 0.797884583 : f32
    %221 = vector.broadcast %cst_116 : f32 to vector<8x160xf32>
    %222 = arith.mulf %221, %220 : vector<8x160xf32>
    %223 = math.tanh %222 : vector<8x160xf32>
    %cst_117 = arith.constant 1.000000e+00 : f32
    %224 = vector.broadcast %cst_117 : f32 to vector<8x160xf32>
    %225 = arith.addf %224, %223 : vector<8x160xf32>
    %cst_118 = arith.constant 5.000000e-01 : f32
    %226 = vector.broadcast %cst_118 : f32 to vector<8x160xf32>
    %227 = arith.mulf %226, %225 : vector<8x160xf32>
    %228 = arith.mulf %215, %227 : vector<8x160xf32>
    %cst_119 = arith.constant dense<0.000000e+00> : vector<8x160xf32>
    %229 = tpu.matmul %60, %228, %cst_119 {dimension_numbers = #tpu.dot_dimension_numbers<[1], [0], [0], [1], [0, 0, 1, 1], [], []>} : vector<8x8xf32>, vector<8x160xf32>, vector<8x160xf32> -> vector<8x160xf32>
    %cst_120 = arith.constant dense<0.000000e+00> : vector<8x160xf32>
    %230 = tpu.matmul %65, %228, %cst_120 {dimension_numbers = #tpu.dot_dimension_numbers<[1], [0], [0], [1], [0, 0, 1, 1], [], []>} : vector<8x8xf32>, vector<8x160xf32>, vector<8x160xf32> -> vector<8x160xf32>
    %c0_121 = arith.constant 0 : index
    %c0_122 = arith.constant 0 : index
    %c0_123 = arith.constant 0 : index
    %c0_124 = arith.constant 0 : index
    %231 = vector.load %arg18[%c0_121, %c0_122, %c0_123, %c0_124] : memref<2x3x160x160xf32, #tpu.memory_space<vmem>>, vector<1x1x160x160xf32>
    %232 = vector.shape_cast %231 : vector<1x1x160x160xf32> to vector<160x160xf32>
    %cst_125 = arith.constant dense<0.000000e+00> : vector<8x160xf32>
    %233 = tpu.matmul %229, %232, %cst_125 {dimension_numbers = #tpu.dot_dimension_numbers<[1], [0], [0], [1], [0, 0, 1, 1], [], []>} : vector<8x160xf32>, vector<160x160xf32>, vector<8x160xf32> -> vector<8x160xf32>
    %c0_126 = arith.constant 0 : index
    %c1_127 = arith.constant 1 : index
    %c0_128 = arith.constant 0 : index
    %c0_129 = arith.constant 0 : index
    %234 = vector.load %arg18[%c0_126, %c1_127, %c0_128, %c0_129] : memref<2x3x160x160xf32, #tpu.memory_space<vmem>>, vector<1x1x160x160xf32>
    %235 = vector.shape_cast %234 : vector<1x1x160x160xf32> to vector<160x160xf32>
    %cst_130 = arith.constant dense<0.000000e+00> : vector<8x160xf32>
    %236 = tpu.matmul %228, %235, %cst_130 {dimension_numbers = #tpu.dot_dimension_numbers<[1], [0], [0], [1], [0, 0, 1, 1], [], []>} : vector<8x160xf32>, vector<160x160xf32>, vector<8x160xf32> -> vector<8x160xf32>
    %237 = arith.addf %233, %236 : vector<8x160xf32>
    %c0_131 = arith.constant 0 : index
    %c2 = arith.constant 2 : index
    %c0_132 = arith.constant 0 : index
    %c0_133 = arith.constant 0 : index
    %238 = vector.load %arg18[%c0_131, %c2, %c0_132, %c0_133] : memref<2x3x160x160xf32, #tpu.memory_space<vmem>>, vector<1x1x160x160xf32>
    %239 = vector.shape_cast %238 : vector<1x1x160x160xf32> to vector<160x160xf32>
    %cst_134 = arith.constant dense<0.000000e+00> : vector<8x160xf32>
    %240 = tpu.matmul %230, %239, %cst_134 {dimension_numbers = #tpu.dot_dimension_numbers<[1], [0], [0], [1], [0, 0, 1, 1], [], []>} : vector<8x160xf32>, vector<160x160xf32>, vector<8x160xf32> -> vector<8x160xf32>
    %241 = arith.addf %237, %240 : vector<8x160xf32>
    %c0_135 = arith.constant 0 : index
    %c0_136 = arith.constant 0 : index
    %c0_137 = arith.constant 0 : index
    %242 = vector.load %arg19[%c0_135, %c0_136, %c0_137] : memref<2x1x160xf32, #tpu.memory_space<vmem>>, vector<1x1x160xf32>
    %243 = vector.shape_cast %242 : vector<1x1x160xf32> to vector<1x160xf32>
    %244 = vector.broadcast %243 : vector<1x160xf32> to vector<8x160xf32>
    %245 = arith.addf %241, %244 : vector<8x160xf32>
    %c0_138 = arith.constant 0 : index
    %c0_139 = arith.constant 0 : index
    %c0_140 = arith.constant 0 : index
    %246 = vector.load %arg20[%c0_138, %c0_139, %c0_140] : memref<2x1x160xf32, #tpu.memory_space<vmem>>, vector<1x1x160xf32>
    %247 = vector.shape_cast %246 : vector<1x1x160xf32> to vector<1x160xf32>
    %c0_141 = arith.constant 0 : index
    %c0_142 = arith.constant 0 : index
    %c0_143 = arith.constant 0 : index
    %248 = vector.load %arg21[%c0_141, %c0_142, %c0_143] : memref<2x1x160xf32, #tpu.memory_space<vmem>>, vector<1x1x160xf32>
    %249 = vector.shape_cast %248 : vector<1x1x160xf32> to vector<1x160xf32>
    %cst_144 = arith.constant dense<0.000000e+00> : vector<160xf32>
    %250 = vector.multi_reduction <add>, %245, %cst_144 [0] : vector<8x160xf32> to vector<160xf32>
    %251 = vector.shape_cast %250 : vector<160xf32> to vector<1x160xf32>
    %cst_145 = arith.constant dense<0.000000e+00> : vector<1x10xf32>
    %252 = tpu.matmul %251, %25, %cst_145 {dimension_numbers = #tpu.dot_dimension_numbers<[1], [0], [0], [1], [0, 0, 1, 1], [], []>} : vector<1x160xf32>, vector<160x10xf32>, vector<1x10xf32> -> vector<1x10xf32>
    %cst_146 = arith.constant 1.280000e+02 : f32
    %253 = vector.broadcast %cst_146 : f32 to vector<1x10xf32>
    %254 = arith.divf %252, %253 : vector<1x10xf32>
    %cst_147 = arith.constant dense<0.000000e+00> : vector<1x160xf32>
    %255 = tpu.matmul %254, %27, %cst_147 {dimension_numbers = #tpu.dot_dimension_numbers<[1], [0], [0], [1], [0, 0, 1, 1], [], []>} : vector<1x10xf32>, vector<10x160xf32>, vector<1x160xf32> -> vector<1x160xf32>
    %256 = vector.broadcast %255 : vector<1x160xf32> to vector<8x160xf32>
    %257 = arith.subf %245, %256 : vector<8x160xf32>
    %258 = arith.mulf %257, %257 : vector<8x160xf32>
    %cst_148 = arith.constant dense<0.000000e+00> : vector<160xf32>
    %259 = vector.multi_reduction <add>, %258, %cst_148 [0] : vector<8x160xf32> to vector<160xf32>
    %260 = vector.shape_cast %259 : vector<160xf32> to vector<1x160xf32>
    %cst_149 = arith.constant dense<0.000000e+00> : vector<1x10xf32>
    %261 = tpu.matmul %260, %25, %cst_149 {dimension_numbers = #tpu.dot_dimension_numbers<[1], [0], [0], [1], [0, 0, 1, 1], [], []>} : vector<1x160xf32>, vector<160x10xf32>, vector<1x10xf32> -> vector<1x10xf32>
    %cst_150 = arith.constant 1.280000e+02 : f32
    %262 = vector.broadcast %cst_150 : f32 to vector<1x10xf32>
    %263 = arith.divf %261, %262 : vector<1x10xf32>
    %cst_151 = arith.constant dense<0.000000e+00> : vector<1x160xf32>
    %264 = tpu.matmul %263, %27, %cst_151 {dimension_numbers = #tpu.dot_dimension_numbers<[1], [0], [0], [1], [0, 0, 1, 1], [], []>} : vector<1x10xf32>, vector<10x160xf32>, vector<1x160xf32> -> vector<1x160xf32>
    %cst_152 = arith.constant 9.99999974E-6 : f32
    %265 = vector.broadcast %cst_152 : f32 to vector<1x160xf32>
    %266 = arith.addf %264, %265 : vector<1x160xf32>
    %267 = math.rsqrt %266 : vector<1x160xf32>
    %268 = vector.broadcast %267 : vector<1x160xf32> to vector<8x160xf32>
    %269 = arith.mulf %257, %268 : vector<8x160xf32>
    %270 = vector.broadcast %247 : vector<1x160xf32> to vector<8x160xf32>
    %271 = arith.mulf %269, %270 : vector<8x160xf32>
    %272 = vector.broadcast %249 : vector<1x160xf32> to vector<8x160xf32>
    %273 = arith.addf %271, %272 : vector<8x160xf32>
    %274 = arith.mulf %273, %273 : vector<8x160xf32>
    %275 = arith.mulf %273, %274 : vector<8x160xf32>
    %cst_153 = arith.constant 4.471500e-02 : f32
    %276 = vector.broadcast %cst_153 : f32 to vector<8x160xf32>
    %277 = arith.mulf %276, %275 : vector<8x160xf32>
    %278 = arith.addf %273, %277 : vector<8x160xf32>
    %cst_154 = arith.constant 0.797884583 : f32
    %279 = vector.broadcast %cst_154 : f32 to vector<8x160xf32>
    %280 = arith.mulf %279, %278 : vector<8x160xf32>
    %281 = math.tanh %280 : vector<8x160xf32>
    %cst_155 = arith.constant 1.000000e+00 : f32
    %282 = vector.broadcast %cst_155 : f32 to vector<8x160xf32>
    %283 = arith.addf %282, %281 : vector<8x160xf32>
    %cst_156 = arith.constant 5.000000e-01 : f32
    %284 = vector.broadcast %cst_156 : f32 to vector<8x160xf32>
    %285 = arith.mulf %284, %283 : vector<8x160xf32>
    %286 = arith.mulf %273, %285 : vector<8x160xf32>
    %c0_157 = arith.constant 0 : index
    %c0_158 = arith.constant 0 : index
    %c0_159 = arith.constant 0 : index
    %287 = vector.load %arg22[%c0_157, %c0_158, %c0_159] : memref<2x160x40xf32, #tpu.memory_space<vmem>>, vector<1x160x40xf32>
    %288 = vector.shape_cast %287 : vector<1x160x40xf32> to vector<160x40xf32>
    %cst_160 = arith.constant dense<0.000000e+00> : vector<8x40xf32>
    %289 = tpu.matmul %286, %288, %cst_160 {dimension_numbers = #tpu.dot_dimension_numbers<[1], [0], [0], [1], [0, 0, 1, 1], [], []>} : vector<8x160xf32>, vector<160x40xf32>, vector<8x40xf32> -> vector<8x40xf32>
    %c0_161 = arith.constant 0 : index
    %c0_162 = arith.constant 0 : index
    %c0_163 = arith.constant 0 : index
    %290 = vector.load %arg23[%c0_161, %c0_162, %c0_163] : memref<2x1x40xf32, #tpu.memory_space<vmem>>, vector<1x1x40xf32>
    %291 = vector.shape_cast %290 : vector<1x1x40xf32> to vector<1x40xf32>
    %292 = vector.broadcast %291 : vector<1x40xf32> to vector<8x40xf32>
    %293 = arith.addf %289, %292 : vector<8x40xf32>
    %c0_164 = arith.constant 0 : index
    %c0_165 = arith.constant 0 : index
    %c0_166 = arith.constant 0 : index
    %294 = vector.load %arg24[%c0_164, %c0_165, %c0_166] : memref<2x1x40xf32, #tpu.memory_space<vmem>>, vector<1x1x40xf32>
    %295 = vector.shape_cast %294 : vector<1x1x40xf32> to vector<1x40xf32>
    %c0_167 = arith.constant 0 : index
    %c0_168 = arith.constant 0 : index
    %c0_169 = arith.constant 0 : index
    %296 = vector.load %arg25[%c0_167, %c0_168, %c0_169] : memref<2x1x40xf32, #tpu.memory_space<vmem>>, vector<1x1x40xf32>
    %297 = vector.shape_cast %296 : vector<1x1x40xf32> to vector<1x40xf32>
    %cst_170 = arith.constant dense<0.000000e+00> : vector<40xf32>
    %298 = vector.multi_reduction <add>, %293, %cst_170 [0] : vector<8x40xf32> to vector<40xf32>
    %299 = vector.shape_cast %298 : vector<40xf32> to vector<1x40xf32>
    %cst_171 = arith.constant dense<0.000000e+00> : vector<1x10xf32>
    %300 = tpu.matmul %299, %51, %cst_171 {dimension_numbers = #tpu.dot_dimension_numbers<[1], [0], [0], [1], [0, 0, 1, 1], [], []>} : vector<1x40xf32>, vector<40x10xf32>, vector<1x10xf32> -> vector<1x10xf32>
    %cst_172 = arith.constant 3.200000e+01 : f32
    %301 = vector.broadcast %cst_172 : f32 to vector<1x10xf32>
    %302 = arith.divf %300, %301 : vector<1x10xf32>
    %cst_173 = arith.constant dense<0.000000e+00> : vector<1x40xf32>
    %303 = tpu.matmul %302, %53, %cst_173 {dimension_numbers = #tpu.dot_dimension_numbers<[1], [0], [0], [1], [0, 0, 1, 1], [], []>} : vector<1x10xf32>, vector<10x40xf32>, vector<1x40xf32> -> vector<1x40xf32>
    %304 = vector.broadcast %303 : vector<1x40xf32> to vector<8x40xf32>
    %305 = arith.subf %293, %304 : vector<8x40xf32>
    %306 = arith.mulf %305, %305 : vector<8x40xf32>
    %cst_174 = arith.constant dense<0.000000e+00> : vector<40xf32>
    %307 = vector.multi_reduction <add>, %306, %cst_174 [0] : vector<8x40xf32> to vector<40xf32>
    %308 = vector.shape_cast %307 : vector<40xf32> to vector<1x40xf32>
    %cst_175 = arith.constant dense<0.000000e+00> : vector<1x10xf32>
    %309 = tpu.matmul %308, %51, %cst_175 {dimension_numbers = #tpu.dot_dimension_numbers<[1], [0], [0], [1], [0, 0, 1, 1], [], []>} : vector<1x40xf32>, vector<40x10xf32>, vector<1x10xf32> -> vector<1x10xf32>
    %cst_176 = arith.constant 3.200000e+01 : f32
    %310 = vector.broadcast %cst_176 : f32 to vector<1x10xf32>
    %311 = arith.divf %309, %310 : vector<1x10xf32>
    %cst_177 = arith.constant dense<0.000000e+00> : vector<1x40xf32>
    %312 = tpu.matmul %311, %53, %cst_177 {dimension_numbers = #tpu.dot_dimension_numbers<[1], [0], [0], [1], [0, 0, 1, 1], [], []>} : vector<1x10xf32>, vector<10x40xf32>, vector<1x40xf32> -> vector<1x40xf32>
    %cst_178 = arith.constant 9.99999974E-6 : f32
    %313 = vector.broadcast %cst_178 : f32 to vector<1x40xf32>
    %314 = arith.addf %312, %313 : vector<1x40xf32>
    %315 = math.rsqrt %314 : vector<1x40xf32>
    %316 = vector.broadcast %315 : vector<1x40xf32> to vector<8x40xf32>
    %317 = arith.mulf %305, %316 : vector<8x40xf32>
    %318 = vector.broadcast %295 : vector<1x40xf32> to vector<8x40xf32>
    %319 = arith.mulf %317, %318 : vector<8x40xf32>
    %320 = vector.broadcast %297 : vector<1x40xf32> to vector<8x40xf32>
    %321 = arith.addf %319, %320 : vector<8x40xf32>
    %322 = arith.addf %154, %321 : vector<8x40xf32>
    %c1_179 = arith.constant 1 : index
    %c0_180 = arith.constant 0 : index
    %c0_181 = arith.constant 0 : index
    %323 = vector.load %arg5[%c1_179, %c0_180, %c0_181] : memref<2x1x40xf32, #tpu.memory_space<vmem>>, vector<1x1x40xf32>
    %324 = vector.shape_cast %323 : vector<1x1x40xf32> to vector<1x40xf32>
    %c1_182 = arith.constant 1 : index
    %c0_183 = arith.constant 0 : index
    %c0_184 = arith.constant 0 : index
    %325 = vector.load %arg6[%c1_182, %c0_183, %c0_184] : memref<2x1x40xf32, #tpu.memory_space<vmem>>, vector<1x1x40xf32>
    %326 = vector.shape_cast %325 : vector<1x1x40xf32> to vector<1x40xf32>
    %cst_185 = arith.constant dense<0.000000e+00> : vector<8xf32>
    %327 = vector.multi_reduction <add>, %322, %cst_185 [1] : vector<8x40xf32> to vector<8xf32>
    %328 = vector.shape_cast %327 : vector<8xf32> to vector<8x1xf32>
    %cst_186 = arith.constant 4.000000e+01 : f32
    %329 = vector.broadcast %cst_186 : f32 to vector<8x1xf32>
    %330 = arith.divf %328, %329 : vector<8x1xf32>
    %331 = vector.broadcast %330 : vector<8x1xf32> to vector<8x40xf32>
    %332 = arith.subf %322, %331 : vector<8x40xf32>
    %333 = arith.mulf %332, %332 : vector<8x40xf32>
    %cst_187 = arith.constant dense<0.000000e+00> : vector<8xf32>
    %334 = vector.multi_reduction <add>, %333, %cst_187 [1] : vector<8x40xf32> to vector<8xf32>
    %335 = vector.shape_cast %334 : vector<8xf32> to vector<8x1xf32>
    %cst_188 = arith.constant 4.000000e+01 : f32
    %336 = vector.broadcast %cst_188 : f32 to vector<8x1xf32>
    %337 = arith.divf %335, %336 : vector<8x1xf32>
    %338 = vector.broadcast %330 : vector<8x1xf32> to vector<8x40xf32>
    %339 = arith.subf %322, %338 : vector<8x40xf32>
    %cst_189 = arith.constant 9.99999974E-6 : f32
    %340 = vector.broadcast %cst_189 : f32 to vector<8x1xf32>
    %341 = arith.addf %337, %340 : vector<8x1xf32>
    %342 = math.rsqrt %341 : vector<8x1xf32>
    %343 = vector.broadcast %342 : vector<8x1xf32> to vector<8x40xf32>
    %344 = arith.mulf %339, %343 : vector<8x40xf32>
    %345 = vector.broadcast %324 : vector<1x40xf32> to vector<8x40xf32>
    %346 = arith.mulf %344, %345 : vector<8x40xf32>
    %347 = vector.broadcast %326 : vector<1x40xf32> to vector<8x40xf32>
    %348 = arith.addf %346, %347 : vector<8x40xf32>
    %c1_190 = arith.constant 1 : index
    %c0_191 = arith.constant 0 : index
    %c0_192 = arith.constant 0 : index
    %349 = vector.load %arg11[%c1_190, %c0_191, %c0_192] : memref<2x1x40xf32, #tpu.memory_space<vmem>>, vector<1x1x40xf32>
    %350 = vector.shape_cast %349 : vector<1x1x40xf32> to vector<1x40xf32>
    %c1_193 = arith.constant 1 : index
    %c0_194 = arith.constant 0 : index
    %c0_195 = arith.constant 0 : index
    %c0_196 = arith.constant 0 : index
    %351 = vector.load %arg7[%c1_193, %c0_194, %c0_195, %c0_196] : memref<2x2x40x8xf32, #tpu.memory_space<vmem>>, vector<1x1x40x8xf32>
    %352 = vector.shape_cast %351 : vector<1x1x40x8xf32> to vector<40x8xf32>
    %cst_197 = arith.constant dense<0.000000e+00> : vector<8x8xf32>
    %353 = tpu.matmul %348, %352, %cst_197 {dimension_numbers = #tpu.dot_dimension_numbers<[1], [0], [0], [1], [0, 0, 1, 1], [], []>} : vector<8x40xf32>, vector<40x8xf32>, vector<8x8xf32> -> vector<8x8xf32>
    %c1_198 = arith.constant 1 : index
    %c0_199 = arith.constant 0 : index
    %c0_200 = arith.constant 0 : index
    %c0_201 = arith.constant 0 : index
    %354 = vector.load %arg8[%c1_198, %c0_199, %c0_200, %c0_201] : memref<2x2x40x8xf32, #tpu.memory_space<vmem>>, vector<1x1x40x8xf32>
    %355 = vector.shape_cast %354 : vector<1x1x40x8xf32> to vector<40x8xf32>
    %cst_202 = arith.constant dense<0.000000e+00> : vector<8x8xf32>
    %356 = tpu.matmul %348, %355, %cst_202 {dimension_numbers = #tpu.dot_dimension_numbers<[1], [0], [0], [1], [0, 0, 1, 1], [], []>} : vector<8x40xf32>, vector<40x8xf32>, vector<8x8xf32> -> vector<8x8xf32>
    %c1_203 = arith.constant 1 : index
    %c0_204 = arith.constant 0 : index
    %c0_205 = arith.constant 0 : index
    %c0_206 = arith.constant 0 : index
    %357 = vector.load %arg9[%c1_203, %c0_204, %c0_205, %c0_206] : memref<2x2x40x8xf32, #tpu.memory_space<vmem>>, vector<1x1x40x8xf32>
    %358 = vector.shape_cast %357 : vector<1x1x40x8xf32> to vector<40x8xf32>
    %cst_207 = arith.constant dense<0.000000e+00> : vector<8x8xf32>
    %359 = tpu.matmul %348, %358, %cst_207 {dimension_numbers = #tpu.dot_dimension_numbers<[1], [0], [0], [1], [0, 0, 1, 1], [], []>} : vector<8x40xf32>, vector<40x8xf32>, vector<8x8xf32> -> vector<8x8xf32>
    %cst_208 = arith.constant dense<0.000000e+00> : vector<8x8xf32>
    %360 = tpu.matmul %353, %356, %cst_208 {dimension_numbers = #tpu.dot_dimension_numbers<[1], [1], [0], [0], [0, 0, 1, 0], [], []>} : vector<8x8xf32>, vector<8x8xf32>, vector<8x8xf32> -> vector<8x8xf32>
    %cst_209 = arith.constant 0.353553385 : f32
    %361 = vector.broadcast %cst_209 : f32 to vector<8x8xf32>
    %362 = arith.mulf %360, %361 : vector<8x8xf32>
    %cst_210 = arith.constant dense<0xFF800000> : vector<8xf32>
    %363 = vector.multi_reduction <maximumf>, %362, %cst_210 [1] : vector<8x8xf32> to vector<8xf32>
    %364 = vector.shape_cast %363 : vector<8xf32> to vector<8x1xf32>
    %365 = vector.broadcast %364 : vector<8x1xf32> to vector<8x8xf32>
    %366 = arith.subf %362, %365 : vector<8x8xf32>
    %367 = math.exp %366 : vector<8x8xf32>
    %cst_211 = arith.constant dense<0.000000e+00> : vector<8xf32>
    %368 = vector.multi_reduction <add>, %367, %cst_211 [1] : vector<8x8xf32> to vector<8xf32>
    %369 = vector.shape_cast %368 : vector<8xf32> to vector<8x1xf32>
    %370 = vector.broadcast %369 : vector<8x1xf32> to vector<8x8xf32>
    %371 = arith.divf %367, %370 : vector<8x8xf32>
    %cst_212 = arith.constant dense<0.000000e+00> : vector<8x8xf32>
    %372 = tpu.matmul %371, %359, %cst_212 {dimension_numbers = #tpu.dot_dimension_numbers<[1], [0], [0], [1], [0, 0, 1, 1], [], []>} : vector<8x8xf32>, vector<8x8xf32>, vector<8x8xf32> -> vector<8x8xf32>
    %c1_213 = arith.constant 1 : index
    %c0_214 = arith.constant 0 : index
    %c0_215 = arith.constant 0 : index
    %c0_216 = arith.constant 0 : index
    %373 = vector.load %arg10[%c1_213, %c0_214, %c0_215, %c0_216] : memref<2x2x8x40xf32, #tpu.memory_space<vmem>>, vector<1x1x8x40xf32>
    %374 = vector.shape_cast %373 : vector<1x1x8x40xf32> to vector<8x40xf32>
    %cst_217 = arith.constant dense<0.000000e+00> : vector<8x40xf32>
    %375 = tpu.matmul %372, %374, %cst_217 {dimension_numbers = #tpu.dot_dimension_numbers<[1], [0], [0], [1], [0, 0, 1, 1], [], []>} : vector<8x8xf32>, vector<8x40xf32>, vector<8x40xf32> -> vector<8x40xf32>
    %376 = vector.broadcast %350 : vector<1x40xf32> to vector<8x40xf32>
    %377 = arith.addf %376, %375 : vector<8x40xf32>
    %c1_218 = arith.constant 1 : index
    %c1_219 = arith.constant 1 : index
    %c0_220 = arith.constant 0 : index
    %c0_221 = arith.constant 0 : index
    %378 = vector.load %arg7[%c1_218, %c1_219, %c0_220, %c0_221] : memref<2x2x40x8xf32, #tpu.memory_space<vmem>>, vector<1x1x40x8xf32>
    %379 = vector.shape_cast %378 : vector<1x1x40x8xf32> to vector<40x8xf32>
    %cst_222 = arith.constant dense<0.000000e+00> : vector<8x8xf32>
    %380 = tpu.matmul %348, %379, %cst_222 {dimension_numbers = #tpu.dot_dimension_numbers<[1], [0], [0], [1], [0, 0, 1, 1], [], []>} : vector<8x40xf32>, vector<40x8xf32>, vector<8x8xf32> -> vector<8x8xf32>
    %c1_223 = arith.constant 1 : index
    %c1_224 = arith.constant 1 : index
    %c0_225 = arith.constant 0 : index
    %c0_226 = arith.constant 0 : index
    %381 = vector.load %arg8[%c1_223, %c1_224, %c0_225, %c0_226] : memref<2x2x40x8xf32, #tpu.memory_space<vmem>>, vector<1x1x40x8xf32>
    %382 = vector.shape_cast %381 : vector<1x1x40x8xf32> to vector<40x8xf32>
    %cst_227 = arith.constant dense<0.000000e+00> : vector<8x8xf32>
    %383 = tpu.matmul %348, %382, %cst_227 {dimension_numbers = #tpu.dot_dimension_numbers<[1], [0], [0], [1], [0, 0, 1, 1], [], []>} : vector<8x40xf32>, vector<40x8xf32>, vector<8x8xf32> -> vector<8x8xf32>
    %c1_228 = arith.constant 1 : index
    %c1_229 = arith.constant 1 : index
    %c0_230 = arith.constant 0 : index
    %c0_231 = arith.constant 0 : index
    %384 = vector.load %arg9[%c1_228, %c1_229, %c0_230, %c0_231] : memref<2x2x40x8xf32, #tpu.memory_space<vmem>>, vector<1x1x40x8xf32>
    %385 = vector.shape_cast %384 : vector<1x1x40x8xf32> to vector<40x8xf32>
    %cst_232 = arith.constant dense<0.000000e+00> : vector<8x8xf32>
    %386 = tpu.matmul %348, %385, %cst_232 {dimension_numbers = #tpu.dot_dimension_numbers<[1], [0], [0], [1], [0, 0, 1, 1], [], []>} : vector<8x40xf32>, vector<40x8xf32>, vector<8x8xf32> -> vector<8x8xf32>
    %cst_233 = arith.constant dense<0.000000e+00> : vector<8x8xf32>
    %387 = tpu.matmul %380, %383, %cst_233 {dimension_numbers = #tpu.dot_dimension_numbers<[1], [1], [0], [0], [0, 0, 1, 0], [], []>} : vector<8x8xf32>, vector<8x8xf32>, vector<8x8xf32> -> vector<8x8xf32>
    %cst_234 = arith.constant 0.353553385 : f32
    %388 = vector.broadcast %cst_234 : f32 to vector<8x8xf32>
    %389 = arith.mulf %387, %388 : vector<8x8xf32>
    %cst_235 = arith.constant dense<0xFF800000> : vector<8xf32>
    %390 = vector.multi_reduction <maximumf>, %389, %cst_235 [1] : vector<8x8xf32> to vector<8xf32>
    %391 = vector.shape_cast %390 : vector<8xf32> to vector<8x1xf32>
    %392 = vector.broadcast %391 : vector<8x1xf32> to vector<8x8xf32>
    %393 = arith.subf %389, %392 : vector<8x8xf32>
    %394 = math.exp %393 : vector<8x8xf32>
    %cst_236 = arith.constant dense<0.000000e+00> : vector<8xf32>
    %395 = vector.multi_reduction <add>, %394, %cst_236 [1] : vector<8x8xf32> to vector<8xf32>
    %396 = vector.shape_cast %395 : vector<8xf32> to vector<8x1xf32>
    %397 = vector.broadcast %396 : vector<8x1xf32> to vector<8x8xf32>
    %398 = arith.divf %394, %397 : vector<8x8xf32>
    %cst_237 = arith.constant dense<0.000000e+00> : vector<8x8xf32>
    %399 = tpu.matmul %398, %386, %cst_237 {dimension_numbers = #tpu.dot_dimension_numbers<[1], [0], [0], [1], [0, 0, 1, 1], [], []>} : vector<8x8xf32>, vector<8x8xf32>, vector<8x8xf32> -> vector<8x8xf32>
    %c1_238 = arith.constant 1 : index
    %c1_239 = arith.constant 1 : index
    %c0_240 = arith.constant 0 : index
    %c0_241 = arith.constant 0 : index
    %400 = vector.load %arg10[%c1_238, %c1_239, %c0_240, %c0_241] : memref<2x2x8x40xf32, #tpu.memory_space<vmem>>, vector<1x1x8x40xf32>
    %401 = vector.shape_cast %400 : vector<1x1x8x40xf32> to vector<8x40xf32>
    %cst_242 = arith.constant dense<0.000000e+00> : vector<8x40xf32>
    %402 = tpu.matmul %399, %401, %cst_242 {dimension_numbers = #tpu.dot_dimension_numbers<[1], [0], [0], [1], [0, 0, 1, 1], [], []>} : vector<8x8xf32>, vector<8x40xf32>, vector<8x40xf32> -> vector<8x40xf32>
    %403 = arith.addf %377, %402 : vector<8x40xf32>
    %404 = arith.addf %322, %403 : vector<8x40xf32>
    %c1_243 = arith.constant 1 : index
    %c0_244 = arith.constant 0 : index
    %c0_245 = arith.constant 0 : index
    %405 = vector.load %arg12[%c1_243, %c0_244, %c0_245] : memref<2x1x40xf32, #tpu.memory_space<vmem>>, vector<1x1x40xf32>
    %406 = vector.shape_cast %405 : vector<1x1x40xf32> to vector<1x40xf32>
    %c1_246 = arith.constant 1 : index
    %c0_247 = arith.constant 0 : index
    %c0_248 = arith.constant 0 : index
    %407 = vector.load %arg13[%c1_246, %c0_247, %c0_248] : memref<2x1x40xf32, #tpu.memory_space<vmem>>, vector<1x1x40xf32>
    %408 = vector.shape_cast %407 : vector<1x1x40xf32> to vector<1x40xf32>
    %cst_249 = arith.constant dense<0.000000e+00> : vector<8xf32>
    %409 = vector.multi_reduction <add>, %404, %cst_249 [1] : vector<8x40xf32> to vector<8xf32>
    %410 = vector.shape_cast %409 : vector<8xf32> to vector<8x1xf32>
    %cst_250 = arith.constant 4.000000e+01 : f32
    %411 = vector.broadcast %cst_250 : f32 to vector<8x1xf32>
    %412 = arith.divf %410, %411 : vector<8x1xf32>
    %413 = vector.broadcast %412 : vector<8x1xf32> to vector<8x40xf32>
    %414 = arith.subf %404, %413 : vector<8x40xf32>
    %415 = arith.mulf %414, %414 : vector<8x40xf32>
    %cst_251 = arith.constant dense<0.000000e+00> : vector<8xf32>
    %416 = vector.multi_reduction <add>, %415, %cst_251 [1] : vector<8x40xf32> to vector<8xf32>
    %417 = vector.shape_cast %416 : vector<8xf32> to vector<8x1xf32>
    %cst_252 = arith.constant 4.000000e+01 : f32
    %418 = vector.broadcast %cst_252 : f32 to vector<8x1xf32>
    %419 = arith.divf %417, %418 : vector<8x1xf32>
    %420 = vector.broadcast %412 : vector<8x1xf32> to vector<8x40xf32>
    %421 = arith.subf %404, %420 : vector<8x40xf32>
    %cst_253 = arith.constant 9.99999974E-6 : f32
    %422 = vector.broadcast %cst_253 : f32 to vector<8x1xf32>
    %423 = arith.addf %419, %422 : vector<8x1xf32>
    %424 = math.rsqrt %423 : vector<8x1xf32>
    %425 = vector.broadcast %424 : vector<8x1xf32> to vector<8x40xf32>
    %426 = arith.mulf %421, %425 : vector<8x40xf32>
    %427 = vector.broadcast %406 : vector<1x40xf32> to vector<8x40xf32>
    %428 = arith.mulf %426, %427 : vector<8x40xf32>
    %429 = vector.broadcast %408 : vector<1x40xf32> to vector<8x40xf32>
    %430 = arith.addf %428, %429 : vector<8x40xf32>
    %c1_254 = arith.constant 1 : index
    %c0_255 = arith.constant 0 : index
    %c0_256 = arith.constant 0 : index
    %431 = vector.load %arg14[%c1_254, %c0_255, %c0_256] : memref<2x40x160xf32, #tpu.memory_space<vmem>>, vector<1x40x160xf32>
    %432 = vector.shape_cast %431 : vector<1x40x160xf32> to vector<40x160xf32>
    %cst_257 = arith.constant dense<0.000000e+00> : vector<8x160xf32>
    %433 = tpu.matmul %430, %432, %cst_257 {dimension_numbers = #tpu.dot_dimension_numbers<[1], [0], [0], [1], [0, 0, 1, 1], [], []>} : vector<8x40xf32>, vector<40x160xf32>, vector<8x160xf32> -> vector<8x160xf32>
    %c1_258 = arith.constant 1 : index
    %c0_259 = arith.constant 0 : index
    %c0_260 = arith.constant 0 : index
    %434 = vector.load %arg15[%c1_258, %c0_259, %c0_260] : memref<2x1x160xf32, #tpu.memory_space<vmem>>, vector<1x1x160xf32>
    %435 = vector.shape_cast %434 : vector<1x1x160xf32> to vector<1x160xf32>
    %436 = vector.broadcast %435 : vector<1x160xf32> to vector<8x160xf32>
    %437 = arith.addf %433, %436 : vector<8x160xf32>
    %c1_261 = arith.constant 1 : index
    %c0_262 = arith.constant 0 : index
    %c0_263 = arith.constant 0 : index
    %438 = vector.load %arg16[%c1_261, %c0_262, %c0_263] : memref<2x1x160xf32, #tpu.memory_space<vmem>>, vector<1x1x160xf32>
    %439 = vector.shape_cast %438 : vector<1x1x160xf32> to vector<1x160xf32>
    %c1_264 = arith.constant 1 : index
    %c0_265 = arith.constant 0 : index
    %c0_266 = arith.constant 0 : index
    %440 = vector.load %arg17[%c1_264, %c0_265, %c0_266] : memref<2x1x160xf32, #tpu.memory_space<vmem>>, vector<1x1x160xf32>
    %441 = vector.shape_cast %440 : vector<1x1x160xf32> to vector<1x160xf32>
    %cst_267 = arith.constant dense<0.000000e+00> : vector<160xf32>
    %442 = vector.multi_reduction <add>, %437, %cst_267 [0] : vector<8x160xf32> to vector<160xf32>
    %443 = vector.shape_cast %442 : vector<160xf32> to vector<1x160xf32>
    %cst_268 = arith.constant dense<0.000000e+00> : vector<1x10xf32>
    %444 = tpu.matmul %443, %25, %cst_268 {dimension_numbers = #tpu.dot_dimension_numbers<[1], [0], [0], [1], [0, 0, 1, 1], [], []>} : vector<1x160xf32>, vector<160x10xf32>, vector<1x10xf32> -> vector<1x10xf32>
    %cst_269 = arith.constant 1.280000e+02 : f32
    %445 = vector.broadcast %cst_269 : f32 to vector<1x10xf32>
    %446 = arith.divf %444, %445 : vector<1x10xf32>
    %cst_270 = arith.constant dense<0.000000e+00> : vector<1x160xf32>
    %447 = tpu.matmul %446, %27, %cst_270 {dimension_numbers = #tpu.dot_dimension_numbers<[1], [0], [0], [1], [0, 0, 1, 1], [], []>} : vector<1x10xf32>, vector<10x160xf32>, vector<1x160xf32> -> vector<1x160xf32>
    %448 = vector.broadcast %447 : vector<1x160xf32> to vector<8x160xf32>
    %449 = arith.subf %437, %448 : vector<8x160xf32>
    %450 = arith.mulf %449, %449 : vector<8x160xf32>
    %cst_271 = arith.constant dense<0.000000e+00> : vector<160xf32>
    %451 = vector.multi_reduction <add>, %450, %cst_271 [0] : vector<8x160xf32> to vector<160xf32>
    %452 = vector.shape_cast %451 : vector<160xf32> to vector<1x160xf32>
    %cst_272 = arith.constant dense<0.000000e+00> : vector<1x10xf32>
    %453 = tpu.matmul %452, %25, %cst_272 {dimension_numbers = #tpu.dot_dimension_numbers<[1], [0], [0], [1], [0, 0, 1, 1], [], []>} : vector<1x160xf32>, vector<160x10xf32>, vector<1x10xf32> -> vector<1x10xf32>
    %cst_273 = arith.constant 1.280000e+02 : f32
    %454 = vector.broadcast %cst_273 : f32 to vector<1x10xf32>
    %455 = arith.divf %453, %454 : vector<1x10xf32>
    %cst_274 = arith.constant dense<0.000000e+00> : vector<1x160xf32>
    %456 = tpu.matmul %455, %27, %cst_274 {dimension_numbers = #tpu.dot_dimension_numbers<[1], [0], [0], [1], [0, 0, 1, 1], [], []>} : vector<1x10xf32>, vector<10x160xf32>, vector<1x160xf32> -> vector<1x160xf32>
    %cst_275 = arith.constant 9.99999974E-6 : f32
    %457 = vector.broadcast %cst_275 : f32 to vector<1x160xf32>
    %458 = arith.addf %456, %457 : vector<1x160xf32>
    %459 = math.rsqrt %458 : vector<1x160xf32>
    %460 = vector.broadcast %459 : vector<1x160xf32> to vector<8x160xf32>
    %461 = arith.mulf %449, %460 : vector<8x160xf32>
    %462 = vector.broadcast %439 : vector<1x160xf32> to vector<8x160xf32>
    %463 = arith.mulf %461, %462 : vector<8x160xf32>
    %464 = vector.broadcast %441 : vector<1x160xf32> to vector<8x160xf32>
    %465 = arith.addf %463, %464 : vector<8x160xf32>
    %466 = arith.mulf %465, %465 : vector<8x160xf32>
    %467 = arith.mulf %465, %466 : vector<8x160xf32>
    %cst_276 = arith.constant 4.471500e-02 : f32
    %468 = vector.broadcast %cst_276 : f32 to vector<8x160xf32>
    %469 = arith.mulf %468, %467 : vector<8x160xf32>
    %470 = arith.addf %465, %469 : vector<8x160xf32>
    %cst_277 = arith.constant 0.797884583 : f32
    %471 = vector.broadcast %cst_277 : f32 to vector<8x160xf32>
    %472 = arith.mulf %471, %470 : vector<8x160xf32>
    %473 = math.tanh %472 : vector<8x160xf32>
    %cst_278 = arith.constant 1.000000e+00 : f32
    %474 = vector.broadcast %cst_278 : f32 to vector<8x160xf32>
    %475 = arith.addf %474, %473 : vector<8x160xf32>
    %cst_279 = arith.constant 5.000000e-01 : f32
    %476 = vector.broadcast %cst_279 : f32 to vector<8x160xf32>
    %477 = arith.mulf %476, %475 : vector<8x160xf32>
    %478 = arith.mulf %465, %477 : vector<8x160xf32>
    %cst_280 = arith.constant dense<0.000000e+00> : vector<8x160xf32>
    %479 = tpu.matmul %60, %478, %cst_280 {dimension_numbers = #tpu.dot_dimension_numbers<[1], [0], [0], [1], [0, 0, 1, 1], [], []>} : vector<8x8xf32>, vector<8x160xf32>, vector<8x160xf32> -> vector<8x160xf32>
    %cst_281 = arith.constant dense<0.000000e+00> : vector<8x160xf32>
    %480 = tpu.matmul %65, %478, %cst_281 {dimension_numbers = #tpu.dot_dimension_numbers<[1], [0], [0], [1], [0, 0, 1, 1], [], []>} : vector<8x8xf32>, vector<8x160xf32>, vector<8x160xf32> -> vector<8x160xf32>
    %c1_282 = arith.constant 1 : index
    %c0_283 = arith.constant 0 : index
    %c0_284 = arith.constant 0 : index
    %c0_285 = arith.constant 0 : index
    %481 = vector.load %arg18[%c1_282, %c0_283, %c0_284, %c0_285] : memref<2x3x160x160xf32, #tpu.memory_space<vmem>>, vector<1x1x160x160xf32>
    %482 = vector.shape_cast %481 : vector<1x1x160x160xf32> to vector<160x160xf32>
    %cst_286 = arith.constant dense<0.000000e+00> : vector<8x160xf32>
    %483 = tpu.matmul %479, %482, %cst_286 {dimension_numbers = #tpu.dot_dimension_numbers<[1], [0], [0], [1], [0, 0, 1, 1], [], []>} : vector<8x160xf32>, vector<160x160xf32>, vector<8x160xf32> -> vector<8x160xf32>
    %c1_287 = arith.constant 1 : index
    %c1_288 = arith.constant 1 : index
    %c0_289 = arith.constant 0 : index
    %c0_290 = arith.constant 0 : index
    %484 = vector.load %arg18[%c1_287, %c1_288, %c0_289, %c0_290] : memref<2x3x160x160xf32, #tpu.memory_space<vmem>>, vector<1x1x160x160xf32>
    %485 = vector.shape_cast %484 : vector<1x1x160x160xf32> to vector<160x160xf32>
    %cst_291 = arith.constant dense<0.000000e+00> : vector<8x160xf32>
    %486 = tpu.matmul %478, %485, %cst_291 {dimension_numbers = #tpu.dot_dimension_numbers<[1], [0], [0], [1], [0, 0, 1, 1], [], []>} : vector<8x160xf32>, vector<160x160xf32>, vector<8x160xf32> -> vector<8x160xf32>
    %487 = arith.addf %483, %486 : vector<8x160xf32>
    %c1_292 = arith.constant 1 : index
    %c2_293 = arith.constant 2 : index
    %c0_294 = arith.constant 0 : index
    %c0_295 = arith.constant 0 : index
    %488 = vector.load %arg18[%c1_292, %c2_293, %c0_294, %c0_295] : memref<2x3x160x160xf32, #tpu.memory_space<vmem>>, vector<1x1x160x160xf32>
    %489 = vector.shape_cast %488 : vector<1x1x160x160xf32> to vector<160x160xf32>
    %cst_296 = arith.constant dense<0.000000e+00> : vector<8x160xf32>
    %490 = tpu.matmul %480, %489, %cst_296 {dimension_numbers = #tpu.dot_dimension_numbers<[1], [0], [0], [1], [0, 0, 1, 1], [], []>} : vector<8x160xf32>, vector<160x160xf32>, vector<8x160xf32> -> vector<8x160xf32>
    %491 = arith.addf %487, %490 : vector<8x160xf32>
    %c1_297 = arith.constant 1 : index
    %c0_298 = arith.constant 0 : index
    %c0_299 = arith.constant 0 : index
    %492 = vector.load %arg19[%c1_297, %c0_298, %c0_299] : memref<2x1x160xf32, #tpu.memory_space<vmem>>, vector<1x1x160xf32>
    %493 = vector.shape_cast %492 : vector<1x1x160xf32> to vector<1x160xf32>
    %494 = vector.broadcast %493 : vector<1x160xf32> to vector<8x160xf32>
    %495 = arith.addf %491, %494 : vector<8x160xf32>
    %c1_300 = arith.constant 1 : index
    %c0_301 = arith.constant 0 : index
    %c0_302 = arith.constant 0 : index
    %496 = vector.load %arg20[%c1_300, %c0_301, %c0_302] : memref<2x1x160xf32, #tpu.memory_space<vmem>>, vector<1x1x160xf32>
    %497 = vector.shape_cast %496 : vector<1x1x160xf32> to vector<1x160xf32>
    %c1_303 = arith.constant 1 : index
    %c0_304 = arith.constant 0 : index
    %c0_305 = arith.constant 0 : index
    %498 = vector.load %arg21[%c1_303, %c0_304, %c0_305] : memref<2x1x160xf32, #tpu.memory_space<vmem>>, vector<1x1x160xf32>
    %499 = vector.shape_cast %498 : vector<1x1x160xf32> to vector<1x160xf32>
    %cst_306 = arith.constant dense<0.000000e+00> : vector<160xf32>
    %500 = vector.multi_reduction <add>, %495, %cst_306 [0] : vector<8x160xf32> to vector<160xf32>
    %501 = vector.shape_cast %500 : vector<160xf32> to vector<1x160xf32>
    %cst_307 = arith.constant dense<0.000000e+00> : vector<1x10xf32>
    %502 = tpu.matmul %501, %25, %cst_307 {dimension_numbers = #tpu.dot_dimension_numbers<[1], [0], [0], [1], [0, 0, 1, 1], [], []>} : vector<1x160xf32>, vector<160x10xf32>, vector<1x10xf32> -> vector<1x10xf32>
    %cst_308 = arith.constant 1.280000e+02 : f32
    %503 = vector.broadcast %cst_308 : f32 to vector<1x10xf32>
    %504 = arith.divf %502, %503 : vector<1x10xf32>
    %cst_309 = arith.constant dense<0.000000e+00> : vector<1x160xf32>
    %505 = tpu.matmul %504, %27, %cst_309 {dimension_numbers = #tpu.dot_dimension_numbers<[1], [0], [0], [1], [0, 0, 1, 1], [], []>} : vector<1x10xf32>, vector<10x160xf32>, vector<1x160xf32> -> vector<1x160xf32>
    %506 = vector.broadcast %505 : vector<1x160xf32> to vector<8x160xf32>
    %507 = arith.subf %495, %506 : vector<8x160xf32>
    %508 = arith.mulf %507, %507 : vector<8x160xf32>
    %cst_310 = arith.constant dense<0.000000e+00> : vector<160xf32>
    %509 = vector.multi_reduction <add>, %508, %cst_310 [0] : vector<8x160xf32> to vector<160xf32>
    %510 = vector.shape_cast %509 : vector<160xf32> to vector<1x160xf32>
    %cst_311 = arith.constant dense<0.000000e+00> : vector<1x10xf32>
    %511 = tpu.matmul %510, %25, %cst_311 {dimension_numbers = #tpu.dot_dimension_numbers<[1], [0], [0], [1], [0, 0, 1, 1], [], []>} : vector<1x160xf32>, vector<160x10xf32>, vector<1x10xf32> -> vector<1x10xf32>
    %cst_312 = arith.constant 1.280000e+02 : f32
    %512 = vector.broadcast %cst_312 : f32 to vector<1x10xf32>
    %513 = arith.divf %511, %512 : vector<1x10xf32>
    %cst_313 = arith.constant dense<0.000000e+00> : vector<1x160xf32>
    %514 = tpu.matmul %513, %27, %cst_313 {dimension_numbers = #tpu.dot_dimension_numbers<[1], [0], [0], [1], [0, 0, 1, 1], [], []>} : vector<1x10xf32>, vector<10x160xf32>, vector<1x160xf32> -> vector<1x160xf32>
    %cst_314 = arith.constant 9.99999974E-6 : f32
    %515 = vector.broadcast %cst_314 : f32 to vector<1x160xf32>
    %516 = arith.addf %514, %515 : vector<1x160xf32>
    %517 = math.rsqrt %516 : vector<1x160xf32>
    %518 = vector.broadcast %517 : vector<1x160xf32> to vector<8x160xf32>
    %519 = arith.mulf %507, %518 : vector<8x160xf32>
    %520 = vector.broadcast %497 : vector<1x160xf32> to vector<8x160xf32>
    %521 = arith.mulf %519, %520 : vector<8x160xf32>
    %522 = vector.broadcast %499 : vector<1x160xf32> to vector<8x160xf32>
    %523 = arith.addf %521, %522 : vector<8x160xf32>
    %524 = arith.mulf %523, %523 : vector<8x160xf32>
    %525 = arith.mulf %523, %524 : vector<8x160xf32>
    %cst_315 = arith.constant 4.471500e-02 : f32
    %526 = vector.broadcast %cst_315 : f32 to vector<8x160xf32>
    %527 = arith.mulf %526, %525 : vector<8x160xf32>
    %528 = arith.addf %523, %527 : vector<8x160xf32>
    %cst_316 = arith.constant 0.797884583 : f32
    %529 = vector.broadcast %cst_316 : f32 to vector<8x160xf32>
    %530 = arith.mulf %529, %528 : vector<8x160xf32>
    %531 = math.tanh %530 : vector<8x160xf32>
    %cst_317 = arith.constant 1.000000e+00 : f32
    %532 = vector.broadcast %cst_317 : f32 to vector<8x160xf32>
    %533 = arith.addf %532, %531 : vector<8x160xf32>
    %cst_318 = arith.constant 5.000000e-01 : f32
    %534 = vector.broadcast %cst_318 : f32 to vector<8x160xf32>
    %535 = arith.mulf %534, %533 : vector<8x160xf32>
    %536 = arith.mulf %523, %535 : vector<8x160xf32>
    %c1_319 = arith.constant 1 : index
    %c0_320 = arith.constant 0 : index
    %c0_321 = arith.constant 0 : index
    %537 = vector.load %arg22[%c1_319, %c0_320, %c0_321] : memref<2x160x40xf32, #tpu.memory_space<vmem>>, vector<1x160x40xf32>
    %538 = vector.shape_cast %537 : vector<1x160x40xf32> to vector<160x40xf32>
    %cst_322 = arith.constant dense<0.000000e+00> : vector<8x40xf32>
    %539 = tpu.matmul %536, %538, %cst_322 {dimension_numbers = #tpu.dot_dimension_numbers<[1], [0], [0], [1], [0, 0, 1, 1], [], []>} : vector<8x160xf32>, vector<160x40xf32>, vector<8x40xf32> -> vector<8x40xf32>
    %c1_323 = arith.constant 1 : index
    %c0_324 = arith.constant 0 : index
    %c0_325 = arith.constant 0 : index
    %540 = vector.load %arg23[%c1_323, %c0_324, %c0_325] : memref<2x1x40xf32, #tpu.memory_space<vmem>>, vector<1x1x40xf32>
    %541 = vector.shape_cast %540 : vector<1x1x40xf32> to vector<1x40xf32>
    %542 = vector.broadcast %541 : vector<1x40xf32> to vector<8x40xf32>
    %543 = arith.addf %539, %542 : vector<8x40xf32>
    %c1_326 = arith.constant 1 : index
    %c0_327 = arith.constant 0 : index
    %c0_328 = arith.constant 0 : index
    %544 = vector.load %arg24[%c1_326, %c0_327, %c0_328] : memref<2x1x40xf32, #tpu.memory_space<vmem>>, vector<1x1x40xf32>
    %545 = vector.shape_cast %544 : vector<1x1x40xf32> to vector<1x40xf32>
    %c1_329 = arith.constant 1 : index
    %c0_330 = arith.constant 0 : index
    %c0_331 = arith.constant 0 : index
    %546 = vector.load %arg25[%c1_329, %c0_330, %c0_331] : memref<2x1x40xf32, #tpu.memory_space<vmem>>, vector<1x1x40xf32>
    %547 = vector.shape_cast %546 : vector<1x1x40xf32> to vector<1x40xf32>
    %cst_332 = arith.constant dense<0.000000e+00> : vector<40xf32>
    %548 = vector.multi_reduction <add>, %543, %cst_332 [0] : vector<8x40xf32> to vector<40xf32>
    %549 = vector.shape_cast %548 : vector<40xf32> to vector<1x40xf32>
    %cst_333 = arith.constant dense<0.000000e+00> : vector<1x10xf32>
    %550 = tpu.matmul %549, %51, %cst_333 {dimension_numbers = #tpu.dot_dimension_numbers<[1], [0], [0], [1], [0, 0, 1, 1], [], []>} : vector<1x40xf32>, vector<40x10xf32>, vector<1x10xf32> -> vector<1x10xf32>
    %cst_334 = arith.constant 3.200000e+01 : f32
    %551 = vector.broadcast %cst_334 : f32 to vector<1x10xf32>
    %552 = arith.divf %550, %551 : vector<1x10xf32>
    %cst_335 = arith.constant dense<0.000000e+00> : vector<1x40xf32>
    %553 = tpu.matmul %552, %53, %cst_335 {dimension_numbers = #tpu.dot_dimension_numbers<[1], [0], [0], [1], [0, 0, 1, 1], [], []>} : vector<1x10xf32>, vector<10x40xf32>, vector<1x40xf32> -> vector<1x40xf32>
    %554 = vector.broadcast %553 : vector<1x40xf32> to vector<8x40xf32>
    %555 = arith.subf %543, %554 : vector<8x40xf32>
    %556 = arith.mulf %555, %555 : vector<8x40xf32>
    %cst_336 = arith.constant dense<0.000000e+00> : vector<40xf32>
    %557 = vector.multi_reduction <add>, %556, %cst_336 [0] : vector<8x40xf32> to vector<40xf32>
    %558 = vector.shape_cast %557 : vector<40xf32> to vector<1x40xf32>
    %cst_337 = arith.constant dense<0.000000e+00> : vector<1x10xf32>
    %559 = tpu.matmul %558, %51, %cst_337 {dimension_numbers = #tpu.dot_dimension_numbers<[1], [0], [0], [1], [0, 0, 1, 1], [], []>} : vector<1x40xf32>, vector<40x10xf32>, vector<1x10xf32> -> vector<1x10xf32>
    %cst_338 = arith.constant 3.200000e+01 : f32
    %560 = vector.broadcast %cst_338 : f32 to vector<1x10xf32>
    %561 = arith.divf %559, %560 : vector<1x10xf32>
    %cst_339 = arith.constant dense<0.000000e+00> : vector<1x40xf32>
    %562 = tpu.matmul %561, %53, %cst_339 {dimension_numbers = #tpu.dot_dimension_numbers<[1], [0], [0], [1], [0, 0, 1, 1], [], []>} : vector<1x10xf32>, vector<10x40xf32>, vector<1x40xf32> -> vector<1x40xf32>
    %cst_340 = arith.constant 9.99999974E-6 : f32
    %563 = vector.broadcast %cst_340 : f32 to vector<1x40xf32>
    %564 = arith.addf %562, %563 : vector<1x40xf32>
    %565 = math.rsqrt %564 : vector<1x40xf32>
    %566 = vector.broadcast %565 : vector<1x40xf32> to vector<8x40xf32>
    %567 = arith.mulf %555, %566 : vector<8x40xf32>
    %568 = vector.broadcast %545 : vector<1x40xf32> to vector<8x40xf32>
    %569 = arith.mulf %567, %568 : vector<8x40xf32>
    %570 = vector.broadcast %547 : vector<1x40xf32> to vector<8x40xf32>
    %571 = arith.addf %569, %570 : vector<8x40xf32>
    %572 = arith.addf %404, %571 : vector<8x40xf32>
    %c0_341 = arith.constant 0 : index
    %c0_342 = arith.constant 0 : index
    %573 = vector.load %arg26[%c0_341, %c0_342] : memref<1x40xf32, #tpu.memory_space<vmem>>, vector<1x40xf32>
    %c0_343 = arith.constant 0 : index
    %c0_344 = arith.constant 0 : index
    %574 = vector.load %arg27[%c0_343, %c0_344] : memref<1x40xf32, #tpu.memory_space<vmem>>, vector<1x40xf32>
    %cst_345 = arith.constant dense<0.000000e+00> : vector<8xf32>
    %575 = vector.multi_reduction <add>, %572, %cst_345 [1] : vector<8x40xf32> to vector<8xf32>
    %576 = vector.shape_cast %575 : vector<8xf32> to vector<8x1xf32>
    %cst_346 = arith.constant 4.000000e+01 : f32
    %577 = vector.broadcast %cst_346 : f32 to vector<8x1xf32>
    %578 = arith.divf %576, %577 : vector<8x1xf32>
    %579 = vector.broadcast %578 : vector<8x1xf32> to vector<8x40xf32>
    %580 = arith.subf %572, %579 : vector<8x40xf32>
    %581 = arith.mulf %580, %580 : vector<8x40xf32>
    %cst_347 = arith.constant dense<0.000000e+00> : vector<8xf32>
    %582 = vector.multi_reduction <add>, %581, %cst_347 [1] : vector<8x40xf32> to vector<8xf32>
    %583 = vector.shape_cast %582 : vector<8xf32> to vector<8x1xf32>
    %cst_348 = arith.constant 4.000000e+01 : f32
    %584 = vector.broadcast %cst_348 : f32 to vector<8x1xf32>
    %585 = arith.divf %583, %584 : vector<8x1xf32>
    %586 = vector.broadcast %578 : vector<8x1xf32> to vector<8x40xf32>
    %587 = arith.subf %572, %586 : vector<8x40xf32>
    %cst_349 = arith.constant 9.99999974E-6 : f32
    %588 = vector.broadcast %cst_349 : f32 to vector<8x1xf32>
    %589 = arith.addf %585, %588 : vector<8x1xf32>
    %590 = math.rsqrt %589 : vector<8x1xf32>
    %591 = vector.broadcast %590 : vector<8x1xf32> to vector<8x40xf32>
    %592 = arith.mulf %587, %591 : vector<8x40xf32>
    %593 = vector.broadcast %573 : vector<1x40xf32> to vector<8x40xf32>
    %594 = arith.mulf %592, %593 : vector<8x40xf32>
    %595 = vector.broadcast %574 : vector<1x40xf32> to vector<8x40xf32>
    %596 = arith.addf %594, %595 : vector<8x40xf32>
    %c0_350 = arith.constant 0 : index
    %c0_351 = arith.constant 0 : index
    %597 = vector.load %arg28[%c0_350, %c0_351] : memref<40x128xf32, #tpu.memory_space<vmem>>, vector<40x128xf32>
    %cst_352 = arith.constant dense<0.000000e+00> : vector<8x128xf32>
    %598 = tpu.matmul %596, %597, %cst_352 {dimension_numbers = #tpu.dot_dimension_numbers<[1], [0], [0], [1], [0, 0, 1, 1], [], []>} : vector<8x40xf32>, vector<40x128xf32>, vector<8x128xf32> -> vector<8x128xf32>
    %c0_353 = arith.constant 0 : index
    %c0_354 = arith.constant 0 : index
    %599 = vector.load %arg29[%c0_353, %c0_354] : memref<1x128xf32, #tpu.memory_space<vmem>>, vector<1x128xf32>
    %600 = vector.broadcast %599 : vector<1x128xf32> to vector<8x128xf32>
    %601 = arith.addf %598, %600 : vector<8x128xf32>
    %c0_355 = arith.constant 0 : index
    %c0_356 = arith.constant 0 : index
    %c0_357 = arith.constant 0 : index
    %602 = vector.load %arg30[%c0_355, %c0_356, %c0_357] : memref<1x8x128xf32, #tpu.memory_space<vmem>>, vector<1x8x128xf32>
    %603 = vector.shape_cast %602 : vector<1x8x128xf32> to vector<8x128xf32>
    %604 = vector.shape_cast %601 : vector<8x128xf32> to vector<1x8x128xf32>
    tpu.vector_store %arg30[%c0_355, %c0_356, %c0_357], %604 {strides = array<i32>} : memref<1x8x128xf32, #tpu.memory_space<vmem>>, vector<1x8x128xf32>,
    return
  }
  func.func @transform_0(%arg0: i32) -> (i32, i32, i32) {
    %c0_i32 = arith.constant 0 : i32
    %c0_i32_0 = arith.constant 0 : i32
    %c0_i32_1 = arith.constant 0 : i32
    return %arg0, %c0_i32, %c0_i32_0 : i32, i32, i32
  }
  func.func @transform_1(%arg0: i32) -> (i32, i32) {
    %c0_i32 = arith.constant 0 : i32
    %c0_i32_0 = arith.constant 0 : i32
    %c0_i32_1 = arith.constant 0 : i32
    return %c0_i32, %c0_i32_0 : i32, i32
  }
  func.func @transform_2(%arg0: i32) -> (i32, i32) {
    %c0_i32 = arith.constant 0 : i32
    %c0_i32_0 = arith.constant 0 : i32
    %c0_i32_1 = arith.constant 0 : i32
    return %c0_i32, %c0_i32_0 : i32, i32
  }
  func.func @transform_3(%arg0: i32) -> (i32, i32) {
    %c0_i32 = arith.constant 0 : i32
    %c0_i32_0 = arith.constant 0 : i32
    %c0_i32_1 = arith.constant 0 : i32
    return %c0_i32, %c0_i32_0 : i32, i32
  }
  func.func @transform_4(%arg0: i32) -> (i32, i32, i32) {
    %c0_i32 = arith.constant 0 : i32
    %c0_i32_0 = arith.constant 0 : i32
    %c0_i32_1 = arith.constant 0 : i32
    %c0_i32_2 = arith.constant 0 : i32
    return %c0_i32, %c0_i32_0, %c0_i32_1 : i32, i32, i32
  }
  func.func @transform_5(%arg0: i32) -> (i32, i32, i32) {
    %c0_i32 = arith.constant 0 : i32
    %c0_i32_0 = arith.constant 0 : i32
    %c0_i32_1 = arith.constant 0 : i32
    %c0_i32_2 = arith.constant 0 : i32
    return %c0_i32, %c0_i32_0, %c0_i32_1 : i32, i32, i32
  }
  func.func @transform_6(%arg0: i32) -> (i32, i32, i32, i32) {
    %c0_i32 = arith.constant 0 : i32
    %c0_i32_0 = arith.constant 0 : i32
    %c0_i32_1 = arith.constant 0 : i32
    %c0_i32_2 = arith.constant 0 : i32
    %c0_i32_3 = arith.constant 0 : i32
    return %c0_i32, %c0_i32_0, %c0_i32_1, %c0_i32_2 : i32, i32, i32, i32
  }
  func.func @transform_7(%arg0: i32) -> (i32, i32, i32, i32) {
    %c0_i32 = arith.constant 0 : i32
    %c0_i32_0 = arith.constant 0 : i32
    %c0_i32_1 = arith.constant 0 : i32
    %c0_i32_2 = arith.constant 0 : i32
    %c0_i32_3 = arith.constant 0 : i32
    return %c0_i32, %c0_i32_0, %c0_i32_1, %c0_i32_2 : i32, i32, i32, i32
  }
  func.func @transform_8(%arg0: i32) -> (i32, i32, i32, i32) {
    %c0_i32 = arith.constant 0 : i32
    %c0_i32_0 = arith.constant 0 : i32
    %c0_i32_1 = arith.constant 0 : i32
    %c0_i32_2 = arith.constant 0 : i32
    %c0_i32_3 = arith.constant 0 : i32
    return %c0_i32, %c0_i32_0, %c0_i32_1, %c0_i32_2 : i32, i32, i32, i32
  }
  func.func @transform_9(%arg0: i32) -> (i32, i32, i32, i32) {
    %c0_i32 = arith.constant 0 : i32
    %c0_i32_0 = arith.constant 0 : i32
    %c0_i32_1 = arith.constant 0 : i32
    %c0_i32_2 = arith.constant 0 : i32
    %c0_i32_3 = arith.constant 0 : i32
    return %c0_i32, %c0_i32_0, %c0_i32_1, %c0_i32_2 : i32, i32, i32, i32
  }
  func.func @transform_10(%arg0: i32) -> (i32, i32, i32) {
    %c0_i32 = arith.constant 0 : i32
    %c0_i32_0 = arith.constant 0 : i32
    %c0_i32_1 = arith.constant 0 : i32
    %c0_i32_2 = arith.constant 0 : i32
    return %c0_i32, %c0_i32_0, %c0_i32_1 : i32, i32, i32
  }
  func.func @transform_11(%arg0: i32) -> (i32, i32, i32) {
    %c0_i32 = arith.constant 0 : i32
    %c0_i32_0 = arith.constant 0 : i32
    %c0_i32_1 = arith.constant 0 : i32
    %c0_i32_2 = arith.constant 0 : i32
    return %c0_i32, %c0_i32_0, %c0_i32_1 : i32, i32, i32
  }
  func.func @transform_12(%arg0: i32) -> (i32, i32, i32) {
    %c0_i32 = arith.constant 0 : i32
    %c0_i32_0 = arith.constant 0 : i32
    %c0_i32_1 = arith.constant 0 : i32
    %c0_i32_2 = arith.constant 0 : i32
    return %c0_i32, %c0_i32_0, %c0_i32_1 : i32, i32, i32
  }
  func.func @transform_13(%arg0: i32) -> (i32, i32, i32) {
    %c0_i32 = arith.constant 0 : i32
    %c0_i32_0 = arith.constant 0 : i32
    %c0_i32_1 = arith.constant 0 : i32
    %c0_i32_2 = arith.constant 0 : i32
    return %c0_i32, %c0_i32_0, %c0_i32_1 : i32, i32, i32
  }
  func.func @transform_14(%arg0: i32) -> (i32, i32, i32) {
    %c0_i32 = arith.constant 0 : i32
    %c0_i32_0 = arith.constant 0 : i32
    %c0_i32_1 = arith.constant 0 : i32
    %c0_i32_2 = arith.constant 0 : i32
    return %c0_i32, %c0_i32_0, %c0_i32_1 : i32, i32, i32
  }
  func.func @transform_15(%arg0: i32) -> (i32, i32, i32) {
    %c0_i32 = arith.constant 0 : i32
    %c0_i32_0 = arith.constant 0 : i32
    %c0_i32_1 = arith.constant 0 : i32
    %c0_i32_2 = arith.constant 0 : i32
    return %c0_i32, %c0_i32_0, %c0_i32_1 : i32, i32, i32
  }
  func.func @transform_16(%arg0: i32) -> (i32, i32, i32) {
    %c0_i32 = arith.constant 0 : i32
    %c0_i32_0 = arith.constant 0 : i32
    %c0_i32_1 = arith.constant 0 : i32
    %c0_i32_2 = arith.constant 0 : i32
    return %c0_i32, %c0_i32_0, %c0_i32_1 : i32, i32, i32
  }
  func.func @transform_17(%arg0: i32) -> (i32, i32, i32, i32) {
    %c0_i32 = arith.constant 0 : i32
    %c0_i32_0 = arith.constant 0 : i32
    %c0_i32_1 = arith.constant 0 : i32
    %c0_i32_2 = arith.constant 0 : i32
    %c0_i32_3 = arith.constant 0 : i32
    return %c0_i32, %c0_i32_0, %c0_i32_1, %c0_i32_2 : i32, i32, i32, i32
  }
  func.func @transform_18(%arg0: i32) -> (i32, i32, i32) {
    %c0_i32 = arith.constant 0 : i32
    %c0_i32_0 = arith.constant 0 : i32
    %c0_i32_1 = arith.constant 0 : i32
    %c0_i32_2 = arith.constant 0 : i32
    return %c0_i32, %c0_i32_0, %c0_i32_1 : i32, i32, i32
  }
  func.func @transform_19(%arg0: i32) -> (i32, i32, i32) {
    %c0_i32 = arith.constant 0 : i32
    %c0_i32_0 = arith.constant 0 : i32
    %c0_i32_1 = arith.constant 0 : i32
    %c0_i32_2 = arith.constant 0 : i32
    return %c0_i32, %c0_i32_0, %c0_i32_1 : i32, i32, i32
  }
  func.func @transform_20(%arg0: i32) -> (i32, i32, i32) {
    %c0_i32 = arith.constant 0 : i32
    %c0_i32_0 = arith.constant 0 : i32
    %c0_i32_1 = arith.constant 0 : i32
    %c0_i32_2 = arith.constant 0 : i32
    return %c0_i32, %c0_i32_0, %c0_i32_1 : i32, i32, i32
  }
  func.func @transform_21(%arg0: i32) -> (i32, i32, i32) {
    %c0_i32 = arith.constant 0 : i32
    %c0_i32_0 = arith.constant 0 : i32
    %c0_i32_1 = arith.constant 0 : i32
    %c0_i32_2 = arith.constant 0 : i32
    return %c0_i32, %c0_i32_0, %c0_i32_1 : i32, i32, i32
  }
  func.func @transform_22(%arg0: i32) -> (i32, i32, i32) {
    %c0_i32 = arith.constant 0 : i32
    %c0_i32_0 = arith.constant 0 : i32
    %c0_i32_1 = arith.constant 0 : i32
    %c0_i32_2 = arith.constant 0 : i32
    return %c0_i32, %c0_i32_0, %c0_i32_1 : i32, i32, i32
  }
  func.func @transform_23(%arg0: i32) -> (i32, i32, i32) {
    %c0_i32 = arith.constant 0 : i32
    %c0_i32_0 = arith.constant 0 : i32
    %c0_i32_1 = arith.constant 0 : i32
    %c0_i32_2 = arith.constant 0 : i32
    return %c0_i32, %c0_i32_0, %c0_i32_1 : i32, i32, i32
  }
  func.func @transform_24(%arg0: i32) -> (i32, i32, i32) {
    %c0_i32 = arith.constant 0 : i32
    %c0_i32_0 = arith.constant 0 : i32
    %c0_i32_1 = arith.constant 0 : i32
    %c0_i32_2 = arith.constant 0 : i32
    return %c0_i32, %c0_i32_0, %c0_i32_1 : i32, i32, i32
  }
  func.func @transform_25(%arg0: i32) -> (i32, i32) {
    %c0_i32 = arith.constant 0 : i32
    %c0_i32_0 = arith.constant 0 : i32
    %c0_i32_1 = arith.constant 0 : i32
    return %c0_i32, %c0_i32_0 : i32, i32
  }
  func.func @transform_26(%arg0: i32) -> (i32, i32) {
    %c0_i32 = arith.constant 0 : i32
    %c0_i32_0 = arith.constant 0 : i32
    %c0_i32_1 = arith.constant 0 : i32
    return %c0_i32, %c0_i32_0 : i32, i32
  }
  func.func @transform_27(%arg0: i32) -> (i32, i32) {
    %c0_i32 = arith.constant 0 : i32
    %c0_i32_0 = arith.constant 0 : i32
    %c0_i32_1 = arith.constant 0 : i32
    return %c0_i32, %c0_i32_0 : i32, i32
  }
  func.func @transform_28(%arg0: i32) -> (i32, i32) {
    %c0_i32 = arith.constant 0 : i32
    %c0_i32_0 = arith.constant 0 : i32
    %c0_i32_1 = arith.constant 0 : i32
    return %c0_i32, %c0_i32_0 : i32, i32
  }
  func.func @transform_29(%arg0: i32) -> (i32, i32, i32) {
    %c0_i32 = arith.constant 0 : i32
    %c0_i32_0 = arith.constant 0 : i32
    %c0_i32_1 = arith.constant 0 : i32
    return %arg0, %c0_i32, %c0_i32_0 : i32, i32, i32
  }
}

</mosaic_0001>

<llo_original>
// kernel: model_forward.1
$region0: #{model_forward.1}
  #allocation0 [shape = 'u32[]', space=smem, size = 0x4, offset = 0x4, fixed_abs, tag = 'smem constant byte address 0x4 - core index']
  #allocation1 [shape = 'u32[72,128]{1,0:T(1,128)}', space=vmem, size = 0x9000, scoped, tag = 'internal scratch']
  %s0 = inlined_call_operand.smem [shape: u32[30], index: -1, kind: input, shape index: {}]
  %s1 = sld [smem:[%s0]]
  %s2 = scalar_lea.smem %s0, 1
  %s3 = sld [smem:[%s2]]
  %s4 = scalar_lea.smem %s0, 2
  %s5 = sld [smem:[%s4]]
  %s6 = scalar_lea.smem %s0, 3
  %s7 = sld [smem:[%s6]]
  %s8 = scalar_lea.smem %s0, 4
  %s9 = sld [smem:[%s8]]
  %s10 = scalar_lea.smem %s0, 5
  %s11 = sld [smem:[%s10]]
  %s12 = scalar_lea.smem %s0, 6
  %s13 = sld [smem:[%s12]]
  %s14 = scalar_lea.smem %s0, 7
  %s15 = sld [smem:[%s14]]
  %s16 = scalar_lea.smem %s0, 8
  %s17 = sld [smem:[%s16]]
  %s18 = scalar_lea.smem %s0, 9
  %s19 = sld [smem:[%s18]]
  %s20 = scalar_lea.smem %s0, 10
  %s21 = sld [smem:[%s20]]
  %s22 = scalar_lea.smem %s0, 11
  %s23 = sld [smem:[%s22]]
  %s24 = scalar_lea.smem %s0, 12
  %s25 = sld [smem:[%s24]]
  %s26 = scalar_lea.smem %s0, 13
  %s27 = sld [smem:[%s26]]
  %s28 = scalar_lea.smem %s0, 14
  %s29 = sld [smem:[%s28]]
  %s30 = scalar_lea.smem %s0, 15
  %s31 = sld [smem:[%s30]]
  %s32 = scalar_lea.smem %s0, 16
  %s33 = sld [smem:[%s32]]
  %s34 = scalar_lea.smem %s0, 17
  %s35 = sld [smem:[%s34]]
  %s36 = scalar_lea.smem %s0, 18
  %s37 = sld [smem:[%s36]]
  %s38 = scalar_lea.smem %s0, 19
  %s39 = sld [smem:[%s38]]
  %s40 = scalar_lea.smem %s0, 20
  %s41 = sld [smem:[%s40]]
  %s42 = scalar_lea.smem %s0, 21
  %s43 = sld [smem:[%s42]]
  %s44 = scalar_lea.smem %s0, 22
  %s45 = sld [smem:[%s44]]
  %s46 = scalar_lea.smem %s0, 23
  %s47 = sld [smem:[%s46]]
  %s48 = scalar_lea.smem %s0, 24
  %s49 = sld [smem:[%s48]]
  %s50 = scalar_lea.smem %s0, 25
  %s51 = sld [smem:[%s50]]
  %s52 = scalar_lea.smem %s0, 26
  %s53 = sld [smem:[%s52]]
  %s54 = scalar_lea.smem %s0, 27
  %s55 = sld [smem:[%s54]]
  %s56 = scalar_lea.smem %s0, 28
  %s57 = sld [smem:[%s56]]
  %s58 = scalar_lea.smem %s0, 29
  %s59 = sld [smem:[%s58]]
  %s60 = sld [smem:[#allocation0]]
  $region153: #{model_forward.1} parent=0
    _
  %s62 = ssub.s32 1, %s60
  %s63 = scalar_select 0, %s62, %s60
  $region1: #{model_forward.1} parent=0
    #allocation2 [shape = 'u8[983040]{0}', space=vmem, size = 0xf0000, scoped, tag = 'input window, operand 17, single buffered']
    #allocation3 [shape = 's32[2]{0}', space=sflag, size = 0x8, scoped, tag = 'scoped memory for model_forward.1']
    %64 = vsyncpa [#allocation3], 0
    loop: start=0, step=1, limit=4
    $region2: #{model_forward.1} parent=1 // loop_pre_header
      _
    $region3: #{model_forward.1} parent=1 // loop_header
      %s66 = sphi 0, %s70
      %p67 = scmp.ge.s32.totalorder %s66, 4
      %s76 = sphi 0, %s78
      %s79 = sphi 0, %s76
      %s80 = sphi 0, %s79
      %s96 = sphi 0, %s80
      %s100 = sphi 0, %s100
      %s102 = sphi 0, %s100
      %s103 = sphi 0, %s102
      %s117 = sphi 0, %s103
      %s121 = sphi 0, %s121
      %s123 = sphi 0, %s121
      %s124 = sphi 0, %s123
      %s138 = sphi 0, %s124
      %s142 = sphi 0, %s142
      %s144 = sphi 0, %s142
      %s145 = sphi 0, %s144
      %s159 = sphi 0, %s145
      %s163 = sphi 0, %s163
      %s165 = sphi 0, %s163
      %s166 = sphi 0, %s165
      %s180 = sphi 0, %s166
      %s184 = sphi 0, %s184
      %s186 = sphi 0, %s184
      %s187 = sphi 0, %s186
      %s201 = sphi 0, %s187
      %s205 = sphi 0, %s205
      %s207 = sphi 0, %s205
      %s208 = sphi 0, %s207
      %s222 = sphi 0, %s208
      %s226 = sphi 0, %s226
      %s228 = sphi 0, %s226
      %s229 = sphi 0, %s228
      %s243 = sphi 0, %s229
      %s247 = sphi 0, %s247
      %s249 = sphi 0, %s247
      %s250 = sphi 0, %s249
      %s264 = sphi 0, %s250
      %s268 = sphi 0, %s268
      %s270 = sphi 0, %s268
      %s271 = sphi 0, %s270
      %s285 = sphi 0, %s271
      %s289 = sphi 0, %s289
      %s291 = sphi 0, %s289
      %s292 = sphi 0, %s291
      %s306 = sphi 0, %s292
      %s310 = sphi 0, %s310
      %s312 = sphi 0, %s310
      %s313 = sphi 0, %s312
      %s327 = sphi 0, %s313
      %s331 = sphi 0, %s331
      %s333 = sphi 0, %s331
      %s334 = sphi 0, %s333
      %s348 = sphi 0, %s334
      %s352 = sphi 0, %s352
      %s354 = sphi 0, %s352
      %s355 = sphi 0, %s354
      %s369 = sphi 0, %s355
      %s373 = sphi 0, %s373
      %s375 = sphi 0, %s373
      %s376 = sphi 0, %s375
      %s390 = sphi 0, %s376
      %s394 = sphi 0, %s394
      %s396 = sphi 0, %s394
      %s397 = sphi 0, %s396
      %s411 = sphi 0, %s397
      %s415 = sphi 0, %s415
      %s417 = sphi 0, %s415
      %s418 = sphi 0, %s417
      %s432 = sphi 0, %s418
      %s436 = sphi 0, %s436
      %s438 = sphi 0, %s436
      %s439 = sphi 0, %s438
      %s453 = sphi 0, %s439
      %s457 = sphi 0, %s457
      %s459 = sphi 0, %s457
      %s460 = sphi 0, %s459
      %s474 = sphi 0, %s460
      %s478 = sphi 0, %s478
      %s480 = sphi 0, %s478
      %s481 = sphi 0, %s480
      %s495 = sphi 0, %s481
      %s499 = sphi 0, %s499
      %s501 = sphi 0, %s499
      %s502 = sphi 0, %s501
      %s516 = sphi 0, %s502
      %s520 = sphi 0, %s520
      %s522 = sphi 0, %s520
      %s523 = sphi 0, %s522
      %s537 = sphi 0, %s523
      %s541 = sphi 0, %s541
      %s543 = sphi 0, %s541
      %s544 = sphi 0, %s543
      %s558 = sphi 0, %s544
      %s562 = sphi 0, %s562
      %s564 = sphi 0, %s562
      %s565 = sphi 0, %s564
      %s579 = sphi 0, %s565
      %s583 = sphi 0, %s583
      %s585 = sphi 0, %s583
      %s586 = sphi 0, %s585
      %s600 = sphi 0, %s586
      %s604 = sphi 0, %s604
      %s606 = sphi 0, %s604
      %s607 = sphi 0, %s606
      %s621 = sphi 0, %s607
      %s625 = sphi 0, %s625
      %s627 = sphi 0, %s625
      %s628 = sphi 0, %s627
      %s642 = sphi 0, %s628
      %s646 = sphi 0, %s646
      %s648 = sphi 0, %s646
      %s649 = sphi 0, %s648
      %s663 = sphi 0, %s649
      %s667 = sphi 0, %s667
      %s669 = sphi 0, %s667
      %s670 = sphi 0, %s669
      %s684 = sphi 0, %s670
      %s690 = sphi 0, %s692
      %s693 = sphi 0, %s690
      %s694 = sphi 0, %s693
      %s710 = sphi 0, %s694
    $region4: #{model_forward.1} parent=1 // loop_header_branch
      %69 = sbr.rel (%p67) target = $region8
    $region5: #{model_forward.1} parent=1 // loop_body
      %s71 = ssub.s32 %s66, 1
      %s72 = ssub.s32 %s66, 2
      %s73 = sadd.s32 %s66, 1
      %s74 = ssub.s32 %s66, %s73
      %p75 = scmp.eq.s32.totalorder %s74, 0
      %s77 = sadd.s32 %s76, 1
      %s78 = scalar_select %p75, %s76, %s77
      %p81 = pneg %p75
      %p82 = scmp.eq.s32.totalorder %s66, 1
      %p83 = por %p81, %p82
      %p84 = scmp.ne.s32.totalorder %s76, %s79
      %p85 = scmp.eq.s32.totalorder %s66, 0
      %p86 = por %p84, %p85
      %p87 = scmp.ne.s32.totalorder %s76, %s79
      %p88 = scmp.eq.s32.totalorder %s71, 1
      %p89 = por %p87, %p88
      %p90 = scmp.ne.s32.totalorder %s79, %s80
      %p91 = scmp.eq.s32.totalorder %s71, 0
      %p92 = por %p90, %p91
      %p93 = scmp.ne.s32.totalorder %s79, %s80
      %p94 = scmp.eq.s32.totalorder %s72, 1
      %p95 = por %p93, %p94
      %p97 = scmp.ne.s32.totalorder %s80, %s96
      %p98 = scmp.eq.s32.totalorder %s72, 0
      %p99 = por %p97, %p98
      %s101 = sadd.s32 %s100, 1
      %p104 = scmp.eq.s32.totalorder %s66, 1
      %p105 = scmp.ne.s32.totalorder %s100, %s102
      %p106 = scmp.eq.s32.totalorder %s66, 0
      %p107 = por %p105, %p106
      %p108 = scmp.ne.s32.totalorder %s100, %s102
      %p109 = scmp.eq.s32.totalorder %s71, 1
      %p110 = por %p108, %p109
      %p111 = scmp.ne.s32.totalorder %s102, %s103
      %p112 = scmp.eq.s32.totalorder %s71, 0
      %p113 = por %p111, %p112
      %p114 = scmp.ne.s32.totalorder %s102, %s103
      %p115 = scmp.eq.s32.totalorder %s72, 1
      %p116 = por %p114, %p115
      %p118 = scmp.ne.s32.totalorder %s103, %s117
      %p119 = scmp.eq.s32.totalorder %s72, 0
      %p120 = por %p118, %p119
      %s122 = sadd.s32 %s121, 1
      %p125 = scmp.eq.s32.totalorder %s66, 1
      %p126 = scmp.ne.s32.totalorder %s121, %s123
      %p127 = scmp.eq.s32.totalorder %s66, 0
      %p128 = por %p126, %p127
      %p129 = scmp.ne.s32.totalorder %s121, %s123
      %p130 = scmp.eq.s32.totalorder %s71, 1
      %p131 = por %p129, %p130
      %p132 = scmp.ne.s32.totalorder %s123, %s124
      %p133 = scmp.eq.s32.totalorder %s71, 0
      %p134 = por %p132, %p133
      %p135 = scmp.ne.s32.totalorder %s123, %s124
      %p136 = scmp.eq.s32.totalorder %s72, 1
      %p137 = por %p135, %p136
      %p139 = scmp.ne.s32.totalorder %s124, %s138
      %p140 = scmp.eq.s32.totalorder %s72, 0
      %p141 = por %p139, %p140
      %s143 = sadd.s32 %s142, 1
      %p146 = scmp.eq.s32.totalorder %s66, 1
      %p147 = scmp.ne.s32.totalorder %s142, %s144
      %p148 = scmp.eq.s32.totalorder %s66, 0
      %p149 = por %p147, %p148
      %p150 = scmp.ne.s32.totalorder %s142, %s144
      %p151 = scmp.eq.s32.totalorder %s71, 1
      %p152 = por %p150, %p151
      %p153 = scmp.ne.s32.totalorder %s144, %s145
      %p154 = scmp.eq.s32.totalorder %s71, 0
      %p155 = por %p153, %p154
      %p156 = scmp.ne.s32.totalorder %s144, %s145
      %p157 = scmp.eq.s32.totalorder %s72, 1
      %p158 = por %p156, %p157
      %p160 = scmp.ne.s32.totalorder %s145, %s159
      %p161 = scmp.eq.s32.totalorder %s72, 0
      %p162 = por %p160, %p161
      %s164 = sadd.s32 %s163, 1
      %p167 = scmp.eq.s32.totalorder %s66, 1
      %p168 = scmp.ne.s32.totalorder %s163, %s165
      %p169 = scmp.eq.s32.totalorder %s66, 0
      %p170 = por %p168, %p169
      %p171 = scmp.ne.s32.totalorder %s163, %s165
      %p172 = scmp.eq.s32.totalorder %s71, 1
      %p173 = por %p171, %p172
      %p174 = scmp.ne.s32.totalorder %s165, %s166
      %p175 = scmp.eq.s32.totalorder %s71, 0
      %p176 = por %p174, %p175
      %p177 = scmp.ne.s32.totalorder %s165, %s166
      %p178 = scmp.eq.s32.totalorder %s72, 1
      %p179 = por %p177, %p178
      %p181 = scmp.ne.s32.totalorder %s166, %s180
      %p182 = scmp.eq.s32.totalorder %s72, 0
      %p183 = por %p181, %p182
      %s185 = sadd.s32 %s184, 1
      %p188 = scmp.eq.s32.totalorder %s66, 1
      %p189 = scmp.ne.s32.totalorder %s184, %s186
      %p190 = scmp.eq.s32.totalorder %s66, 0
      %p191 = por %p189, %p190
      %p192 = scmp.ne.s32.totalorder %s184, %s186
      %p193 = scmp.eq.s32.totalorder %s71, 1
      %p194 = por %p192, %p193
      %p195 = scmp.ne.s32.totalorder %s186, %s187
      %p196 = scmp.eq.s32.totalorder %s71, 0
      %p197 = por %p195, %p196
      %p198 = scmp.ne.s32.totalorder %s186, %s187
      %p199 = scmp.eq.s32.totalorder %s72, 1
      %p200 = por %p198, %p199
      %p202 = scmp.ne.s32.totalorder %s187, %s201
      %p203 = scmp.eq.s32.totalorder %s72, 0
      %p204 = por %p202, %p203
      %s206 = sadd.s32 %s205, 1
      %p209 = scmp.eq.s32.totalorder %s66, 1
      %p210 = scmp.ne.s32.totalorder %s205, %s207
      %p211 = scmp.eq.s32.totalorder %s66, 0
      %p212 = por %p210, %p211
      %p213 = scmp.ne.s32.totalorder %s205, %s207
      %p214 = scmp.eq.s32.totalorder %s71, 1
      %p215 = por %p213, %p214
      %p216 = scmp.ne.s32.totalorder %s207, %s208
      %p217 = scmp.eq.s32.totalorder %s71, 0
      %p218 = por %p216, %p217
      %p219 = scmp.ne.s32.totalorder %s207, %s208
      %p220 = scmp.eq.s32.totalorder %s72, 1
      %p221 = por %p219, %p220
      %p223 = scmp.ne.s32.totalorder %s208, %s222
      %p224 = scmp.eq.s32.totalorder %s72, 0
      %p225 = por %p223, %p224
      %s227 = sadd.s32 %s226, 1
      %p230 = scmp.eq.s32.totalorder %s66, 1
      %p231 = scmp.ne.s32.totalorder %s226, %s228
      %p232 = scmp.eq.s32.totalorder %s66, 0
      %p233 = por %p231, %p232
      %p234 = scmp.ne.s32.totalorder %s226, %s228
      %p235 = scmp.eq.s32.totalorder %s71, 1
      %p236 = por %p234, %p235
      %p237 = scmp.ne.s32.totalorder %s228, %s229
      %p238 = scmp.eq.s32.totalorder %s71, 0
      %p239 = por %p237, %p238
      %p240 = scmp.ne.s32.totalorder %s228, %s229
      %p241 = scmp.eq.s32.totalorder %s72, 1
      %p242 = por %p240, %p241
      %p244 = scmp.ne.s32.totalorder %s229, %s243
      %p245 = scmp.eq.s32.totalorder %s72, 0
      %p246 = por %p244, %p245
      %s248 = sadd.s32 %s247, 1
      %p251 = scmp.eq.s32.totalorder %s66, 1
      %p252 = scmp.ne.s32.totalorder %s247, %s249
      %p253 = scmp.eq.s32.totalorder %s66, 0
      %p254 = por %p252, %p253
      %p255 = scmp.ne.s32.totalorder %s247, %s249
      %p256 = scmp.eq.s32.totalorder %s71, 1
      %p257 = por %p255, %p256
      %p258 = scmp.ne.s32.totalorder %s249, %s250
      %p259 = scmp.eq.s32.totalorder %s71, 0
      %p260 = por %p258, %p259
      %p261 = scmp.ne.s32.totalorder %s249, %s250
      %p262 = scmp.eq.s32.totalorder %s72, 1
      %p263 = por %p261, %p262
      %p265 = scmp.ne.s32.totalorder %s250, %s264
      %p266 = scmp.eq.s32.totalorder %s72, 0
      %p267 = por %p265, %p266
      %s269 = sadd.s32 %s268, 1
      %p272 = scmp.eq.s32.totalorder %s66, 1
      %p273 = scmp.ne.s32.totalorder %s268, %s270
      %p274 = scmp.eq.s32.totalorder %s66, 0
      %p275 = por %p273, %p274
      %p276 = scmp.ne.s32.totalorder %s268, %s270
      %p277 = scmp.eq.s32.totalorder %s71, 1
      %p278 = por %p276, %p277
      %p279 = scmp.ne.s32.totalorder %s270, %s271
      %p280 = scmp.eq.s32.totalorder %s71, 0
      %p281 = por %p279, %p280
      %p282 = scmp.ne.s32.totalorder %s270, %s271
      %p283 = scmp.eq.s32.totalorder %s72, 1
      %p284 = por %p282, %p283
      %p286 = scmp.ne.s32.totalorder %s271, %s285
      %p287 = scmp.eq.s32.totalorder %s72, 0
      %p288 = por %p286, %p287
      %s290 = sadd.s32 %s289, 1
      %p293 = scmp.eq.s32.totalorder %s66, 1
      %p294 = scmp.ne.s32.totalorder %s289, %s291
      %p295 = scmp.eq.s32.totalorder %s66, 0
      %p296 = por %p294, %p295
      %p297 = scmp.ne.s32.totalorder %s289, %s291
      %p298 = scmp.eq.s32.totalorder %s71, 1
      %p299 = por %p297, %p298
      %p300 = scmp.ne.s32.totalorder %s291, %s292
      %p301 = scmp.eq.s32.totalorder %s71, 0
      %p302 = por %p300, %p301
      %p303 = scmp.ne.s32.totalorder %s291, %s292
      %p304 = scmp.eq.s32.totalorder %s72, 1
      %p305 = por %p303, %p304
      %p307 = scmp.ne.s32.totalorder %s292, %s306
      %p308 = scmp.eq.s32.totalorder %s72, 0
      %p309 = por %p307, %p308
      %s311 = sadd.s32 %s310, 1
      %p314 = scmp.eq.s32.totalorder %s66, 1
      %p315 = scmp.ne.s32.totalorder %s310, %s312
      %p316 = scmp.eq.s32.totalorder %s66, 0
      %p317 = por %p315, %p316
      %p318 = scmp.ne.s32.totalorder %s310, %s312
      %p319 = scmp.eq.s32.totalorder %s71, 1
      %p320 = por %p318, %p319
      %p321 = scmp.ne.s32.totalorder %s312, %s313
      %p322 = scmp.eq.s32.totalorder %s71, 0
      %p323 = por %p321, %p322
      %p324 = scmp.ne.s32.totalorder %s312, %s313
      %p325 = scmp.eq.s32.totalorder %s72, 1
      %p326 = por %p324, %p325
      %p328 = scmp.ne.s32.totalorder %s313, %s327
      %p329 = scmp.eq.s32.totalorder %s72, 0
      %p330 = por %p328, %p329
      %s332 = sadd.s32 %s331, 1
      %p335 = scmp.eq.s32.totalorder %s66, 1
      %p336 = scmp.ne.s32.totalorder %s331, %s333
      %p337 = scmp.eq.s32.totalorder %s66, 0
      %p338 = por %p336, %p337
      %p339 = scmp.ne.s32.totalorder %s331, %s333
      %p340 = scmp.eq.s32.totalorder %s71, 1
      %p341 = por %p339, %p340
      %p342 = scmp.ne.s32.totalorder %s333, %s334
      %p343 = scmp.eq.s32.totalorder %s71, 0
      %p344 = por %p342, %p343
      %p345 = scmp.ne.s32.totalorder %s333, %s334
      %p346 = scmp.eq.s32.totalorder %s72, 1
      %p347 = por %p345, %p346
      %p349 = scmp.ne.s32.totalorder %s334, %s348
      %p350 = scmp.eq.s32.totalorder %s72, 0
      %p351 = por %p349, %p350
      %s353 = sadd.s32 %s352, 1
      %p356 = scmp.eq.s32.totalorder %s66, 1
      %p357 = scmp.ne.s32.totalorder %s352, %s354
      %p358 = scmp.eq.s32.totalorder %s66, 0
      %p359 = por %p357, %p358
      %p360 = scmp.ne.s32.totalorder %s352, %s354
      %p361 = scmp.eq.s32.totalorder %s71, 1
      %p362 = por %p360, %p361
      %p363 = scmp.ne.s32.totalorder %s354, %s355
      %p364 = scmp.eq.s32.totalorder %s71, 0
      %p365 = por %p363, %p364
      %p366 = scmp.ne.s32.totalorder %s354, %s355
      %p367 = scmp.eq.s32.totalorder %s72, 1
      %p368 = por %p366, %p367
      %p370 = scmp.ne.s32.totalorder %s355, %s369
      %p371 = scmp.eq.s32.totalorder %s72, 0
      %p372 = por %p370, %p371
      %s374 = sadd.s32 %s373, 1
      %p377 = scmp.eq.s32.totalorder %s66, 1
      %p378 = scmp.ne.s32.totalorder %s373, %s375
      %p379 = scmp.eq.s32.totalorder %s66, 0
      %p380 = por %p378, %p379
      %p381 = scmp.ne.s32.totalorder %s373, %s375
      %p382 = scmp.eq.s32.totalorder %s71, 1
      %p383 = por %p381, %p382
      %p384 = scmp.ne.s32.totalorder %s375, %s376
      %p385 = scmp.eq.s32.totalorder %s71, 0
      %p386 = por %p384, %p385
      %p387 = scmp.ne.s32.totalorder %s375, %s376
      %p388 = scmp.eq.s32.totalorder %s72, 1
      %p389 = por %p387, %p388
      %p391 = scmp.ne.s32.totalorder %s376, %s390
      %p392 = scmp.eq.s32.totalorder %s72, 0
      %p393 = por %p391, %p392
      %s395 = sadd.s32 %s394, 1
      %p398 = scmp.eq.s32.totalorder %s66, 1
      %p399 = scmp.ne.s32.totalorder %s394, %s396
      %p400 = scmp.eq.s32.totalorder %s66, 0
      %p401 = por %p399, %p400
      %p402 = scmp.ne.s32.totalorder %s394, %s396
      %p403 = scmp.eq.s32.totalorder %s71, 1
      %p404 = por %p402, %p403
      %p405 = scmp.ne.s32.totalorder %s396, %s397
      %p406 = scmp.eq.s32.totalorder %s71, 0
      %p407 = por %p405, %p406
      %p408 = scmp.ne.s32.totalorder %s396, %s397
      %p409 = scmp.eq.s32.totalorder %s72, 1
      %p410 = por %p408, %p409
      %p412 = scmp.ne.s32.totalorder %s397, %s411
      %p413 = scmp.eq.s32.totalorder %s72, 0
      %p414 = por %p412, %p413
      %s416 = sadd.s32 %s415, 1
      %p419 = scmp.eq.s32.totalorder %s66, 1
      %p420 = scmp.ne.s32.totalorder %s415, %s417
      %p421 = scmp.eq.s32.totalorder %s66, 0
      %p422 = por %p420, %p421
      %p423 = scmp.ne.s32.totalorder %s415, %s417
      %p424 = scmp.eq.s32.totalorder %s71, 1
      %p425 = por %p423, %p424
      %p426 = scmp.ne.s32.totalorder %s417, %s418
      %p427 = scmp.eq.s32.totalorder %s71, 0
      %p428 = por %p426, %p427
      %p429 = scmp.ne.s32.totalorder %s417, %s418
      %p430 = scmp.eq.s32.totalorder %s72, 1
      %p431 = por %p429, %p430
      %p433 = scmp.ne.s32.totalorder %s418, %s432
      %p434 = scmp.eq.s32.totalorder %s72, 0
      %p435 = por %p433, %p434
      %s437 = sadd.s32 %s436, 1
      %p440 = scmp.eq.s32.totalorder %s66, 1
      %p441 = scmp.ne.s32.totalorder %s436, %s438
      %p442 = scmp.eq.s32.totalorder %s66, 0
      %p443 = por %p441, %p442
      %p444 = scmp.ne.s32.totalorder %s436, %s438
      %p445 = scmp.eq.s32.totalorder %s71, 1
      %p446 = por %p444, %p445
      %p447 = scmp.ne.s32.totalorder %s438, %s439
      %p448 = scmp.eq.s32.totalorder %s71, 0
      %p449 = por %p447, %p448
      %p450 = scmp.ne.s32.totalorder %s438, %s439
      %p451 = scmp.eq.s32.totalorder %s72, 1
      %p452 = por %p450, %p451
      %p454 = scmp.ne.s32.totalorder %s439, %s453
      %p455 = scmp.eq.s32.totalorder %s72, 0
      %p456 = por %p454, %p455
      %s458 = sadd.s32 %s457, 1
      %p461 = scmp.eq.s32.totalorder %s66, 1
      %p462 = scmp.ne.s32.totalorder %s457, %s459
      %p463 = scmp.eq.s32.totalorder %s66, 0
      %p464 = por %p462, %p463
      %p465 = scmp.ne.s32.totalorder %s457, %s459
      %p466 = scmp.eq.s32.totalorder %s71, 1
      %p467 = por %p465, %p466
      %p468 = scmp.ne.s32.totalorder %s459, %s460
      %p469 = scmp.eq.s32.totalorder %s71, 0
      %p470 = por %p468, %p469
      %p471 = scmp.ne.s32.totalorder %s459, %s460
      %p472 = scmp.eq.s32.totalorder %s72, 1
      %p473 = por %p471, %p472
      %p475 = scmp.ne.s32.totalorder %s460, %s474
      %p476 = scmp.eq.s32.totalorder %s72, 0
      %p477 = por %p475, %p476
      %s479 = sadd.s32 %s478, 1
      %p482 = scmp.eq.s32.totalorder %s66, 1
      %p483 = scmp.ne.s32.totalorder %s478, %s480
      %p484 = scmp.eq.s32.totalorder %s66, 0
      %p485 = por %p483, %p484
      %p486 = scmp.ne.s32.totalorder %s478, %s480
      %p487 = scmp.eq.s32.totalorder %s71, 1
      %p488 = por %p486, %p487
      %p489 = scmp.ne.s32.totalorder %s480, %s481
      %p490 = scmp.eq.s32.totalorder %s71, 0
      %p491 = por %p489, %p490
      %p492 = scmp.ne.s32.totalorder %s480, %s481
      %p493 = scmp.eq.s32.totalorder %s72, 1
      %p494 = por %p492, %p493
      %p496 = scmp.ne.s32.totalorder %s481, %s495
      %p497 = scmp.eq.s32.totalorder %s72, 0
      %p498 = por %p496, %p497
      %s500 = sadd.s32 %s499, 1
      %p503 = scmp.eq.s32.totalorder %s66, 1
      %p504 = scmp.ne.s32.totalorder %s499, %s501
      %p505 = scmp.eq.s32.totalorder %s66, 0
      %p506 = por %p504, %p505
      %p507 = scmp.ne.s32.totalorder %s499, %s501
      %p508 = scmp.eq.s32.totalorder %s71, 1
      %p509 = por %p507, %p508
      %p510 = scmp.ne.s32.totalorder %s501, %s502
      %p511 = scmp.eq.s32.totalorder %s71, 0
      %p512 = por %p510, %p511
      %p513 = scmp.ne.s32.totalorder %s501, %s502
      %p514 = scmp.eq.s32.totalorder %s72, 1
      %p515 = por %p513, %p514
      %p517 = scmp.ne.s32.totalorder %s502, %s516
      %p518 = scmp.eq.s32.totalorder %s72, 0
      %p519 = por %p517, %p518
      %s521 = sadd.s32 %s520, 1
      %p524 = scmp.eq.s32.totalorder %s66, 1
      %p525 = scmp.ne.s32.totalorder %s520, %s522
      %p526 = scmp.eq.s32.totalorder %s66, 0
      %p527 = por %p525, %p526
      %p528 = scmp.ne.s32.totalorder %s520, %s522
      %p529 = scmp.eq.s32.totalorder %s71, 1
      %p530 = por %p528, %p529
      %p531 = scmp.ne.s32.totalorder %s522, %s523
      %p532 = scmp.eq.s32.totalorder %s71, 0
      %p533 = por %p531, %p532
      %p534 = scmp.ne.s32.totalorder %s522, %s523
      %p535 = scmp.eq.s32.totalorder %s72, 1
      %p536 = por %p534, %p535
      %p538 = scmp.ne.s32.totalorder %s523, %s537
      %p539 = scmp.eq.s32.totalorder %s72, 0
      %p540 = por %p538, %p539
      %s542 = sadd.s32 %s541, 1
      %p545 = scmp.eq.s32.totalorder %s66, 1
      %p546 = scmp.ne.s32.totalorder %s541, %s543
      %p547 = scmp.eq.s32.totalorder %s66, 0
      %p548 = por %p546, %p547
      %p549 = scmp.ne.s32.totalorder %s541, %s543
      %p550 = scmp.eq.s32.totalorder %s71, 1
      %p551 = por %p549, %p550
      %p552 = scmp.ne.s32.totalorder %s543, %s544
      %p553 = scmp.eq.s32.totalorder %s71, 0
      %p554 = por %p552, %p553
      %p555 = scmp.ne.s32.totalorder %s543, %s544
      %p556 = scmp.eq.s32.totalorder %s72, 1
      %p557 = por %p555, %p556
      %p559 = scmp.ne.s32.totalorder %s544, %s558
      %p560 = scmp.eq.s32.totalorder %s72, 0
      %p561 = por %p559, %p560
      %s563 = sadd.s32 %s562, 1
      %p566 = scmp.eq.s32.totalorder %s66, 1
      %p567 = scmp.ne.s32.totalorder %s562, %s564
      %p568 = scmp.eq.s32.totalorder %s66, 0
      %p569 = por %p567, %p568
      %p570 = scmp.ne.s32.totalorder %s562, %s564
      %p571 = scmp.eq.s32.totalorder %s71, 1
      %p572 = por %p570, %p571
      %p573 = scmp.ne.s32.totalorder %s564, %s565
      %p574 = scmp.eq.s32.totalorder %s71, 0
      %p575 = por %p573, %p574
      %p576 = scmp.ne.s32.totalorder %s564, %s565
      %p577 = scmp.eq.s32.totalorder %s72, 1
      %p578 = por %p576, %p577
      %p580 = scmp.ne.s32.totalorder %s565, %s579
      %p581 = scmp.eq.s32.totalorder %s72, 0
      %p582 = por %p580, %p581
      %s584 = sadd.s32 %s583, 1
      %p587 = scmp.eq.s32.totalorder %s66, 1
      %p588 = scmp.ne.s32.totalorder %s583, %s585
      %p589 = scmp.eq.s32.totalorder %s66, 0
      %p590 = por %p588, %p589
      %p591 = scmp.ne.s32.totalorder %s583, %s585
      %p592 = scmp.eq.s32.totalorder %s71, 1
      %p593 = por %p591, %p592
      %p594 = scmp.ne.s32.totalorder %s585, %s586
      %p595 = scmp.eq.s32.totalorder %s71, 0
      %p596 = por %p594, %p595
      %p597 = scmp.ne.s32.totalorder %s585, %s586
      %p598 = scmp.eq.s32.totalorder %s72, 1
      %p599 = por %p597, %p598
      %p601 = scmp.ne.s32.totalorder %s586, %s600
      %p602 = scmp.eq.s32.totalorder %s72, 0
      %p603 = por %p601, %p602
      %s605 = sadd.s32 %s604, 1
      %p608 = scmp.eq.s32.totalorder %s66, 1
      %p609 = scmp.ne.s32.totalorder %s604, %s606
      %p610 = scmp.eq.s32.totalorder %s66, 0
      %p611 = por %p609, %p610
      %p612 = scmp.ne.s32.totalorder %s604, %s606
      %p613 = scmp.eq.s32.totalorder %s71, 1
      %p614 = por %p612, %p613
      %p615 = scmp.ne.s32.totalorder %s606, %s607
      %p616 = scmp.eq.s32.totalorder %s71, 0
      %p617 = por %p615, %p616
      %p618 = scmp.ne.s32.totalorder %s606, %s607
      %p619 = scmp.eq.s32.totalorder %s72, 1
      %p620 = por %p618, %p619
      %p622 = scmp.ne.s32.totalorder %s607, %s621
      %p623 = scmp.eq.s32.totalorder %s72, 0
      %p624 = por %p622, %p623
      %s626 = sadd.s32 %s625, 1
      %p629 = scmp.eq.s32.totalorder %s66, 1
      %p630 = scmp.ne.s32.totalorder %s625, %s627
      %p631 = scmp.eq.s32.totalorder %s66, 0
      %p632 = por %p630, %p631
      %p633 = scmp.ne.s32.totalorder %s625, %s627
      %p634 = scmp.eq.s32.totalorder %s71, 1
      %p635 = por %p633, %p634
      %p636 = scmp.ne.s32.totalorder %s627, %s628
      %p637 = scmp.eq.s32.totalorder %s71, 0
      %p638 = por %p636, %p637
      %p639 = scmp.ne.s32.totalorder %s627, %s628
      %p640 = scmp.eq.s32.totalorder %s72, 1
      %p641 = por %p639, %p640
      %p643 = scmp.ne.s32.totalorder %s628, %s642
      %p644 = scmp.eq.s32.totalorder %s72, 0
      %p645 = por %p643, %p644
      %s647 = sadd.s32 %s646, 1
      %p650 = scmp.eq.s32.totalorder %s66, 1
      %p651 = scmp.ne.s32.totalorder %s646, %s648
      %p652 = scmp.eq.s32.totalorder %s66, 0
      %p653 = por %p651, %p652
      %p654 = scmp.ne.s32.totalorder %s646, %s648
      %p655 = scmp.eq.s32.totalorder %s71, 1
      %p656 = por %p654, %p655
      %p657 = scmp.ne.s32.totalorder %s648, %s649
      %p658 = scmp.eq.s32.totalorder %s71, 0
      %p659 = por %p657, %p658
      %p660 = scmp.ne.s32.totalorder %s648, %s649
      %p661 = scmp.eq.s32.totalorder %s72, 1
      %p662 = por %p660, %p661
      %p664 = scmp.ne.s32.totalorder %s649, %s663
      %p665 = scmp.eq.s32.totalorder %s72, 0
      %p666 = por %p664, %p665
      %s668 = sadd.s32 %s667, 1
      %p671 = scmp.eq.s32.totalorder %s66, 1
      %p672 = scmp.ne.s32.totalorder %s667, %s669
      %p673 = scmp.eq.s32.totalorder %s66, 0
      %p674 = por %p672, %p673
      %p675 = scmp.ne.s32.totalorder %s667, %s669
      %p676 = scmp.eq.s32.totalorder %s71, 1
      %p677 = por %p675, %p676
      %p678 = scmp.ne.s32.totalorder %s669, %s670
      %p679 = scmp.eq.s32.totalorder %s71, 0
      %p680 = por %p678, %p679
      %p681 = scmp.ne.s32.totalorder %s669, %s670
      %p682 = scmp.eq.s32.totalorder %s72, 1
      %p683 = por %p681, %p682
      %p685 = scmp.ne.s32.totalorder %s670, %s684
      %p686 = scmp.eq.s32.totalorder %s72, 0
      %p687 = por %p685, %p686
      %s688 = ssub.s32 %s66, %s73
      %p689 = scmp.eq.s32.totalorder %s688, 0
      %s691 = sadd.s32 %s690, 1
      %s692 = scalar_select %p689, %s690, %s691
      %p695 = pneg %p689
      %p696 = scmp.eq.s32.totalorder %s66, 1
      %p697 = por %p695, %p696
      %p698 = scmp.ne.s32.totalorder %s690, %s693
      %p699 = scmp.eq.s32.totalorder %s66, 0
      %p700 = por %p698, %p699
      %p701 = scmp.ne.s32.totalorder %s690, %s693
      %p702 = scmp.eq.s32.totalorder %s71, 1
      %p703 = por %p701, %p702
      %p704 = scmp.ne.s32.totalorder %s693, %s694
      %p705 = scmp.eq.s32.totalorder %s71, 0
      %p706 = por %p704, %p705
      %p707 = scmp.ne.s32.totalorder %s693, %s694
      %p708 = scmp.eq.s32.totalorder %s72, 1
      %p709 = por %p707, %p708
      %p711 = scmp.ne.s32.totalorder %s694, %s710
      %p712 = scmp.eq.s32.totalorder %s72, 0
      %p713 = por %p711, %p712
      %p714 = scmp.le.s32.totalorder 1, %s66
      %p715 = scmp.lt.s32.totalorder %s66, 3
      %p716 = pnand %p714, %p715
      %p717 = pneg %p716
      // Predicated region
      $region9: #{model_forward.1} parent=5 // pred_check
        _
      $region10: #{model_forward.1} parent=5 // pred_check_branch
        %719 = sbr.rel (%p716) target = $region12
      $region11: #{model_forward.1} parent=5 // pred_region
        %s720 = ssub.s32 %s66, 1
        // Predicated region
        $region13: #{model_forward.1} parent=11 // pred_check
          %p721 = pneg %p113
        $region14: #{model_forward.1} parent=11 // pred_check_branch
          %723 = sbr.rel (%p721) target = $region16
        $region15: #{model_forward.1} parent=11 // pred_region
          _
        $region16: #{model_forward.1} parent=11 // pred_fallthru
          _
        // Predicated region
        $region17: #{model_forward.1} parent=11 // pred_check
          %p724 = pneg %p134
        $region18: #{model_forward.1} parent=11 // pred_check_branch
          %726 = sbr.rel (%p724) target = $region20
        $region19: #{model_forward.1} parent=11 // pred_region
          _
        $region20: #{model_forward.1} parent=11 // pred_fallthru
          _
        // Predicated region
        $region21: #{model_forward.1} parent=11 // pred_check
          %p727 = pneg %p155
        $region22: #{model_forward.1} parent=11 // pred_check_branch
          %729 = sbr.rel (%p727) target = $region24
        $region23: #{model_forward.1} parent=11 // pred_region
          _
        $region24: #{model_forward.1} parent=11 // pred_fallthru
          _
        // Predicated region
        $region25: #{model_forward.1} parent=11 // pred_check
          %p730 = pneg %p176
        $region26: #{model_forward.1} parent=11 // pred_check_branch
          %732 = sbr.rel (%p730) target = $region28
        $region27: #{model_forward.1} parent=11 // pred_region
          _
        $region28: #{model_forward.1} parent=11 // pred_fallthru
          _
        // Predicated region
        $region29: #{model_forward.1} parent=11 // pred_check
          %p733 = pneg %p197
        $region30: #{model_forward.1} parent=11 // pred_check_branch
          %735 = sbr.rel (%p733) target = $region32
        $region31: #{model_forward.1} parent=11 // pred_region
          _
        $region32: #{model_forward.1} parent=11 // pred_fallthru
          _
        // Predicated region
        $region33: #{model_forward.1} parent=11 // pred_check
          %p736 = pneg %p218
        $region34: #{model_forward.1} parent=11 // pred_check_branch
          %738 = sbr.rel (%p736) target = $region36
        $region35: #{model_forward.1} parent=11 // pred_region
          _
        $region36: #{model_forward.1} parent=11 // pred_fallthru
          _
        // Predicated region
        $region37: #{model_forward.1} parent=11 // pred_check
          %p739 = pneg %p239
        $region38: #{model_forward.1} parent=11 // pred_check_branch
          %741 = sbr.rel (%p739) target = $region40
        $region39: #{model_forward.1} parent=11 // pred_region
          _
        $region40: #{model_forward.1} parent=11 // pred_fallthru
          _
        // Predicated region
        $region41: #{model_forward.1} parent=11 // pred_check
          %p742 = pneg %p260
        $region42: #{model_forward.1} parent=11 // pred_check_branch
          %744 = sbr.rel (%p742) target = $region44
        $region43: #{model_forward.1} parent=11 // pred_region
          _
        $region44: #{model_forward.1} parent=11 // pred_fallthru
          _
        // Predicated region
        $region45: #{model_forward.1} parent=11 // pred_check
          %p745 = pneg %p281
        $region46: #{model_forward.1} parent=11 // pred_check_branch
          %747 = sbr.rel (%p745) target = $region48
        $region47: #{model_forward.1} parent=11 // pred_region
          _
        $region48: #{model_forward.1} parent=11 // pred_fallthru
          _
        // Predicated region
        $region49: #{model_forward.1} parent=11 // pred_check
          %p748 = pneg %p302
        $region50: #{model_forward.1} parent=11 // pred_check_branch
          %750 = sbr.rel (%p748) target = $region52
        $region51: #{model_forward.1} parent=11 // pred_region
          _
        $region52: #{model_forward.1} parent=11 // pred_fallthru
          _
        // Predicated region
        $region53: #{model_forward.1} parent=11 // pred_check
          %p751 = pneg %p323
        $region54: #{model_forward.1} parent=11 // pred_check_branch
          %753 = sbr.rel (%p751) target = $region56
        $region55: #{model_forward.1} parent=11 // pred_region
          _
        $region56: #{model_forward.1} parent=11 // pred_fallthru
          _
        // Predicated region
        $region57: #{model_forward.1} parent=11 // pred_check
          %p754 = pneg %p344
        $region58: #{model_forward.1} parent=11 // pred_check_branch
          %756 = sbr.rel (%p754) target = $region60
        $region59: #{model_forward.1} parent=11 // pred_region
          _
        $region60: #{model_forward.1} parent=11 // pred_fallthru
          _
        // Predicated region
        $region61: #{model_forward.1} parent=11 // pred_check
          %p757 = pneg %p365
        $region62: #{model_forward.1} parent=11 // pred_check_branch
          %759 = sbr.rel (%p757) target = $region64
        $region63: #{model_forward.1} parent=11 // pred_region
          _
        $region64: #{model_forward.1} parent=11 // pred_fallthru
          _
        // Predicated region
        $region65: #{model_forward.1} parent=11 // pred_check
          %p760 = pneg %p386
        $region66: #{model_forward.1} parent=11 // pred_check_branch
          %762 = sbr.rel (%p760) target = $region68
        $region67: #{model_forward.1} parent=11 // pred_region
          _
        $region68: #{model_forward.1} parent=11 // pred_fallthru
          _
        // Predicated region
        $region69: #{model_forward.1} parent=11 // pred_check
          %p763 = pneg %p407
        $region70: #{model_forward.1} parent=11 // pred_check_branch
          %765 = sbr.rel (%p763) target = $region72
        $region71: #{model_forward.1} parent=11 // pred_region
          _
        $region72: #{model_forward.1} parent=11 // pred_fallthru
          _
        // Predicated region
        $region73: #{model_forward.1} parent=11 // pred_check
          %p766 = pneg %p428
        $region74: #{model_forward.1} parent=11 // pred_check_branch
          %768 = sbr.rel (%p766) target = $region76
        $region75: #{model_forward.1} parent=11 // pred_region
          _
        $region76: #{model_forward.1} parent=11 // pred_fallthru
          _
        // Predicated region
        $region77: #{model_forward.1} parent=11 // pred_check
          %p769 = pneg %p449
        $region78: #{model_forward.1} parent=11 // pred_check_branch
          %771 = sbr.rel (%p769) target = $region80
        $region79: #{model_forward.1} parent=11 // pred_region
          %773 = vsyncadd [#allocation3], 0
          %s774 = sshll.u32 %s35, 4
          %s775 = int_to_ptr.hbm [resolvable:$true] %s774
          %s776 = sshll.u32 [#allocation2], 4
          %s777 = int_to_ptr.vmem [resolvable:$true] %s776
          %782 = dma.hbm_to_vmem [thread:$0]  %s775, 30720, %s777, [#allocation3], 256, 256, 16
        $region80: #{model_forward.1} parent=11 // pred_fallthru
          _
        // Predicated region
        $region81: #{model_forward.1} parent=11 // pred_check
          %p783 = pneg %p470
        $region82: #{model_forward.1} parent=11 // pred_check_branch
          %785 = sbr.rel (%p783) target = $region84
        $region83: #{model_forward.1} parent=11 // pred_region
          _
        $region84: #{model_forward.1} parent=11 // pred_fallthru
          _
        // Predicated region
        $region85: #{model_forward.1} parent=11 // pred_check
          %p786 = pneg %p491
        $region86: #{model_forward.1} parent=11 // pred_check_branch
          %788 = sbr.rel (%p786) target = $region88
        $region87: #{model_forward.1} parent=11 // pred_region
          _
        $region88: #{model_forward.1} parent=11 // pred_fallthru
          _
        // Predicated region
        $region89: #{model_forward.1} parent=11 // pred_check
          %p789 = pneg %p512
        $region90: #{model_forward.1} parent=11 // pred_check_branch
          %791 = sbr.rel (%p789) target = $region92
        $region91: #{model_forward.1} parent=11 // pred_region
          _
        $region92: #{model_forward.1} parent=11 // pred_fallthru
          _
        // Predicated region
        $region93: #{model_forward.1} parent=11 // pred_check
          %p792 = pneg %p533
        $region94: #{model_forward.1} parent=11 // pred_check_branch
          %794 = sbr.rel (%p792) target = $region96
        $region95: #{model_forward.1} parent=11 // pred_region
          _
        $region96: #{model_forward.1} parent=11 // pred_fallthru
          _
        // Predicated region
        $region97: #{model_forward.1} parent=11 // pred_check
          %p795 = pneg %p554
        $region98: #{model_forward.1} parent=11 // pred_check_branch
          %797 = sbr.rel (%p795) target = $region100
        $region99: #{model_forward.1} parent=11 // pred_region
          _
        $region100: #{model_forward.1} parent=11 // pred_fallthru
          _
        // Predicated region
        $region101: #{model_forward.1} parent=11 // pred_check
          %p798 = pneg %p575
        $region102: #{model_forward.1} parent=11 // pred_check_branch
          %800 = sbr.rel (%p798) target = $region104
        $region103: #{model_forward.1} parent=11 // pred_region
          _
        $region104: #{model_forward.1} parent=11 // pred_fallthru
          _
        // Predicated region
        $region105: #{model_forward.1} parent=11 // pred_check
          %p801 = pneg %p596
        $region106: #{model_forward.1} parent=11 // pred_check_branch
          %803 = sbr.rel (%p801) target = $region108
        $region107: #{model_forward.1} parent=11 // pred_region
          _
        $region108: #{model_forward.1} parent=11 // pred_fallthru
          _
        // Predicated region
        $region109: #{model_forward.1} parent=11 // pred_check
          %p804 = pneg %p617
        $region110: #{model_forward.1} parent=11 // pred_check_branch
          %806 = sbr.rel (%p804) target = $region112
        $region111: #{model_forward.1} parent=11 // pred_region
          _
        $region112: #{model_forward.1} parent=11 // pred_fallthru
          _
        // Predicated region
        $region113: #{model_forward.1} parent=11 // pred_check
          %p807 = pneg %p638
        $region114: #{model_forward.1} parent=11 // pred_check_branch
          %809 = sbr.rel (%p807) target = $region116
        $region115: #{model_forward.1} parent=11 // pred_region
          _
        $region116: #{model_forward.1} parent=11 // pred_fallthru
          _
        // Predicated region
        $region117: #{model_forward.1} parent=11 // pred_check
          %p810 = pneg %p659
        $region118: #{model_forward.1} parent=11 // pred_check_branch
          %812 = sbr.rel (%p810) target = $region120
        $region119: #{model_forward.1} parent=11 // pred_region
          _
        $region120: #{model_forward.1} parent=11 // pred_fallthru
          _
        // Predicated region
        $region121: #{model_forward.1} parent=11 // pred_check
          %p813 = pneg %p680
        $region122: #{model_forward.1} parent=11 // pred_check_branch
          %815 = sbr.rel (%p813) target = $region124
        $region123: #{model_forward.1} parent=11 // pred_region
          _
        $region124: #{model_forward.1} parent=11 // pred_fallthru
          _
      $region12: #{model_forward.1} parent=5 // pred_fallthru
        _
      %p816 = scmp.lt.s32.totalorder %s66, 2
      // Predicated region
      $region125: #{model_forward.1} parent=5 // pred_check
        %p817 = pneg %p816
      $region126: #{model_forward.1} parent=5 // pred_check_branch
        %819 = sbr.rel (%p817) target = $region128
      $region127: #{model_forward.1} parent=5 // pred_region
        // Predicated region
        $region129: #{model_forward.1} parent=127 // pred_check
          %p820 = pneg %p86
        $region130: #{model_forward.1} parent=127 // pred_check_branch
          %822 = sbr.rel (%p820) target = $region132
        $region131: #{model_forward.1} parent=127 // pred_region
          %p823 = scmp.lt.s32.totalorder %s66, 1
          %s824 = scalar_select %p823, %s66, 1
          %s825 = smul.addr %s824, 8
          %s826 = scalar_lea.vmem %s1, %s825
        $region132: #{model_forward.1} parent=127 // pred_fallthru
          _
      $region128: #{model_forward.1} parent=5 // pred_fallthru
        _
      %p827 = scmp.le.s32.totalorder 1, %s66
      %p828 = scmp.lt.s32.totalorder %s66, 3
      %p829 = pnand %p827, %p828
      %p830 = pneg %p829
      // Predicated region
      $region133: #{model_forward.1} parent=5 // pred_check
        _
      $region134: #{model_forward.1} parent=5 // pred_check_branch
        %832 = sbr.rel (%p829) target = $region136
      $region135: #{model_forward.1} parent=5 // pred_region
        %s833 = ssub.s32 %s66, 1
        // Predicated region
        $region137: #{model_forward.1} parent=135 // pred_check
          %p834 = pneg %p449
        $region138: #{model_forward.1} parent=135 // pred_check_branch
          %836 = sbr.rel (%p834) target = $region140
        $region139: #{model_forward.1} parent=135 // pred_region
          %838 = dma.done [#allocation3], 30720
        $region140: #{model_forward.1} parent=135 // pred_fallthru
          _
        %p839 = scmp.lt.s32.totalorder %s71, 1
        %s840 = scalar_select %p839, %s71, 1
        %s841 = smul.addr %s840, 8
        %s842 = scalar_lea.vmem %s1, %s841
        %p843 = pneg %p92
        %p844 = pneg %p89
        %p845 = pneg %p113
        %p846 = pneg %p110
        %p847 = pneg %p134
        %p848 = pneg %p131
        %p849 = pneg %p155
        %p850 = pneg %p152
        %p851 = pneg %p176
        %p852 = pneg %p173
        %p853 = pneg %p197
        %p854 = pneg %p194
        %p855 = pneg %p218
        %p856 = pneg %p215
        %p857 = pneg %p239
        %p858 = pneg %p236
        %p859 = pneg %p260
        %p860 = pneg %p257
        %p861 = pneg %p281
        %p862 = pneg %p278
        %p863 = pneg %p302
        %p864 = pneg %p299
        %p865 = pneg %p323
        %p866 = pneg %p320
        %p867 = pneg %p344
        %p868 = pneg %p341
        %p869 = pneg %p365
        %p870 = pneg %p362
        %p871 = pneg %p386
        %p872 = pneg %p383
        %p873 = pneg %p407
        %p874 = pneg %p404
        %p875 = pneg %p428
        %p876 = pneg %p425
        %p877 = pneg %p449
        %p878 = pneg %p446
        %p879 = pneg %p470
        %p880 = pneg %p467
        %p881 = pneg %p491
        %p882 = pneg %p488
        %p883 = pneg %p512
        %p884 = pneg %p509
        %p885 = pneg %p533
        %p886 = pneg %p530
        %p887 = pneg %p554
        %p888 = pneg %p551
        %p889 = pneg %p575
        %p890 = pneg %p572
        %p891 = pneg %p596
        %p892 = pneg %p593
        %p893 = pneg %p617
        %p894 = pneg %p614
        %p895 = pneg %p638
        %p896 = pneg %p635
        %p897 = pneg %p659
        %p898 = pneg %p656
        %p899 = pneg %p680
        %p900 = pneg %p677
        %p901 = pneg %p706
        %p902 = pneg %p703
        %p903 = scmp.lt.s32.totalorder %s71, 1
        %s904 = scalar_select %p903, %s71, 1
        %s905 = smul.addr %s904, 8
        %s906 = scalar_lea.vmem %s59, %s905
        %p907 = scmp.lt.s32.totalorder %s71, 1
        %s908 = scalar_select %p907, %s71, 1
        %s909 = smul.addr %s908, 8
        %s910 = scalar_lea.vmem %s1, %s909
        %p911 = scmp.lt.s32.totalorder %s71, 1
        %s912 = scalar_select %p911, %s71, 1
        %s913 = smul.addr %s912, 8
        %s914 = scalar_lea.vmem %s59, %s913
        %v915 = vld [vmem:[%s910] sm:$0xff]
        %v916 = vlaneseq
        %v917 = vshrl.u32 %v916, 7
        %v918 = vadd.s32 %v917, 8
        %v919 = vadd.s32 %v917, 16
        %v920 = vadd.s32 %v917, 24
        %v921 = vadd.s32 %v917, 32
        %v922 = vadd.s32 %v917, 40
        %v923 = vadd.s32 %v917, 48
        %v924 = vadd.s32 %v917, 56
        %v925 = vadd.s32 %v917, 64
        %v926 = vadd.s32 %v917, 72
        %v927 = vadd.s32 %v917, 80
        %v928 = vadd.s32 %v917, 88
        %v929 = vadd.s32 %v917, 96
        %v930 = vadd.s32 %v917, 104
        %v931 = vadd.s32 %v917, 112
        %v932 = vadd.s32 %v917, 120
        %v933 = vadd.s32 %v917, 128
        %v934 = vadd.s32 %v917, 136
        %v935 = vadd.s32 %v917, 144
        %v936 = vadd.s32 %v917, 152
        %v937 = vlaneseq
        %v938 = vand.u32 %v937, 127
        %v939 = vmul.u32 %v938, 16
        %vm940 = vcmp.ge.s32.totalorder %v917, %v939
        %vm941 = vcmp.ge.s32.totalorder %v918, %v939
        %vm942 = vcmp.ge.s32.totalorder %v919, %v939
        %vm943 = vcmp.ge.s32.totalorder %v920, %v939
        %vm944 = vcmp.ge.s32.totalorder %v921, %v939
        %vm945 = vcmp.ge.s32.totalorder %v922, %v939
        %vm946 = vcmp.ge.s32.totalorder %v923, %v939
        %vm947 = vcmp.ge.s32.totalorder %v924, %v939
        %vm948 = vcmp.ge.s32.totalorder %v925, %v939
        %vm949 = vcmp.ge.s32.totalorder %v926, %v939
        %vm950 = vcmp.ge.s32.totalorder %v927, %v939
        %vm951 = vcmp.ge.s32.totalorder %v928, %v939
        %vm952 = vcmp.ge.s32.totalorder %v929, %v939
        %vm953 = vcmp.ge.s32.totalorder %v930, %v939
        %vm954 = vcmp.ge.s32.totalorder %v931, %v939
        %vm955 = vcmp.ge.s32.totalorder %v932, %v939
        %vm956 = vcmp.ge.s32.totalorder %v933, %v939
        %vm957 = vcmp.ge.s32.totalorder %v934, %v939
        %vm958 = vcmp.ge.s32.totalorder %v935, %v939
        %vm959 = vcmp.ge.s32.totalorder %v936, %v939
        %v960 = vadd.s32 %v938, 1
        %v961 = vmul.u32 %v960, 16
        %vm962 = vcmp.lt.s32.totalorder %v917, %v961
        %vm963 = vcmp.lt.s32.totalorder %v918, %v961
        %vm964 = vcmp.lt.s32.totalorder %v919, %v961
        %vm965 = vcmp.lt.s32.totalorder %v920, %v961
        %vm966 = vcmp.lt.s32.totalorder %v921, %v961
        %vm967 = vcmp.lt.s32.totalorder %v922, %v961
        %vm968 = vcmp.lt.s32.totalorder %v923, %v961
        %vm969 = vcmp.lt.s32.totalorder %v924, %v961
        %vm970 = vcmp.lt.s32.totalorder %v925, %v961
        %vm971 = vcmp.lt.s32.totalorder %v926, %v961
        %vm972 = vcmp.lt.s32.totalorder %v927, %v961
        %vm973 = vcmp.lt.s32.totalorder %v928, %v961
        %vm974 = vcmp.lt.s32.totalorder %v929, %v961
        %vm975 = vcmp.lt.s32.totalorder %v930, %v961
        %vm976 = vcmp.lt.s32.totalorder %v931, %v961
        %vm977 = vcmp.lt.s32.totalorder %v932, %v961
        %vm978 = vcmp.lt.s32.totalorder %v933, %v961
        %vm979 = vcmp.lt.s32.totalorder %v934, %v961
        %vm980 = vcmp.lt.s32.totalorder %v935, %v961
        %vm981 = vcmp.lt.s32.totalorder %v936, %v961
        %vm982 = vmand %vm940, %vm962
        %vm983 = vmand %vm941, %vm963
        %vm984 = vmand %vm942, %vm964
        %vm985 = vmand %vm943, %vm965
        %vm986 = vmand %vm944, %vm966
        %vm987 = vmand %vm945, %vm967
        %vm988 = vmand %vm946, %vm968
        %vm989 = vmand %vm947, %vm969
        %vm990 = vmand %vm948, %vm970
        %vm991 = vmand %vm949, %vm971
        %vm992 = vmand %vm950, %vm972
        %vm993 = vmand %vm951, %vm973
        %vm994 = vmand %vm952, %vm974
        %vm995 = vmand %vm953, %vm975
        %vm996 = vmand %vm954, %vm976
        %vm997 = vmand %vm955, %vm977
        %vm998 = vmand %vm956, %vm978
        %vm999 = vmand %vm957, %vm979
        %vm1000 = vmand %vm958, %vm980
        %vm1001 = vmand %vm959, %vm981
        %v1002 = vadd.s32 %v938, 128
        %v1003 = vmul.u32 %v917, 16
        %v1004 = vmul.u32 %v918, 16
        %vm1005 = vcmp.ge.s32.totalorder %v938, %v1003
        %vm1006 = vcmp.ge.s32.totalorder %v1002, %v1003
        %vm1007 = vcmp.ge.s32.totalorder %v938, %v1004
        %vm1008 = vcmp.ge.s32.totalorder %v1002, %v1004
        %v1009 = vadd.s32 %v917, 1
        %v1010 = vadd.s32 %v918, 1
        %v1011 = vmul.u32 %v1009, 16
        %v1012 = vmul.u32 %v1010, 16
        %vm1013 = vcmp.lt.s32.totalorder %v938, %v1011
        %vm1014 = vcmp.lt.s32.totalorder %v1002, %v1011
        %vm1015 = vcmp.lt.s32.totalorder %v938, %v1012
        %vm1016 = vcmp.lt.s32.totalorder %v1002, %v1012
        %vm1017 = vmand %vm1005, %vm1013
        %vm1018 = vmand %vm1006, %vm1014
        %vm1019 = vmand %vm1007, %vm1015
        %vm1020 = vmand %vm1008, %vm1016
        %v1021 = vsel %vm982, 1, 0
        %v1022 = vsel %vm983, 1, 0
        %v1023 = vsel %vm984, 1, 0
        %v1024 = vsel %vm985, 1, 0
        %v1025 = vsel %vm986, 1, 0
        %v1026 = vsel %vm987, 1, 0
        %v1027 = vsel %vm988, 1, 0
        %v1028 = vsel %vm989, 1, 0
        %v1029 = vsel %vm990, 1, 0
        %v1030 = vsel %vm991, 1, 0
        %v1031 = vsel %vm992, 1, 0
        %v1032 = vsel %vm993, 1, 0
        %v1033 = vsel %vm994, 1, 0
        %v1034 = vsel %vm995, 1, 0
        %v1035 = vsel %vm996, 1, 0
        %v1036 = vsel %vm997, 1, 0
        %v1037 = vsel %vm998, 1, 0
        %v1038 = vsel %vm999, 1, 0
        %v1039 = vsel %vm1000, 1, 0
        %v1040 = vsel %vm1001, 1, 0
        %v1041 = vcvt.s32.f32 %v1021
        %v1042 = vcvt.s32.f32 %v1022
        %v1043 = vcvt.s32.f32 %v1023
        %v1044 = vcvt.s32.f32 %v1024
        %v1045 = vcvt.s32.f32 %v1025
        %v1046 = vcvt.s32.f32 %v1026
        %v1047 = vcvt.s32.f32 %v1027
        %v1048 = vcvt.s32.f32 %v1028
        %v1049 = vcvt.s32.f32 %v1029
        %v1050 = vcvt.s32.f32 %v1030
        %v1051 = vcvt.s32.f32 %v1031
        %v1052 = vcvt.s32.f32 %v1032
        %v1053 = vcvt.s32.f32 %v1033
        %v1054 = vcvt.s32.f32 %v1034
        %v1055 = vcvt.s32.f32 %v1035
        %v1056 = vcvt.s32.f32 %v1036
        %v1057 = vcvt.s32.f32 %v1037
        %v1058 = vcvt.s32.f32 %v1038
        %v1059 = vcvt.s32.f32 %v1039
        %v1060 = vcvt.s32.f32 %v1040
        %v1061 = vsel %vm1017, 1, 0
        %v1062 = vsel %vm1018, 1, 0
        %v1063 = vsel %vm1019, 1, 0
        %v1064 = vsel %vm1020, 1, 0
        %v1065 = vcvt.s32.f32 %v1061
        %v1066 = vcvt.s32.f32 %v1062
        %v1067 = vcvt.s32.f32 %v1063
        %v1068 = vcvt.s32.f32 %v1064
        %v1069 = vmul.u32 %v938, 4
        %vm1070 = vcmp.ge.s32.totalorder %v917, %v1069
        %vm1071 = vcmp.ge.s32.totalorder %v918, %v1069
        %vm1072 = vcmp.ge.s32.totalorder %v919, %v1069
        %vm1073 = vcmp.ge.s32.totalorder %v920, %v1069
        %vm1074 = vcmp.ge.s32.totalorder %v921, %v1069
        %v1075 = vmul.u32 %v960, 4
        %vm1076 = vcmp.lt.s32.totalorder %v917, %v1075
        %vm1077 = vcmp.lt.s32.totalorder %v918, %v1075
        %vm1078 = vcmp.lt.s32.totalorder %v919, %v1075
        %vm1079 = vcmp.lt.s32.totalorder %v920, %v1075
        %vm1080 = vcmp.lt.s32.totalorder %v921, %v1075
        %vm1081 = vmand %vm1070, %vm1076
        %vm1082 = vmand %vm1071, %vm1077
        %vm1083 = vmand %vm1072, %vm1078
        %vm1084 = vmand %vm1073, %vm1079
        %vm1085 = vmand %vm1074, %vm1080
        %v1086 = vmul.u32 %v917, 4
        %v1087 = vmul.u32 %v918, 4
        %vm1088 = vcmp.ge.s32.totalorder %v938, %v1086
        %vm1089 = vcmp.ge.s32.totalorder %v938, %v1087
        %v1090 = vmul.u32 %v1009, 4
        %v1091 = vmul.u32 %v1010, 4
        %vm1092 = vcmp.lt.s32.totalorder %v938, %v1090
        %vm1093 = vcmp.lt.s32.totalorder %v938, %v1091
        %vm1094 = vmand %vm1088, %vm1092
        %vm1095 = vmand %vm1089, %vm1093
        %v1096 = vsel %vm1081, 1, 0
        %v1097 = vsel %vm1082, 1, 0
        %v1098 = vsel %vm1083, 1, 0
        %v1099 = vsel %vm1084, 1, 0
        %v1100 = vsel %vm1085, 1, 0
        %v1101 = vcvt.s32.f32 %v1096
        %v1102 = vcvt.s32.f32 %v1097
        %v1103 = vcvt.s32.f32 %v1098
        %v1104 = vcvt.s32.f32 %v1099
        %v1105 = vcvt.s32.f32 %v1100
        %v1106 = vsel %vm1094, 1, 0
        %v1107 = vsel %vm1095, 1, 0
        %v1108 = vcvt.s32.f32 %v1106
        %v1109 = vcvt.s32.f32 %v1107
        %v1110 = vsub.s32 %v917, 1
        %vm1111 = vcmp.eq.s32.totalorder %v938, %v1110
        %v1112 = vsel %vm1111, 1, 0
        %v1113 = vcvt.s32.f32 %v1112
        %vm1114 = vcmp.eq.s32.totalorder %v938, %v1009
        %v1115 = vsel %vm1114, 1, 0
        %v1116 = vcvt.s32.f32 %v1115
        %v1117 = vld [vmem:[%s3] sm:$0xff]
        %v1118 = vld [vmem:[%s3 + $0x8] sm:$0xff]
        %v1119 = vld [vmem:[%s3 + $0x10] sm:$0xff]
        %v1120 = vld [vmem:[%s3 + $0x18] sm:$0xff]
        %v1121 = vld [vmem:[%s3 + $0x20] sm:$0xff]
        %v1122 = vld [vmem:[%s3 + $0x28] sm:$0xff]
        %v1123 = vld [vmem:[%s5] sm:$0x1]
        %v1125 = vperm.slane %v1123, 0
        %vm1127 = vcmask 392192
        %v1129 = vsel %vm1127, %v915, 0
        %1131 = vmatpush.msra.mxu0 0.0
        %1132 = vmatpush.msra.mxu0 0.0
        %1133 = vmatpush.msra.mxu0 0.0
        %1134 = vmatpush.msra.mxu0 0.0
        %1135 = vmatpush.msra.mxu0 0.0
        %1136 = vmatpush.msra.mxu0 0.0
        %1137 = vmatpush.msra.mxu0 0.0
        %1138 = vmatpush.msra.mxu0 0.0
        %1139 = vmatpush.msra.mxu0 0.0
        %1140 = vmatpush.msra.mxu0 0.0
        %1141 = vmatpush.msra.mxu0 %v1122
        %1142 = vmatpush.msra.mxu0 %v1121
        %1143 = vmatpush.msra.mxu0 %v1120
        %1144 = vmatpush.msra.mxu0 %v1119
        %1145 = vmatpush.msra.mxu0 %v1118
        %1146 = vmatpush.msra.mxu0 %v1117
        %1147 = vmatmul.f32.gmra.mxu0 %v1129
        %v1148 = vpop.f32.mrf.mxu0
        %v1149 = vadd.f32 %v1125, %v1148
        %1150 = vdwg.mxu0
        %v1151 = vld [vmem:[%s7] sm:$0xff]
        %v1152 = vadd.f32 %v1149, %v1151
        %v1153 = vld [vmem:[%s9] sm:$0x1]
        %v1154 = vld [vmem:[%s11] sm:$0x1]
        %vm1155 = vcmask 326656
        %v1156 = vsel %vm1155, %v1152, 0.0
        %1157 = vadd.xlane.f32.xlu0 %v1156
        %v1158 = vpop.xlane.xlu0 %1157
        %v1159 = vrcp.pop 40.0
        %v1160 = vmul.f32 40.0, %v1159
        %v1161 = vsub.f32 1.0, %v1160
        %v1162 = vmul.f32 %v1159, %v1161
        %v1163 = vadd.f32 %v1159, %v1162
        %vm1164 = vweird.f32 %v1159
        %v1165 = vsel %vm1164, %v1159, %v1163
        %v1166 = vmul.f32 %v1158, %v1165
        %v1167 = vsub.f32 %v1152, %v1166
        %v1168 = vmul.f32 %v1167, %v1167
        %v1169 = vsel %vm1155, %v1168, 0.0
        %1170 = vadd.xlane.f32.xlu0 %v1169
        %v1171 = vpop.xlane.xlu0 %1170
        %v1172 = vmul.f32 %v1171, %v1165
        %v1173 = vadd.f32 %v1172, 1e-05
        %v1174 = vrsqrt.pop %v1173
        %v1175 = vmul.f32 %v1174, %v1173
        %v1176 = vmul.f32 %v1175, %v1174
        %v1177 = vmul.f32 0.5, %v1176
        %v1178 = vsub.f32 1.5, %v1177
        %v1179 = vmul.f32 %v1174, %v1178
        %vm1180 = vweird.f32 %v1173
        %vm1181 = vweird.f32 %v1174
        %vm1182 = vmor %vm1180, %vm1181
        %v1183 = vsel %vm1182, %v1174, %v1179
        %v1184 = vmul.f32 %v1167, %v1183
        %v1186 = vperm.slane %v1153, 0
        %v1188 = vmul.f32 %v1184, %v1186
        %v1190 = vperm.slane %v1154, 0
        %v1192 = vadd.f32 %v1188, %v1190
        %v1193 = vld [vmem:[%s21] sm:$0x1]
        %v1194 = vld [vmem:[%s13] sm:$0xff]
        %v1195 = vld [vmem:[%s13 + $0x8] sm:$0xff]
        %v1196 = vld [vmem:[%s13 + $0x10] sm:$0xff]
        %v1197 = vld [vmem:[%s13 + $0x18] sm:$0xff]
        %v1198 = vld [vmem:[%s13 + $0x20] sm:$0xff]
        %v1200 = vsel %vm1155, %v1192, 0
        %1202 = vmatpush.msra.mxu0 0.0
        %1203 = vmatpush.msra.mxu0 0.0
        %1204 = vmatpush.msra.mxu0 0.0
        %1205 = vmatpush.msra.mxu0 0.0
        %1206 = vmatpush.msra.mxu0 0.0
        %1207 = vmatpush.msra.mxu0 0.0
        %1208 = vmatpush.msra.mxu0 0.0
        %1209 = vmatpush.msra.mxu0 0.0
        %1210 = vmatpush.msra.mxu0 0.0
        %1211 = vmatpush.msra.mxu0 0.0
        %1212 = vmatpush.msra.mxu0 0.0
        %1213 = vmatpush.msra.mxu0 %v1198
        %1214 = vmatpush.msra.mxu0 %v1197
        %1215 = vmatpush.msra.mxu0 %v1196
        %1216 = vmatpush.msra.mxu0 %v1195
        %1217 = vmatpush.msra.mxu0 %v1194
        %1218 = vmatmul.f32.gmra.mxu0 %v1200
        %v1219 = vpop.f32.mrf.mxu0
        %v1220 = vadd.f32 0.0, %v1219
        %1221 = vdwg.mxu0
        %v1222 = vld [vmem:[%s15] sm:$0xff]
        %v1223 = vld [vmem:[%s15 + $0x8] sm:$0xff]
        %v1224 = vld [vmem:[%s15 + $0x10] sm:$0xff]
        %v1225 = vld [vmem:[%s15 + $0x18] sm:$0xff]
        %v1226 = vld [vmem:[%s15 + $0x20] sm:$0xff]
        %1227 = vmatpush.msra.mxu0 0.0
        %1228 = vmatpush.msra.mxu0 0.0
        %1229 = vmatpush.msra.mxu0 0.0
        %1230 = vmatpush.msra.mxu0 0.0
        %1231 = vmatpush.msra.mxu0 0.0
        %1232 = vmatpush.msra.mxu0 0.0
        %1233 = vmatpush.msra.mxu0 0.0
        %1234 = vmatpush.msra.mxu0 0.0
        %1235 = vmatpush.msra.mxu0 0.0
        %1236 = vmatpush.msra.mxu0 0.0
        %1237 = vmatpush.msra.mxu0 0.0
        %1238 = vmatpush.msra.mxu0 %v1226
        %1239 = vmatpush.msra.mxu0 %v1225
        %1240 = vmatpush.msra.mxu0 %v1224
        %1241 = vmatpush.msra.mxu0 %v1223
        %1242 = vmatpush.msra.mxu0 %v1222
        %1243 = vmatmul.f32.gmra.mxu0 %v1200
        %v1244 = vpop.f32.mrf.mxu0
        %v1245 = vadd.f32 0.0, %v1244
        %1246 = vdwg.mxu0
        %v1247 = vld [vmem:[%s17] sm:$0xff]
        %v1248 = vld [vmem:[%s17 + $0x8] sm:$0xff]
        %v1249 = vld [vmem:[%s17 + $0x10] sm:$0xff]
        %v1250 = vld [vmem:[%s17 + $0x18] sm:$0xff]
        %v1251 = vld [vmem:[%s17 + $0x20] sm:$0xff]
        %1252 = vmatpush.msra.mxu0 0.0
        %1253 = vmatpush.msra.mxu0 0.0
        %1254 = vmatpush.msra.mxu0 0.0
        %1255 = vmatpush.msra.mxu0 0.0
        %1256 = vmatpush.msra.mxu0 0.0
        %1257 = vmatpush.msra.mxu0 0.0
        %1258 = vmatpush.msra.mxu0 0.0
        %1259 = vmatpush.msra.mxu0 0.0
        %1260 = vmatpush.msra.mxu0 0.0
        %1261 = vmatpush.msra.mxu0 0.0
        %1262 = vmatpush.msra.mxu0 0.0
        %1263 = vmatpush.msra.mxu0 %v1251
        %1264 = vmatpush.msra.mxu0 %v1250
        %1265 = vmatpush.msra.mxu0 %v1249
        %1266 = vmatpush.msra.mxu0 %v1248
        %1267 = vmatpush.msra.mxu0 %v1247
        %1268 = vmatmul.f32.gmra.mxu0 %v1200
        %v1269 = vpop.f32.mrf.mxu0
        %v1270 = vadd.f32 0.0, %v1269
        %1271 = vdwg.mxu0
        %vm1272 = vcmask 64512
        %v1274 = vsel %vm1272, %v1220, 0
        %v1277 = vsel %vm1272, %v1245, 0
        %1279 = vmatpush.xpose.msra.mxu0 0.0
        %1280 = vmatpush.xpose.msra.mxu0 0.0
        %1281 = vmatpush.xpose.msra.mxu0 0.0
        %1282 = vmatpush.xpose.msra.mxu0 0.0
        %1283 = vmatpush.xpose.msra.mxu0 0.0
        %1284 = vmatpush.xpose.msra.mxu0 0.0
        %1285 = vmatpush.xpose.msra.mxu0 0.0
        %1286 = vmatpush.xpose.msra.mxu0 0.0
        %1287 = vmatpush.xpose.msra.mxu0 0.0
        %1288 = vmatpush.xpose.msra.mxu0 0.0
        %1289 = vmatpush.xpose.msra.mxu0 0.0
        %1290 = vmatpush.xpose.msra.mxu0 0.0
        %1291 = vmatpush.xpose.msra.mxu0 0.0
        %1292 = vmatpush.xpose.msra.mxu0 0.0
        %1293 = vmatpush.xpose.msra.mxu0 0.0
        %1294 = vmatpush.xpose.msra.mxu0 %v1277
        %1295 = vmatmul.f32.gmra.mxu0 %v1274
        %v1296 = vpop.f32.mrf.mxu0
        %v1297 = vadd.f32 0.0, %v1296
        %1298 = vdwg.mxu0
        %v1299 = vmul.f32 %v1297, 0.35355338
        %v1300 = vsel %vm1272, %v1299, -inf
        %1301 = vmax.xlane.f32.xlu0 %v1300
        %v1302 = vpop.xlane.xlu0 %1301
        %v1303 = vsub.f32 %v1299, %v1302
        %v1304 = vmul.f32 %v1303, 1.442695
        %v1305 = vpow.pop %v1304
        %v1306 = vsel %vm1272, %v1305, 0.0
        %1307 = vadd.xlane.f32.xlu0 %v1306
        %v1308 = vpop.xlane.xlu0 %1307
        %v1309 = vrcp.pop %v1308
        %v1310 = vmul.f32 %v1308, %v1309
        %v1311 = vsub.f32 1.0, %v1310
        %v1312 = vmul.f32 %v1309, %v1311
        %v1313 = vadd.f32 %v1309, %v1312
        %vm1314 = vweird.f32 %v1308
        %vm1315 = vweird.f32 %v1309
        %vm1316 = vmor %vm1314, %vm1315
        %v1317 = vsel %vm1316, %v1309, %v1313
        %v1318 = vand.u32 2147483647, %v1308
        %vm1319 = vcmp.eq.f32.partialorder %v1318, 8.507059e+37
        %v1320 = vand.u32 %v1308, 2147483648
        %v1321 = vor.u32 1.1754944e-38, %v1320
        %v1322 = vsel %vm1319, %v1321, %v1317
        %v1323 = vmul.f32 %v1305, %v1322
        %v1325 = vsel %vm1272, %v1323, 0
        %1327 = vmatpush.msra.mxu0 0.0
        %1328 = vmatpush.msra.mxu0 0.0
        %1329 = vmatpush.msra.mxu0 0.0
        %1330 = vmatpush.msra.mxu0 0.0
        %1331 = vmatpush.msra.mxu0 0.0
        %1332 = vmatpush.msra.mxu0 0.0
        %1333 = vmatpush.msra.mxu0 0.0
        %1334 = vmatpush.msra.mxu0 0.0
        %1335 = vmatpush.msra.mxu0 0.0
        %1336 = vmatpush.msra.mxu0 0.0
        %1337 = vmatpush.msra.mxu0 0.0
        %1338 = vmatpush.msra.mxu0 0.0
        %1339 = vmatpush.msra.mxu0 0.0
        %1340 = vmatpush.msra.mxu0 0.0
        %1341 = vmatpush.msra.mxu0 0.0
        %1342 = vmatpush.msra.mxu0 %v1270
        %1343 = vmatmul.f32.gmra.mxu0 %v1325
        %v1344 = vpop.f32.mrf.mxu0
        %v1345 = vadd.f32 0.0, %v1344
        %1346 = vdwg.mxu0
        %v1347 = vld [vmem:[%s19] sm:$0xff]
        %v1349 = vsel %vm1272, %v1345, 0
        %1351 = vmatpush.msra.mxu0 0.0
        %1352 = vmatpush.msra.mxu0 0.0
        %1353 = vmatpush.msra.mxu0 0.0
        %1354 = vmatpush.msra.mxu0 0.0
        %1355 = vmatpush.msra.mxu0 0.0
        %1356 = vmatpush.msra.mxu0 0.0
        %1357 = vmatpush.msra.mxu0 0.0
        %1358 = vmatpush.msra.mxu0 0.0
        %1359 = vmatpush.msra.mxu0 0.0
        %1360 = vmatpush.msra.mxu0 0.0
        %1361 = vmatpush.msra.mxu0 0.0
        %1362 = vmatpush.msra.mxu0 0.0
        %1363 = vmatpush.msra.mxu0 0.0
        %1364 = vmatpush.msra.mxu0 0.0
        %1365 = vmatpush.msra.mxu0 0.0
        %1366 = vmatpush.msra.mxu0 %v1347
        %1367 = vmatmul.f32.gmra.mxu0 %v1349
        %v1368 = vpop.f32.mrf.mxu0
        %v1369 = vadd.f32 0.0, %v1368
        %1370 = vdwg.mxu0
        %v1372 = vperm.slane %v1193, 0
        %v1374 = vadd.f32 %v1372, %v1369
        %s1375 = scalar_lea.vmem %s13, 40
        %v1376 = vld [vmem:[%s1375] sm:$0xff]
        %v1377 = vld [vmem:[%s1375 + $0x8] sm:$0xff]
        %v1378 = vld [vmem:[%s1375 + $0x10] sm:$0xff]
        %v1379 = vld [vmem:[%s1375 + $0x18] sm:$0xff]
        %v1380 = vld [vmem:[%s1375 + $0x20] sm:$0xff]
        %1381 = vmatpush.msra.mxu0 0.0
        %1382 = vmatpush.msra.mxu0 0.0
        %1383 = vmatpush.msra.mxu0 0.0
        %1384 = vmatpush.msra.mxu0 0.0
        %1385 = vmatpush.msra.mxu0 0.0
        %1386 = vmatpush.msra.mxu0 0.0
        %1387 = vmatpush.msra.mxu0 0.0
        %1388 = vmatpush.msra.mxu0 0.0
        %1389 = vmatpush.msra.mxu0 0.0
        %1390 = vmatpush.msra.mxu0 0.0
        %1391 = vmatpush.msra.mxu0 0.0
        %1392 = vmatpush.msra.mxu0 %v1380
        %1393 = vmatpush.msra.mxu0 %v1379
        %1394 = vmatpush.msra.mxu0 %v1378
        %1395 = vmatpush.msra.mxu0 %v1377
        %1396 = vmatpush.msra.mxu0 %v1376
        %1397 = vmatmul.f32.gmra.mxu0 %v1200
        %v1398 = vpop.f32.mrf.mxu0
        %v1399 = vadd.f32 0.0, %v1398
        %1400 = vdwg.mxu0
        %s1401 = scalar_lea.vmem %s15, 40
        %v1402 = vld [vmem:[%s1401] sm:$0xff]
        %v1403 = vld [vmem:[%s1401 + $0x8] sm:$0xff]
        %v1404 = vld [vmem:[%s1401 + $0x10] sm:$0xff]
        %v1405 = vld [vmem:[%s1401 + $0x18] sm:$0xff]
        %v1406 = vld [vmem:[%s1401 + $0x20] sm:$0xff]
        %1407 = vmatpush.msra.mxu0 0.0
        %1408 = vmatpush.msra.mxu0 0.0
        %1409 = vmatpush.msra.mxu0 0.0
        %1410 = vmatpush.msra.mxu0 0.0
        %1411 = vmatpush.msra.mxu0 0.0
        %1412 = vmatpush.msra.mxu0 0.0
        %1413 = vmatpush.msra.mxu0 0.0
        %1414 = vmatpush.msra.mxu0 0.0
        %1415 = vmatpush.msra.mxu0 0.0
        %1416 = vmatpush.msra.mxu0 0.0
        %1417 = vmatpush.msra.mxu0 0.0
        %1418 = vmatpush.msra.mxu0 %v1406
        %1419 = vmatpush.msra.mxu0 %v1405
        %1420 = vmatpush.msra.mxu0 %v1404
        %1421 = vmatpush.msra.mxu0 %v1403
        %1422 = vmatpush.msra.mxu0 %v1402
        %1423 = vmatmul.f32.gmra.mxu0 %v1200
        %v1424 = vpop.f32.mrf.mxu0
        %v1425 = vadd.f32 0.0, %v1424
        %1426 = vdwg.mxu0
        %s1427 = scalar_lea.vmem %s17, 40
        %v1428 = vld [vmem:[%s1427] sm:$0xff]
        %v1429 = vld [vmem:[%s1427 + $0x8] sm:$0xff]
        %v1430 = vld [vmem:[%s1427 + $0x10] sm:$0xff]
        %v1431 = vld [vmem:[%s1427 + $0x18] sm:$0xff]
        %v1432 = vld [vmem:[%s1427 + $0x20] sm:$0xff]
        %1433 = vmatpush.msra.mxu0 0.0
        %1434 = vmatpush.msra.mxu0 0.0
        %1435 = vmatpush.msra.mxu0 0.0
        %1436 = vmatpush.msra.mxu0 0.0
        %1437 = vmatpush.msra.mxu0 0.0
        %1438 = vmatpush.msra.mxu0 0.0
        %1439 = vmatpush.msra.mxu0 0.0
        %1440 = vmatpush.msra.mxu0 0.0
        %1441 = vmatpush.msra.mxu0 0.0
        %1442 = vmatpush.msra.mxu0 0.0
        %1443 = vmatpush.msra.mxu0 0.0
        %1444 = vmatpush.msra.mxu0 %v1432
        %1445 = vmatpush.msra.mxu0 %v1431
        %1446 = vmatpush.msra.mxu0 %v1430
        %1447 = vmatpush.msra.mxu0 %v1429
        %1448 = vmatpush.msra.mxu0 %v1428
        %1449 = vmatmul.f32.gmra.mxu0 %v1200
        %v1450 = vpop.f32.mrf.mxu0
        %v1451 = vadd.f32 0.0, %v1450
        %1452 = vdwg.mxu0
        %v1454 = vsel %vm1272, %v1399, 0
        %v1457 = vsel %vm1272, %v1425, 0
        %1459 = vmatpush.xpose.msra.mxu0 0.0
        %1460 = vmatpush.xpose.msra.mxu0 0.0
        %1461 = vmatpush.xpose.msra.mxu0 0.0
        %1462 = vmatpush.xpose.msra.mxu0 0.0
        %1463 = vmatpush.xpose.msra.mxu0 0.0
        %1464 = vmatpush.xpose.msra.mxu0 0.0
        %1465 = vmatpush.xpose.msra.mxu0 0.0
        %1466 = vmatpush.xpose.msra.mxu0 0.0
        %1467 = vmatpush.xpose.msra.mxu0 0.0
        %1468 = vmatpush.xpose.msra.mxu0 0.0
        %1469 = vmatpush.xpose.msra.mxu0 0.0
        %1470 = vmatpush.xpose.msra.mxu0 0.0
        %1471 = vmatpush.xpose.msra.mxu0 0.0
        %1472 = vmatpush.xpose.msra.mxu0 0.0
        %1473 = vmatpush.xpose.msra.mxu0 0.0
        %1474 = vmatpush.xpose.msra.mxu0 %v1457
        %1475 = vmatmul.f32.gmra.mxu0 %v1454
        %v1476 = vpop.f32.mrf.mxu0
        %v1477 = vadd.f32 0.0, %v1476
        %1478 = vdwg.mxu0
        %v1479 = vmul.f32 %v1477, 0.35355338
        %v1480 = vsel %vm1272, %v1479, -inf
        %1481 = vmax.xlane.f32.xlu0 %v1480
        %v1482 = vpop.xlane.xlu0 %1481
        %v1483 = vsub.f32 %v1479, %v1482
        %v1484 = vmul.f32 %v1483, 1.442695
        %v1485 = vpow.pop %v1484
        %v1486 = vsel %vm1272, %v1485, 0.0
        %1487 = vadd.xlane.f32.xlu0 %v1486
        %v1488 = vpop.xlane.xlu0 %1487
        %v1489 = vrcp.pop %v1488
        %v1490 = vmul.f32 %v1488, %v1489
        %v1491 = vsub.f32 1.0, %v1490
        %v1492 = vmul.f32 %v1489, %v1491
        %v1493 = vadd.f32 %v1489, %v1492
        %vm1494 = vweird.f32 %v1488
        %vm1495 = vweird.f32 %v1489
        %vm1496 = vmor %vm1494, %vm1495
        %v1497 = vsel %vm1496, %v1489, %v1493
        %v1498 = vand.u32 2147483647, %v1488
        %vm1499 = vcmp.eq.f32.partialorder %v1498, 8.507059e+37
        %v1500 = vand.u32 %v1488, 2147483648
        %v1501 = vor.u32 1.1754944e-38, %v1500
        %v1502 = vsel %vm1499, %v1501, %v1497
        %v1503 = vmul.f32 %v1485, %v1502
        %v1505 = vsel %vm1272, %v1503, 0
        %1507 = vmatpush.msra.mxu0 0.0
        %1508 = vmatpush.msra.mxu0 0.0
        %1509 = vmatpush.msra.mxu0 0.0
        %1510 = vmatpush.msra.mxu0 0.0
        %1511 = vmatpush.msra.mxu0 0.0
        %1512 = vmatpush.msra.mxu0 0.0
        %1513 = vmatpush.msra.mxu0 0.0
        %1514 = vmatpush.msra.mxu0 0.0
        %1515 = vmatpush.msra.mxu0 0.0
        %1516 = vmatpush.msra.mxu0 0.0
        %1517 = vmatpush.msra.mxu0 0.0
        %1518 = vmatpush.msra.mxu0 0.0
        %1519 = vmatpush.msra.mxu0 0.0
        %1520 = vmatpush.msra.mxu0 0.0
        %1521 = vmatpush.msra.mxu0 0.0
        %1522 = vmatpush.msra.mxu0 %v1451
        %1523 = vmatmul.f32.gmra.mxu0 %v1505
        %v1524 = vpop.f32.mrf.mxu0
        %v1525 = vadd.f32 0.0, %v1524
        %1526 = vdwg.mxu0
        %s1527 = scalar_lea.vmem %s19, 8
        %v1528 = vld [vmem:[%s1527] sm:$0xff]
        %v1530 = vsel %vm1272, %v1525, 0
        %1532 = vmatpush.msra.mxu0 0.0
        %1533 = vmatpush.msra.mxu0 0.0
        %1534 = vmatpush.msra.mxu0 0.0
        %1535 = vmatpush.msra.mxu0 0.0
        %1536 = vmatpush.msra.mxu0 0.0
        %1537 = vmatpush.msra.mxu0 0.0
        %1538 = vmatpush.msra.mxu0 0.0
        %1539 = vmatpush.msra.mxu0 0.0
        %1540 = vmatpush.msra.mxu0 0.0
        %1541 = vmatpush.msra.mxu0 0.0
        %1542 = vmatpush.msra.mxu0 0.0
        %1543 = vmatpush.msra.mxu0 0.0
        %1544 = vmatpush.msra.mxu0 0.0
        %1545 = vmatpush.msra.mxu0 0.0
        %1546 = vmatpush.msra.mxu0 0.0
        %1547 = vmatpush.msra.mxu0 %v1528
        %1548 = vmatmul.f32.gmra.mxu0 %v1530
        %v1549 = vpop.f32.mrf.mxu0
        %v1550 = vadd.f32 0.0, %v1549
        %1551 = vdwg.mxu0
        %v1552 = vadd.f32 %v1374, %v1550
        %v1553 = vadd.f32 %v1152, %v1552
        %v1554 = vld [vmem:[%s23] sm:$0x1]
        %v1555 = vld [vmem:[%s25] sm:$0x1]
        %v1556 = vsel %vm1155, %v1553, 0.0
        %1557 = vadd.xlane.f32.xlu0 %v1556
        %v1558 = vpop.xlane.xlu0 %1557
        %v1559 = vmul.f32 %v1558, %v1165
        %v1560 = vsub.f32 %v1553, %v1559
        %v1561 = vmul.f32 %v1560, %v1560
        %v1562 = vsel %vm1155, %v1561, 0.0
        %1563 = vadd.xlane.f32.xlu0 %v1562
        %v1564 = vpop.xlane.xlu0 %1563
        %v1565 = vmul.f32 %v1564, %v1165
        %v1566 = vadd.f32 %v1565, 1e-05
        %v1567 = vrsqrt.pop %v1566
        %v1568 = vmul.f32 %v1567, %v1566
        %v1569 = vmul.f32 %v1568, %v1567
        %v1570 = vmul.f32 0.5, %v1569
        %v1571 = vsub.f32 1.5, %v1570
        %v1572 = vmul.f32 %v1567, %v1571
        %vm1573 = vweird.f32 %v1566
        %vm1574 = vweird.f32 %v1567
        %vm1575 = vmor %vm1573, %vm1574
        %v1576 = vsel %vm1575, %v1567, %v1572
        %v1577 = vmul.f32 %v1560, %v1576
        %v1579 = vperm.slane %v1554, 0
        %v1581 = vmul.f32 %v1577, %v1579
        %v1583 = vperm.slane %v1555, 0
        %v1585 = vadd.f32 %v1581, %v1583
        %v1586 = vld [vmem:[%s27] sm:$0xff]
        %v1587 = vld [vmem:[%s27 + $0x8] sm:$0xff]
        %v1588 = vld [vmem:[%s27 + $0x10] sm:$0xff]
        %v1589 = vld [vmem:[%s27 + $0x18] sm:$0xff]
        %v1590 = vld [vmem:[%s27 + $0x20] sm:$0xff]
        %v1591 = vld [vmem:[%s27 + $0x28] sm:$0xff]
        %v1592 = vld [vmem:[%s27 + $0x30] sm:$0xff]
        %v1593 = vld [vmem:[%s27 + $0x38] sm:$0xff]
        %v1594 = vld [vmem:[%s27 + $0x40] sm:$0xff]
        %v1595 = vld [vmem:[%s27 + $0x48] sm:$0xff]
        %v1596 = vld [vmem:[%s29] sm:$0x3]
        %v1598 = vperm.slane %v1596, 0
        %v1599 = vperm.slane %v1596, 1
        %v1603 = vsel %vm1155, %v1585, 0
        %1605 = vmatpush.msra.mxu0 0.0
        %1606 = vmatpush.msra.mxu0 0.0
        %1607 = vmatpush.msra.mxu0 0.0
        %1608 = vmatpush.msra.mxu0 0.0
        %1609 = vmatpush.msra.mxu0 0.0
        %1610 = vmatpush.msra.mxu0 0.0
        %1611 = vmatpush.msra.mxu0 0.0
        %1612 = vmatpush.msra.mxu0 0.0
        %1613 = vmatpush.msra.mxu0 0.0
        %1614 = vmatpush.msra.mxu0 0.0
        %1615 = vmatpush.msra.mxu0 0.0
        %1616 = vmatpush.msra.mxu0 %v1594
        %1617 = vmatpush.msra.mxu0 %v1592
        %1618 = vmatpush.msra.mxu0 %v1590
        %1619 = vmatpush.msra.mxu0 %v1588
        %1620 = vmatpush.msra.mxu0 %v1586
        %1621 = vmatmul.f32.gmra.mxu0 %v1603
        %v1622 = vpop.f32.mrf.mxu0
        %v1623 = vadd.f32 %v1598, %v1622
        %1624 = vdwg.mxu0
        %1625 = vmatpush.msra.mxu0 0.0
        %1626 = vmatpush.msra.mxu0 0.0
        %1627 = vmatpush.msra.mxu0 0.0
        %1628 = vmatpush.msra.mxu0 0.0
        %1629 = vmatpush.msra.mxu0 0.0
        %1630 = vmatpush.msra.mxu0 0.0
        %1631 = vmatpush.msra.mxu0 0.0
        %1632 = vmatpush.msra.mxu0 0.0
        %1633 = vmatpush.msra.mxu0 0.0
        %1634 = vmatpush.msra.mxu0 0.0
        %1635 = vmatpush.msra.mxu0 0.0
        %1636 = vmatpush.msra.mxu0 %v1595
        %1637 = vmatpush.msra.mxu0 %v1593
        %1638 = vmatpush.msra.mxu0 %v1591
        %1639 = vmatpush.msra.mxu0 %v1589
        %1640 = vmatpush.msra.mxu0 %v1587
        %1641 = vmatmul.f32.gmra.mxu0 %v1603
        %v1642 = vpop.f32.mrf.mxu0
        %v1643 = vadd.f32 %v1599, %v1642
        %1644 = vdwg.mxu0
        %v1645 = vld [vmem:[%s31] sm:$0x3]
        %v1646 = vld [vmem:[%s33] sm:$0x3]
        %v1647 = vrot.slane %v1623, 4
        %v1648 = vadd.f32 %v1623, %v1647
        %v1649 = vrot.slane %v1648, 2
        %v1650 = vadd.f32 %v1648, %v1649
        %v1651 = vrot.slane %v1650, 1
        %v1652 = vadd.f32 %v1650, %v1651
        %vm1653 = vcmask 261120
        %v1654 = vsel %vm1653, %v1643, 0.0
        %v1655 = vrot.slane %v1654, 4
        %v1656 = vadd.f32 %v1654, %v1655
        %v1657 = vrot.slane %v1656, 2
        %v1658 = vadd.f32 %v1656, %v1657
        %v1659 = vrot.slane %v1658, 1
        %v1660 = vadd.f32 %v1658, %v1659
        %v1662 = vsel %vm1653, %v1660, 0
        %1664 = vmatpush.msra.mxu0 %v1056
        %1665 = vmatpush.msra.mxu0 %v1055
        %1666 = vmatpush.msra.mxu0 %v1054
        %1667 = vmatpush.msra.mxu0 %v1053
        %1668 = vmatpush.msra.mxu0 %v1052
        %1669 = vmatpush.msra.mxu0 %v1051
        %1670 = vmatpush.msra.mxu0 %v1050
        %1671 = vmatpush.msra.mxu0 %v1049
        %1672 = vmatpush.msra.mxu0 %v1048
        %1673 = vmatpush.msra.mxu0 %v1047
        %1674 = vmatpush.msra.mxu0 %v1046
        %1675 = vmatpush.msra.mxu0 %v1045
        %1676 = vmatpush.msra.mxu0 %v1044
        %1677 = vmatpush.msra.mxu0 %v1043
        %1678 = vmatpush.msra.mxu0 %v1042
        %1679 = vmatpush.msra.mxu0 %v1041
        %1680 = vmatmul.f32.gmra.mxu0 %v1652
        %v1681 = vpop.f32.mrf.mxu0
        %v1682 = vadd.f32 0.0, %v1681
        %1683 = vdwg.mxu0
        %1684 = vmatpush.msra.mxu0 0.0
        %1685 = vmatpush.msra.mxu0 0.0
        %1686 = vmatpush.msra.mxu0 0.0
        %1687 = vmatpush.msra.mxu0 0.0
        %1688 = vmatpush.msra.mxu0 0.0
        %1689 = vmatpush.msra.mxu0 0.0
        %1690 = vmatpush.msra.mxu0 0.0
        %1691 = vmatpush.msra.mxu0 0.0
        %1692 = vmatpush.msra.mxu0 0.0
        %1693 = vmatpush.msra.mxu0 0.0
        %1694 = vmatpush.msra.mxu0 0.0
        %1695 = vmatpush.msra.mxu0 0.0
        %1696 = vmatpush.msra.mxu0 %v1060
        %1697 = vmatpush.msra.mxu0 %v1059
        %1698 = vmatpush.msra.mxu0 %v1058
        %1699 = vmatpush.msra.mxu0 %v1057
        %1700 = vmatmul.f32.gmra.mxu0 %v1662
        %v1701 = vpop.f32.mrf.mxu0
        %v1702 = vadd.f32 %v1682, %v1701
        %1703 = vdwg.mxu0
        %v1704 = vrcp.pop 128.0
        %v1705 = vmul.f32 128.0, %v1704
        %v1706 = vsub.f32 1.0, %v1705
        %v1707 = vmul.f32 %v1704, %v1706
        %v1708 = vadd.f32 %v1704, %v1707
        %vm1709 = vweird.f32 %v1704
        %v1710 = vsel %vm1709, %v1704, %v1708
        %v1711 = vmul.f32 %v1702, %v1710
        %vm1712 = vcmask 80896
        %v1714 = vsel %vm1712, %v1711, 0
        %vm1716 = vcmask 1041408
        %v1718 = vsel %vm1716, %v1067, 0
        %v1721 = vsel %vm1716, %v1068, 0
        %1723 = vmatpush.msra.mxu0 0.0
        %1724 = vmatpush.msra.mxu0 0.0
        %1725 = vmatpush.msra.mxu0 0.0
        %1726 = vmatpush.msra.mxu0 0.0
        %1727 = vmatpush.msra.mxu0 0.0
        %1728 = vmatpush.msra.mxu0 0.0
        %1729 = vmatpush.msra.mxu0 0.0
        %1730 = vmatpush.msra.mxu0 0.0
        %1731 = vmatpush.msra.mxu0 0.0
        %1732 = vmatpush.msra.mxu0 0.0
        %1733 = vmatpush.msra.mxu0 0.0
        %1734 = vmatpush.msra.mxu0 0.0
        %1735 = vmatpush.msra.mxu0 0.0
        %1736 = vmatpush.msra.mxu0 0.0
        %1737 = vmatpush.msra.mxu0 %v1718
        %1738 = vmatpush.msra.mxu0 %v1065
        %1739 = vmatmul.f32.gmra.mxu0 %v1714
        %v1740 = vpop.f32.mrf.mxu0
        %v1741 = vadd.f32 0.0, %v1740
        %1742 = vdwg.mxu0
        %1743 = vmatpush.msra.mxu0 0.0
        %1744 = vmatpush.msra.mxu0 0.0
        %1745 = vmatpush.msra.mxu0 0.0
        %1746 = vmatpush.msra.mxu0 0.0
        %1747 = vmatpush.msra.mxu0 0.0
        %1748 = vmatpush.msra.mxu0 0.0
        %1749 = vmatpush.msra.mxu0 0.0
        %1750 = vmatpush.msra.mxu0 0.0
        %1751 = vmatpush.msra.mxu0 0.0
        %1752 = vmatpush.msra.mxu0 0.0
        %1753 = vmatpush.msra.mxu0 0.0
        %1754 = vmatpush.msra.mxu0 0.0
        %1755 = vmatpush.msra.mxu0 0.0
        %1756 = vmatpush.msra.mxu0 0.0
        %1757 = vmatpush.msra.mxu0 %v1721
        %1758 = vmatpush.msra.mxu0 %v1066
        %1759 = vmatmul.f32.gmra.mxu0 %v1714
        %v1760 = vpop.f32.mrf.mxu0
        %v1761 = vadd.f32 0.0, %v1760
        %1762 = vdwg.mxu0
        %v1763 = vperm.slane %v1741, 0
        %v1764 = vperm.slane %v1761, 0
        %v1765 = vsub.f32 %v1623, %v1763
        %v1766 = vsub.f32 %v1643, %v1764
        %v1767 = vmul.f32 %v1765, %v1765
        %v1768 = vmul.f32 %v1766, %v1766
        %v1769 = vrot.slane %v1767, 4
        %v1770 = vadd.f32 %v1767, %v1769
        %v1771 = vrot.slane %v1770, 2
        %v1772 = vadd.f32 %v1770, %v1771
        %v1773 = vrot.slane %v1772, 1
        %v1774 = vadd.f32 %v1772, %v1773
        %v1775 = vsel %vm1653, %v1768, 0.0
        %v1776 = vrot.slane %v1775, 4
        %v1777 = vadd.f32 %v1775, %v1776
        %v1778 = vrot.slane %v1777, 2
        %v1779 = vadd.f32 %v1777, %v1778
        %v1780 = vrot.slane %v1779, 1
        %v1781 = vadd.f32 %v1779, %v1780
        %v1783 = vsel %vm1653, %v1781, 0
        %1785 = vmatpush.msra.mxu0 %v1056
        %1786 = vmatpush.msra.mxu0 %v1055
        %1787 = vmatpush.msra.mxu0 %v1054
        %1788 = vmatpush.msra.mxu0 %v1053
        %1789 = vmatpush.msra.mxu0 %v1052
        %1790 = vmatpush.msra.mxu0 %v1051
        %1791 = vmatpush.msra.mxu0 %v1050
        %1792 = vmatpush.msra.mxu0 %v1049
        %1793 = vmatpush.msra.mxu0 %v1048
        %1794 = vmatpush.msra.mxu0 %v1047
        %1795 = vmatpush.msra.mxu0 %v1046
        %1796 = vmatpush.msra.mxu0 %v1045
        %1797 = vmatpush.msra.mxu0 %v1044
        %1798 = vmatpush.msra.mxu0 %v1043
        %1799 = vmatpush.msra.mxu0 %v1042
        %1800 = vmatpush.msra.mxu0 %v1041
        %1801 = vmatmul.f32.gmra.mxu0 %v1774
        %v1802 = vpop.f32.mrf.mxu0
        %v1803 = vadd.f32 0.0, %v1802
        %1804 = vdwg.mxu0
        %1805 = vmatpush.msra.mxu0 0.0
        %1806 = vmatpush.msra.mxu0 0.0
        %1807 = vmatpush.msra.mxu0 0.0
        %1808 = vmatpush.msra.mxu0 0.0
        %1809 = vmatpush.msra.mxu0 0.0
        %1810 = vmatpush.msra.mxu0 0.0
        %1811 = vmatpush.msra.mxu0 0.0
        %1812 = vmatpush.msra.mxu0 0.0
        %1813 = vmatpush.msra.mxu0 0.0
        %1814 = vmatpush.msra.mxu0 0.0
        %1815 = vmatpush.msra.mxu0 0.0
        %1816 = vmatpush.msra.mxu0 0.0
        %1817 = vmatpush.msra.mxu0 %v1060
        %1818 = vmatpush.msra.mxu0 %v1059
        %1819 = vmatpush.msra.mxu0 %v1058
        %1820 = vmatpush.msra.mxu0 %v1057
        %1821 = vmatmul.f32.gmra.mxu0 %v1783
        %v1822 = vpop.f32.mrf.mxu0
        %v1823 = vadd.f32 %v1803, %v1822
        %1824 = vdwg.mxu0
        %v1825 = vmul.f32 %v1823, %v1710
        %v1827 = vsel %vm1712, %v1825, 0
        %1829 = vmatpush.msra.mxu0 0.0
        %1830 = vmatpush.msra.mxu0 0.0
        %1831 = vmatpush.msra.mxu0 0.0
        %1832 = vmatpush.msra.mxu0 0.0
        %1833 = vmatpush.msra.mxu0 0.0
        %1834 = vmatpush.msra.mxu0 0.0
        %1835 = vmatpush.msra.mxu0 0.0
        %1836 = vmatpush.msra.mxu0 0.0
        %1837 = vmatpush.msra.mxu0 0.0
        %1838 = vmatpush.msra.mxu0 0.0
        %1839 = vmatpush.msra.mxu0 0.0
        %1840 = vmatpush.msra.mxu0 0.0
        %1841 = vmatpush.msra.mxu0 0.0
        %1842 = vmatpush.msra.mxu0 0.0
        %1843 = vmatpush.msra.mxu0 %v1718
        %1844 = vmatpush.msra.mxu0 %v1065
        %1845 = vmatmul.f32.gmra.mxu0 %v1827
        %v1846 = vpop.f32.mrf.mxu0
        %v1847 = vadd.f32 1e-05, %v1846
        %1848 = vdwg.mxu0
        %1849 = vmatpush.msra.mxu0 0.0
        %1850 = vmatpush.msra.mxu0 0.0
        %1851 = vmatpush.msra.mxu0 0.0
        %1852 = vmatpush.msra.mxu0 0.0
        %1853 = vmatpush.msra.mxu0 0.0
        %1854 = vmatpush.msra.mxu0 0.0
        %1855 = vmatpush.msra.mxu0 0.0
        %1856 = vmatpush.msra.mxu0 0.0
        %1857 = vmatpush.msra.mxu0 0.0
        %1858 = vmatpush.msra.mxu0 0.0
        %1859 = vmatpush.msra.mxu0 0.0
        %1860 = vmatpush.msra.mxu0 0.0
        %1861 = vmatpush.msra.mxu0 0.0
        %1862 = vmatpush.msra.mxu0 0.0
        %1863 = vmatpush.msra.mxu0 %v1721
        %1864 = vmatpush.msra.mxu0 %v1066
        %1865 = vmatmul.f32.gmra.mxu0 %v1827
        %v1866 = vpop.f32.mrf.mxu0
        %v1867 = vadd.f32 1e-05, %v1866
        %1868 = vdwg.mxu0
        %v1869 = vrsqrt.pop %v1847
        %v1870 = vmul.f32 %v1869, %v1847
        %v1871 = vmul.f32 %v1870, %v1869
        %v1872 = vmul.f32 0.5, %v1871
        %v1873 = vsub.f32 1.5, %v1872
        %v1874 = vmul.f32 %v1869, %v1873
        %vm1875 = vweird.f32 %v1847
        %vm1876 = vweird.f32 %v1869
        %vm1877 = vmor %vm1875, %vm1876
        %v1878 = vsel %vm1877, %v1869, %v1874
        %v1879 = vrsqrt.pop %v1867
        %v1880 = vmul.f32 %v1879, %v1867
        %v1881 = vmul.f32 %v1880, %v1879
        %v1882 = vmul.f32 0.5, %v1881
        %v1883 = vsub.f32 1.5, %v1882
        %v1884 = vmul.f32 %v1879, %v1883
        %vm1885 = vweird.f32 %v1867
        %vm1886 = vweird.f32 %v1879
        %vm1887 = vmor %vm1885, %vm1886
        %v1888 = vsel %vm1887, %v1879, %v1884
        %v1889 = vperm.slane %v1878, 0
        %v1890 = vperm.slane %v1888, 0
        %v1891 = vmul.f32 %v1765, %v1889
        %v1892 = vmul.f32 %v1766, %v1890
        %v1894 = vperm.slane %v1645, 0
        %v1895 = vperm.slane %v1645, 1
        %v1898 = vmul.f32 %v1891, %v1894
        %v1899 = vmul.f32 %v1892, %v1895
        %v1901 = vperm.slane %v1646, 0
        %v1902 = vperm.slane %v1646, 1
        %v1905 = vadd.f32 %v1898, %v1901
        %v1906 = vadd.f32 %v1899, %v1902
        %v1907 = vmul.f32 %v1905, %v1905
        %v1908 = vmul.f32 %v1906, %v1906
        %v1909 = vmul.f32 %v1905, %v1907
        %v1910 = vmul.f32 %v1906, %v1908
        %v1911 = vmul.f32 %v1909, 0.044715
        %v1912 = vmul.f32 %v1910, 0.044715
        %v1913 = vadd.f32 %v1905, %v1911
        %v1914 = vadd.f32 %v1906, %v1912
        %v1915 = vmul.f32 %v1913, 0.7978846
        %v1916 = vmul.f32 %v1914, 0.7978846
        %v1917 = vtanh.pop %v1915
        %v1918 = vtanh.pop %v1916
        %v1919 = vadd.f32 %v1917, 1.0
        %v1920 = vadd.f32 %v1918, 1.0
        %v1921 = vmul.f32 %v1919, 0.5
        %v1922 = vmul.f32 %v1920, 0.5
        %v1923 = vmul.f32 %v1905, %v1921
        %v1924 = vmul.f32 %v1906, %v1922
        %v1926 = vsel %vm1272, %v1113, 0
        %1928 = vmatpush.msra.mxu0 0.0
        %1929 = vmatpush.msra.mxu0 0.0
        %1930 = vmatpush.msra.mxu0 0.0
        %1931 = vmatpush.msra.mxu0 0.0
        %1932 = vmatpush.msra.mxu0 0.0
        %1933 = vmatpush.msra.mxu0 0.0
        %1934 = vmatpush.msra.mxu0 0.0
        %1935 = vmatpush.msra.mxu0 0.0
        %1936 = vmatpush.msra.mxu0 0.0
        %1937 = vmatpush.msra.mxu0 0.0
        %1938 = vmatpush.msra.mxu0 0.0
        %1939 = vmatpush.msra.mxu0 0.0
        %1940 = vmatpush.msra.mxu0 0.0
        %1941 = vmatpush.msra.mxu0 0.0
        %1942 = vmatpush.msra.mxu0 0.0
        %1943 = vmatpush.msra.mxu0 %v1923
        %1944 = vmatmul.f32.gmra.mxu0 %v1926
        %v1945 = vpop.f32.mrf.mxu0
        %v1946 = vadd.f32 0.0, %v1945
        %1947 = vdwg.mxu0
        %1948 = vmatpush.msra.mxu0 0.0
        %1949 = vmatpush.msra.mxu0 0.0
        %1950 = vmatpush.msra.mxu0 0.0
        %1951 = vmatpush.msra.mxu0 0.0
        %1952 = vmatpush.msra.mxu0 0.0
        %1953 = vmatpush.msra.mxu0 0.0
        %1954 = vmatpush.msra.mxu0 0.0
        %1955 = vmatpush.msra.mxu0 0.0
        %1956 = vmatpush.msra.mxu0 0.0
        %1957 = vmatpush.msra.mxu0 0.0
        %1958 = vmatpush.msra.mxu0 0.0
        %1959 = vmatpush.msra.mxu0 0.0
        %1960 = vmatpush.msra.mxu0 0.0
        %1961 = vmatpush.msra.mxu0 0.0
        %1962 = vmatpush.msra.mxu0 0.0
        %1963 = vmatpush.msra.mxu0 %v1924
        %1964 = vmatmul.f32.gmra.mxu0 %v1926
        %v1965 = vpop.f32.mrf.mxu0
        %v1966 = vadd.f32 0.0, %v1965
        %1967 = vdwg.mxu0
        %v1969 = vsel %vm1272, %v1116, 0
        %1971 = vmatpush.msra.mxu0 0.0
        %1972 = vmatpush.msra.mxu0 0.0
        %1973 = vmatpush.msra.mxu0 0.0
        %1974 = vmatpush.msra.mxu0 0.0
        %1975 = vmatpush.msra.mxu0 0.0
        %1976 = vmatpush.msra.mxu0 0.0
        %1977 = vmatpush.msra.mxu0 0.0
        %1978 = vmatpush.msra.mxu0 0.0
        %1979 = vmatpush.msra.mxu0 0.0
        %1980 = vmatpush.msra.mxu0 0.0
        %1981 = vmatpush.msra.mxu0 0.0
        %1982 = vmatpush.msra.mxu0 0.0
        %1983 = vmatpush.msra.mxu0 0.0
        %1984 = vmatpush.msra.mxu0 0.0
        %1985 = vmatpush.msra.mxu0 0.0
        %1986 = vmatpush.msra.mxu0 %v1923
        %1987 = vmatmul.f32.gmra.mxu0 %v1969
        %v1988 = vpop.f32.mrf.mxu0
        %v1989 = vadd.f32 0.0, %v1988
        %1990 = vdwg.mxu0
        %1991 = vmatpush.msra.mxu0 0.0
        %1992 = vmatpush.msra.mxu0 0.0
        %1993 = vmatpush.msra.mxu0 0.0
        %1994 = vmatpush.msra.mxu0 0.0
        %1995 = vmatpush.msra.mxu0 0.0
        %1996 = vmatpush.msra.mxu0 0.0
        %1997 = vmatpush.msra.mxu0 0.0
        %1998 = vmatpush.msra.mxu0 0.0
        %1999 = vmatpush.msra.mxu0 0.0
        %2000 = vmatpush.msra.mxu0 0.0
        %2001 = vmatpush.msra.mxu0 0.0
        %2002 = vmatpush.msra.mxu0 0.0
        %2003 = vmatpush.msra.mxu0 0.0
        %2004 = vmatpush.msra.mxu0 0.0
        %2005 = vmatpush.msra.mxu0 0.0
        %2006 = vmatpush.msra.mxu0 %v1924
        %2007 = vmatmul.f32.gmra.mxu0 %v1969
        %v2008 = vpop.f32.mrf.mxu0
        %v2009 = vadd.f32 0.0, %v2008
        %2010 = vdwg.mxu0
        %v2011 = vld [vmem:[#allocation2] sm:$0xff]
        %v2012 = vld [vmem:[#allocation2 + $0x8] sm:$0xff]
        %v2013 = vld [vmem:[#allocation2 + $0x10] sm:$0xff]
        %v2014 = vld [vmem:[#allocation2 + $0x18] sm:$0xff]
        %v2015 = vld [vmem:[#allocation2 + $0x20] sm:$0xff]
        %v2016 = vld [vmem:[#allocation2 + $0x28] sm:$0xff]
        %v2017 = vld [vmem:[#allocation2 + $0x30] sm:$0xff]
        %v2018 = vld [vmem:[#allocation2 + $0x38] sm:$0xff]
        %v2019 = vld [vmem:[#allocation2 + $0x40] sm:$0xff]
        %v2020 = vld [vmem:[#allocation2 + $0x48] sm:$0xff]
        %v2021 = vld [vmem:[#allocation2 + $0x50] sm:$0xff]
        %v2022 = vld [vmem:[#allocation2 + $0x58] sm:$0xff]
        %v2023 = vld [vmem:[#allocation2 + $0x60] sm:$0xff]
        %v2024 = vld [vmem:[#allocation2 + $0x68] sm:$0xff]
        %v2025 = vld [vmem:[#allocation2 + $0x70] sm:$0xff]
        %v2026 = vld [vmem:[#allocation2 + $0x78] sm:$0xff]
        %v2027 = vld [vmem:[#allocation2 + $0x80] sm:$0xff]
        %v2028 = vld [vmem:[#allocation2 + $0x88] sm:$0xff]
        %v2029 = vld [vmem:[#allocation2 + $0x90] sm:$0xff]
        %v2030 = vld [vmem:[#allocation2 + $0x98] sm:$0xff]
        %v2031 = vld [vmem:[#allocation2 + $0xa0] sm:$0xff]
        %v2032 = vld [vmem:[#allocation2 + $0xa8] sm:$0xff]
        %v2033 = vld [vmem:[#allocation2 + $0xb0] sm:$0xff]
        %v2034 = vld [vmem:[#allocation2 + $0xb8] sm:$0xff]
        %v2035 = vld [vmem:[#allocation2 + $0xc0] sm:$0xff]
        %v2036 = vld [vmem:[#allocation2 + $0xc8] sm:$0xff]
        %v2037 = vld [vmem:[#allocation2 + $0xd0] sm:$0xff]
        %v2038 = vld [vmem:[#allocation2 + $0xd8] sm:$0xff]
        %v2039 = vld [vmem:[#allocation2 + $0xe0] sm:$0xff]
        %v2040 = vld [vmem:[#allocation2 + $0xe8] sm:$0xff]
        %v2041 = vld [vmem:[#allocation2 + $0xf0] sm:$0xff]
        %v2042 = vld [vmem:[#allocation2 + $0xf8] sm:$0xff]
        %v2043 = vld [vmem:[#allocation2 + $0x100] sm:$0xff]
        %v2044 = vld [vmem:[#allocation2 + $0x108] sm:$0xff]
        %v2045 = vld [vmem:[#allocation2 + $0x110] sm:$0xff]
        %v2046 = vld [vmem:[#allocation2 + $0x118] sm:$0xff]
        %v2047 = vld [vmem:[#allocation2 + $0x120] sm:$0xff]
        %v2048 = vld [vmem:[#allocation2 + $0x128] sm:$0xff]
        %v2049 = vld [vmem:[#allocation2 + $0x130] sm:$0xff]
        %v2050 = vld [vmem:[#allocation2 + $0x138] sm:$0xff]
        %s2051 = scalar_lea.vmem [#allocation2], 320
        %v2052 = vld [vmem:[%s2051] sm:$0xff]
        %v2053 = vld [vmem:[%s2051 + $0x8] sm:$0xff]
        %v2054 = vld [vmem:[%s2051 + $0x10] sm:$0xff]
        %v2055 = vld [vmem:[%s2051 + $0x18] sm:$0xff]
        %v2056 = vld [vmem:[%s2051 + $0x20] sm:$0xff]
        %v2057 = vld [vmem:[%s2051 + $0x28] sm:$0xff]
        %v2058 = vld [vmem:[%s2051 + $0x30] sm:$0xff]
        %v2059 = vld [vmem:[%s2051 + $0x38] sm:$0xff]
        %v2060 = vld [vmem:[%s2051 + $0x40] sm:$0xff]
        %v2061 = vld [vmem:[%s2051 + $0x48] sm:$0xff]
        %v2062 = vld [vmem:[%s2051 + $0x50] sm:$0xff]
        %v2063 = vld [vmem:[%s2051 + $0x58] sm:$0xff]
        %v2064 = vld [vmem:[%s2051 + $0x60] sm:$0xff]
        %v2065 = vld [vmem:[%s2051 + $0x68] sm:$0xff]
        %v2066 = vld [vmem:[%s2051 + $0x70] sm:$0xff]
        %v2067 = vld [vmem:[%s2051 + $0x78] sm:$0xff]
        %v2068 = vld [vmem:[%s2051 + $0x80] sm:$0xff]
        %v2069 = vld [vmem:[%s2051 + $0x88] sm:$0xff]
        %v2070 = vld [vmem:[%s2051 + $0x90] sm:$0xff]
        %v2071 = vld [vmem:[%s2051 + $0x98] sm:$0xff]
        %v2072 = vld [vmem:[%s2051 + $0xa0] sm:$0xff]
        %v2073 = vld [vmem:[%s2051 + $0xa8] sm:$0xff]
        %v2074 = vld [vmem:[%s2051 + $0xb0] sm:$0xff]
        %v2075 = vld [vmem:[%s2051 + $0xb8] sm:$0xff]
        %v2076 = vld [vmem:[%s2051 + $0xc0] sm:$0xff]
        %v2077 = vld [vmem:[%s2051 + $0xc8] sm:$0xff]
        %v2078 = vld [vmem:[%s2051 + $0xd0] sm:$0xff]
        %v2079 = vld [vmem:[%s2051 + $0xd8] sm:$0xff]
        %v2080 = vld [vmem:[%s2051 + $0xe0] sm:$0xff]
        %v2081 = vld [vmem:[%s2051 + $0xe8] sm:$0xff]
        %v2082 = vld [vmem:[%s2051 + $0xf0] sm:$0xff]
        %v2083 = vld [vmem:[%s2051 + $0xf8] sm:$0xff]
        %v2084 = vld [vmem:[%s2051 + $0x100] sm:$0xff]
        %v2085 = vld [vmem:[%s2051 + $0x108] sm:$0xff]
        %v2086 = vld [vmem:[%s2051 + $0x110] sm:$0xff]
        %v2087 = vld [vmem:[%s2051 + $0x118] sm:$0xff]
        %v2088 = vld [vmem:[%s2051 + $0x120] sm:$0xff]
        %v2089 = vld [vmem:[%s2051 + $0x128] sm:$0xff]
        %v2090 = vld [vmem:[%s2051 + $0x130] sm:$0xff]
        %v2091 = vld [vmem:[%s2051 + $0x138] sm:$0xff]
        %v2093 = vsel %vm1653, %v1924, 0
        %2095 = vmatpush.msra.mxu0 %v2082
        %2096 = vmatpush.msra.mxu0 %v2080
        %2097 = vmatpush.msra.mxu0 %v2078
        %2098 = vmatpush.msra.mxu0 %v2076
        %2099 = vmatpush.msra.mxu0 %v2074
        %2100 = vmatpush.msra.mxu0 %v2072
        %2101 = vmatpush.msra.mxu0 %v2070
        %2102 = vmatpush.msra.mxu0 %v2068
        %2103 = vmatpush.msra.mxu0 %v2066
        %2104 = vmatpush.msra.mxu0 %v2064
        %2105 = vmatpush.msra.mxu0 %v2062
        %2106 = vmatpush.msra.mxu0 %v2060
        %2107 = vmatpush.msra.mxu0 %v2058
        %2108 = vmatpush.msra.mxu0 %v2056
        %2109 = vmatpush.msra.mxu0 %v2054
        %2110 = vmatpush.msra.mxu0 %v2052
        %2111 = vmatmul.f32.gmra.mxu0 %v1923
        %v2112 = vpop.f32.mrf.mxu0
        %v2113 = vadd.f32 0.0, %v2112
        %2114 = vdwg.mxu0
        %2115 = vmatpush.msra.mxu0 0.0
        %2116 = vmatpush.msra.mxu0 0.0
        %2117 = vmatpush.msra.mxu0 0.0
        %2118 = vmatpush.msra.mxu0 0.0
        %2119 = vmatpush.msra.mxu0 0.0
        %2120 = vmatpush.msra.mxu0 0.0
        %2121 = vmatpush.msra.mxu0 0.0
        %2122 = vmatpush.msra.mxu0 0.0
        %2123 = vmatpush.msra.mxu0 0.0
        %2124 = vmatpush.msra.mxu0 0.0
        %2125 = vmatpush.msra.mxu0 0.0
        %2126 = vmatpush.msra.mxu0 0.0
        %2127 = vmatpush.msra.mxu0 %v2090
        %2128 = vmatpush.msra.mxu0 %v2088
        %2129 = vmatpush.msra.mxu0 %v2086
        %2130 = vmatpush.msra.mxu0 %v2084
        %2131 = vmatmul.f32.gmra.mxu0 %v2093
        %v2132 = vpop.f32.mrf.mxu0
        %v2133 = vadd.f32 %v2113, %v2132
        %2134 = vdwg.mxu0
        %2135 = vmatpush.msra.mxu0 %v2083
        %2136 = vmatpush.msra.mxu0 %v2081
        %2137 = vmatpush.msra.mxu0 %v2079
        %2138 = vmatpush.msra.mxu0 %v2077
        %2139 = vmatpush.msra.mxu0 %v2075
        %2140 = vmatpush.msra.mxu0 %v2073
        %2141 = vmatpush.msra.mxu0 %v2071
        %2142 = vmatpush.msra.mxu0 %v2069
        %2143 = vmatpush.msra.mxu0 %v2067
        %2144 = vmatpush.msra.mxu0 %v2065
        %2145 = vmatpush.msra.mxu0 %v2063
        %2146 = vmatpush.msra.mxu0 %v2061
        %2147 = vmatpush.msra.mxu0 %v2059
        %2148 = vmatpush.msra.mxu0 %v2057
        %2149 = vmatpush.msra.mxu0 %v2055
        %2150 = vmatpush.msra.mxu0 %v2053
        %2151 = vmatmul.f32.gmra.mxu0 %v1923
        %v2152 = vpop.f32.mrf.mxu0
        %v2153 = vadd.f32 0.0, %v2152
        %2154 = vdwg.mxu0
        %2155 = vmatpush.msra.mxu0 0.0
        %2156 = vmatpush.msra.mxu0 0.0
        %2157 = vmatpush.msra.mxu0 0.0
        %2158 = vmatpush.msra.mxu0 0.0
        %2159 = vmatpush.msra.mxu0 0.0
        %2160 = vmatpush.msra.mxu0 0.0
        %2161 = vmatpush.msra.mxu0 0.0
        %2162 = vmatpush.msra.mxu0 0.0
        %2163 = vmatpush.msra.mxu0 0.0
        %2164 = vmatpush.msra.mxu0 0.0
        %2165 = vmatpush.msra.mxu0 0.0
        %2166 = vmatpush.msra.mxu0 0.0
        %2167 = vmatpush.msra.mxu0 %v2091
        %2168 = vmatpush.msra.mxu0 %v2089
        %2169 = vmatpush.msra.mxu0 %v2087
        %2170 = vmatpush.msra.mxu0 %v2085
        %2171 = vmatmul.f32.gmra.mxu0 %v2093
        %v2172 = vpop.f32.mrf.mxu0
        %v2173 = vadd.f32 %v2153, %v2172
        %2174 = vdwg.mxu0
        %v2176 = vsel %vm1653, %v1966, 0
        %2178 = vmatpush.msra.mxu0 %v2041
        %2179 = vmatpush.msra.mxu0 %v2039
        %2180 = vmatpush.msra.mxu0 %v2037
        %2181 = vmatpush.msra.mxu0 %v2035
        %2182 = vmatpush.msra.mxu0 %v2033
        %2183 = vmatpush.msra.mxu0 %v2031
        %2184 = vmatpush.msra.mxu0 %v2029
        %2185 = vmatpush.msra.mxu0 %v2027
        %2186 = vmatpush.msra.mxu0 %v2025
        %2187 = vmatpush.msra.mxu0 %v2023
        %2188 = vmatpush.msra.mxu0 %v2021
        %2189 = vmatpush.msra.mxu0 %v2019
        %2190 = vmatpush.msra.mxu0 %v2017
        %2191 = vmatpush.msra.mxu0 %v2015
        %2192 = vmatpush.msra.mxu0 %v2013
        %2193 = vmatpush.msra.mxu0 %v2011
        %2194 = vmatmul.f32.gmra.mxu0 %v1946
        %v2195 = vpop.f32.mrf.mxu0
        %v2196 = vadd.f32 %v2133, %v2195
        %2197 = vdwg.mxu0
        %2198 = vmatpush.msra.mxu0 0.0
        %2199 = vmatpush.msra.mxu0 0.0
        %2200 = vmatpush.msra.mxu0 0.0
        %2201 = vmatpush.msra.mxu0 0.0
        %2202 = vmatpush.msra.mxu0 0.0
        %2203 = vmatpush.msra.mxu0 0.0
        %2204 = vmatpush.msra.mxu0 0.0
        %2205 = vmatpush.msra.mxu0 0.0
        %2206 = vmatpush.msra.mxu0 0.0
        %2207 = vmatpush.msra.mxu0 0.0
        %2208 = vmatpush.msra.mxu0 0.0
        %2209 = vmatpush.msra.mxu0 0.0
        %2210 = vmatpush.msra.mxu0 %v2049
        %2211 = vmatpush.msra.mxu0 %v2047
        %2212 = vmatpush.msra.mxu0 %v2045
        %2213 = vmatpush.msra.mxu0 %v2043
        %2214 = vmatmul.f32.gmra.mxu0 %v2176
        %v2215 = vpop.f32.mrf.mxu0
        %v2216 = vadd.f32 %v2196, %v2215
        %2217 = vdwg.mxu0
        %2218 = vmatpush.msra.mxu0 %v2042
        %2219 = vmatpush.msra.mxu0 %v2040
        %2220 = vmatpush.msra.mxu0 %v2038
        %2221 = vmatpush.msra.mxu0 %v2036
        %2222 = vmatpush.msra.mxu0 %v2034
        %2223 = vmatpush.msra.mxu0 %v2032
        %2224 = vmatpush.msra.mxu0 %v2030
        %2225 = vmatpush.msra.mxu0 %v2028
        %2226 = vmatpush.msra.mxu0 %v2026
        %2227 = vmatpush.msra.mxu0 %v2024
        %2228 = vmatpush.msra.mxu0 %v2022
        %2229 = vmatpush.msra.mxu0 %v2020
        %2230 = vmatpush.msra.mxu0 %v2018
        %2231 = vmatpush.msra.mxu0 %v2016
        %2232 = vmatpush.msra.mxu0 %v2014
        %2233 = vmatpush.msra.mxu0 %v2012
        %2234 = vmatmul.f32.gmra.mxu0 %v1946
        %v2235 = vpop.f32.mrf.mxu0
        %v2236 = vadd.f32 %v2173, %v2235
        %2237 = vdwg.mxu0
        %2238 = vmatpush.msra.mxu0 0.0
        %2239 = vmatpush.msra.mxu0 0.0
        %2240 = vmatpush.msra.mxu0 0.0
        %2241 = vmatpush.msra.mxu0 0.0
        %2242 = vmatpush.msra.mxu0 0.0
        %2243 = vmatpush.msra.mxu0 0.0
        %2244 = vmatpush.msra.mxu0 0.0
        %2245 = vmatpush.msra.mxu0 0.0
        %2246 = vmatpush.msra.mxu0 0.0
        %2247 = vmatpush.msra.mxu0 0.0
        %2248 = vmatpush.msra.mxu0 0.0
        %2249 = vmatpush.msra.mxu0 0.0
        %2250 = vmatpush.msra.mxu0 %v2050
        %2251 = vmatpush.msra.mxu0 %v2048
        %2252 = vmatpush.msra.mxu0 %v2046
        %2253 = vmatpush.msra.mxu0 %v2044
        %2254 = vmatmul.f32.gmra.mxu0 %v2176
        %v2255 = vpop.f32.mrf.mxu0
        %v2256 = vadd.f32 %v2236, %v2255
        %2257 = vdwg.mxu0
        %s2258 = scalar_lea.vmem [#allocation2], 640
        %v2259 = vld [vmem:[%s2258] sm:$0xff]
        %v2260 = vld [vmem:[%s2258 + $0x8] sm:$0xff]
        %v2261 = vld [vmem:[%s2258 + $0x10] sm:$0xff]
        %v2262 = vld [vmem:[%s2258 + $0x18] sm:$0xff]
        %v2263 = vld [vmem:[%s2258 + $0x20] sm:$0xff]
        %v2264 = vld [vmem:[%s2258 + $0x28] sm:$0xff]
        %v2265 = vld [vmem:[%s2258 + $0x30] sm:$0xff]
        %v2266 = vld [vmem:[%s2258 + $0x38] sm:$0xff]
        %v2267 = vld [vmem:[%s2258 + $0x40] sm:$0xff]
        %v2268 = vld [vmem:[%s2258 + $0x48] sm:$0xff]
        %v2269 = vld [vmem:[%s2258 + $0x50] sm:$0xff]
        %v2270 = vld [vmem:[%s2258 + $0x58] sm:$0xff]
        %v2271 = vld [vmem:[%s2258 + $0x60] sm:$0xff]
        %v2272 = vld [vmem:[%s2258 + $0x68] sm:$0xff]
        %v2273 = vld [vmem:[%s2258 + $0x70] sm:$0xff]
        %v2274 = vld [vmem:[%s2258 + $0x78] sm:$0xff]
        %v2275 = vld [vmem:[%s2258 + $0x80] sm:$0xff]
        %v2276 = vld [vmem:[%s2258 + $0x88] sm:$0xff]
        %v2277 = vld [vmem:[%s2258 + $0x90] sm:$0xff]
        %v2278 = vld [vmem:[%s2258 + $0x98] sm:$0xff]
        %v2279 = vld [vmem:[%s2258 + $0xa0] sm:$0xff]
        %v2280 = vld [vmem:[%s2258 + $0xa8] sm:$0xff]
        %v2281 = vld [vmem:[%s2258 + $0xb0] sm:$0xff]
        %v2282 = vld [vmem:[%s2258 + $0xb8] sm:$0xff]
        %v2283 = vld [vmem:[%s2258 + $0xc0] sm:$0xff]
        %v2284 = vld [vmem:[%s2258 + $0xc8] sm:$0xff]
        %v2285 = vld [vmem:[%s2258 + $0xd0] sm:$0xff]
        %v2286 = vld [vmem:[%s2258 + $0xd8] sm:$0xff]
        %v2287 = vld [vmem:[%s2258 + $0xe0] sm:$0xff]
        %v2288 = vld [vmem:[%s2258 + $0xe8] sm:$0xff]
        %v2289 = vld [vmem:[%s2258 + $0xf0] sm:$0xff]
        %v2290 = vld [vmem:[%s2258 + $0xf8] sm:$0xff]
        %v2291 = vld [vmem:[%s2258 + $0x100] sm:$0xff]
        %v2292 = vld [vmem:[%s2258 + $0x108] sm:$0xff]
        %v2293 = vld [vmem:[%s2258 + $0x110] sm:$0xff]
        %v2294 = vld [vmem:[%s2258 + $0x118] sm:$0xff]
        %v2295 = vld [vmem:[%s2258 + $0x120] sm:$0xff]
        %v2296 = vld [vmem:[%s2258 + $0x128] sm:$0xff]
        %v2297 = vld [vmem:[%s2258 + $0x130] sm:$0xff]
        %v2298 = vld [vmem:[%s2258 + $0x138] sm:$0xff]
        %v2300 = vsel %vm1653, %v2009, 0
        %2302 = vmatpush.msra.mxu0 %v2289
        %2303 = vmatpush.msra.mxu0 %v2287
        %2304 = vmatpush.msra.mxu0 %v2285
        %2305 = vmatpush.msra.mxu0 %v2283
        %2306 = vmatpush.msra.mxu0 %v2281
        %2307 = vmatpush.msra.mxu0 %v2279
        %2308 = vmatpush.msra.mxu0 %v2277
        %2309 = vmatpush.msra.mxu0 %v2275
        %2310 = vmatpush.msra.mxu0 %v2273
        %2311 = vmatpush.msra.mxu0 %v2271
        %2312 = vmatpush.msra.mxu0 %v2269
        %2313 = vmatpush.msra.mxu0 %v2267
        %2314 = vmatpush.msra.mxu0 %v2265
        %2315 = vmatpush.msra.mxu0 %v2263
        %2316 = vmatpush.msra.mxu0 %v2261
        %2317 = vmatpush.msra.mxu0 %v2259
        %2318 = vmatmul.f32.gmra.mxu0 %v1989
        %v2319 = vpop.f32.mrf.mxu0
        %v2320 = vadd.f32 0.0, %v2319
        %2321 = vdwg.mxu0
        %2322 = vmatpush.msra.mxu0 0.0
        %2323 = vmatpush.msra.mxu0 0.0
        %2324 = vmatpush.msra.mxu0 0.0
        %2325 = vmatpush.msra.mxu0 0.0
        %2326 = vmatpush.msra.mxu0 0.0
        %2327 = vmatpush.msra.mxu0 0.0
        %2328 = vmatpush.msra.mxu0 0.0
        %2329 = vmatpush.msra.mxu0 0.0
        %2330 = vmatpush.msra.mxu0 0.0
        %2331 = vmatpush.msra.mxu0 0.0
        %2332 = vmatpush.msra.mxu0 0.0
        %2333 = vmatpush.msra.mxu0 0.0
        %2334 = vmatpush.msra.mxu0 %v2297
        %2335 = vmatpush.msra.mxu0 %v2295
        %2336 = vmatpush.msra.mxu0 %v2293
        %2337 = vmatpush.msra.mxu0 %v2291
        %2338 = vmatmul.f32.gmra.mxu0 %v2300
        %v2339 = vpop.f32.mrf.mxu0
        %v2340 = vadd.f32 %v2320, %v2339
        %2341 = vdwg.mxu0
        %2342 = vmatpush.msra.mxu0 %v2290
        %2343 = vmatpush.msra.mxu0 %v2288
        %2344 = vmatpush.msra.mxu0 %v2286
        %2345 = vmatpush.msra.mxu0 %v2284
        %2346 = vmatpush.msra.mxu0 %v2282
        %2347 = vmatpush.msra.mxu0 %v2280
        %2348 = vmatpush.msra.mxu0 %v2278
        %2349 = vmatpush.msra.mxu0 %v2276
        %2350 = vmatpush.msra.mxu0 %v2274
        %2351 = vmatpush.msra.mxu0 %v2272
        %2352 = vmatpush.msra.mxu0 %v2270
        %2353 = vmatpush.msra.mxu0 %v2268
        %2354 = vmatpush.msra.mxu0 %v2266
        %2355 = vmatpush.msra.mxu0 %v2264
        %2356 = vmatpush.msra.mxu0 %v2262
        %2357 = vmatpush.msra.mxu0 %v2260
        %2358 = vmatmul.f32.gmra.mxu0 %v1989
        %v2359 = vpop.f32.mrf.mxu0
        %v2360 = vadd.f32 0.0, %v2359
        %2361 = vdwg.mxu0
        %2362 = vmatpush.msra.mxu0 0.0
        %2363 = vmatpush.msra.mxu0 0.0
        %2364 = vmatpush.msra.mxu0 0.0
        %2365 = vmatpush.msra.mxu0 0.0
        %2366 = vmatpush.msra.mxu0 0.0
        %2367 = vmatpush.msra.mxu0 0.0
        %2368 = vmatpush.msra.mxu0 0.0
        %2369 = vmatpush.msra.mxu0 0.0
        %2370 = vmatpush.msra.mxu0 0.0
        %2371 = vmatpush.msra.mxu0 0.0
        %2372 = vmatpush.msra.mxu0 0.0
        %2373 = vmatpush.msra.mxu0 0.0
        %2374 = vmatpush.msra.mxu0 %v2298
        %2375 = vmatpush.msra.mxu0 %v2296
        %2376 = vmatpush.msra.mxu0 %v2294
        %2377 = vmatpush.msra.mxu0 %v2292
        %2378 = vmatmul.f32.gmra.mxu0 %v2300
        %v2379 = vpop.f32.mrf.mxu0
        %v2380 = vadd.f32 %v2360, %v2379
        %2381 = vdwg.mxu0
        %v2382 = vadd.f32 %v2216, %v2340
        %v2383 = vadd.f32 %v2256, %v2380
        %v2384 = vld [vmem:[%s37] sm:$0x3]
        %v2386 = vperm.slane %v2384, 0
        %v2387 = vperm.slane %v2384, 1
        %v2390 = vadd.f32 %v2382, %v2386
        %v2391 = vadd.f32 %v2383, %v2387
        %v2392 = vld [vmem:[%s39] sm:$0x3]
        %v2393 = vld [vmem:[%s41] sm:$0x3]
        %v2394 = vrot.slane %v2390, 4
        %v2395 = vadd.f32 %v2390, %v2394
        %v2396 = vrot.slane %v2395, 2
        %v2397 = vadd.f32 %v2395, %v2396
        %v2398 = vrot.slane %v2397, 1
        %v2399 = vadd.f32 %v2397, %v2398
        %v2400 = vsel %vm1653, %v2391, 0.0
        %v2401 = vrot.slane %v2400, 4
        %v2402 = vadd.f32 %v2400, %v2401
        %v2403 = vrot.slane %v2402, 2
        %v2404 = vadd.f32 %v2402, %v2403
        %v2405 = vrot.slane %v2404, 1
        %v2406 = vadd.f32 %v2404, %v2405
        %v2408 = vsel %vm1653, %v2406, 0
        %2410 = vmatpush.msra.mxu0 %v1056
        %2411 = vmatpush.msra.mxu0 %v1055
        %2412 = vmatpush.msra.mxu0 %v1054
        %2413 = vmatpush.msra.mxu0 %v1053
        %2414 = vmatpush.msra.mxu0 %v1052
        %2415 = vmatpush.msra.mxu0 %v1051
        %2416 = vmatpush.msra.mxu0 %v1050
        %2417 = vmatpush.msra.mxu0 %v1049
        %2418 = vmatpush.msra.mxu0 %v1048
        %2419 = vmatpush.msra.mxu0 %v1047
        %2420 = vmatpush.msra.mxu0 %v1046
        %2421 = vmatpush.msra.mxu0 %v1045
        %2422 = vmatpush.msra.mxu0 %v1044
        %2423 = vmatpush.msra.mxu0 %v1043
        %2424 = vmatpush.msra.mxu0 %v1042
        %2425 = vmatpush.msra.mxu0 %v1041
        %2426 = vmatmul.f32.gmra.mxu0 %v2399
        %v2427 = vpop.f32.mrf.mxu0
        %v2428 = vadd.f32 0.0, %v2427
        %2429 = vdwg.mxu0
        %2430 = vmatpush.msra.mxu0 0.0
        %2431 = vmatpush.msra.mxu0 0.0
        %2432 = vmatpush.msra.mxu0 0.0
        %2433 = vmatpush.msra.mxu0 0.0
        %2434 = vmatpush.msra.mxu0 0.0
        %2435 = vmatpush.msra.mxu0 0.0
        %2436 = vmatpush.msra.mxu0 0.0
        %2437 = vmatpush.msra.mxu0 0.0
        %2438 = vmatpush.msra.mxu0 0.0
        %2439 = vmatpush.msra.mxu0 0.0
        %2440 = vmatpush.msra.mxu0 0.0
        %2441 = vmatpush.msra.mxu0 0.0
        %2442 = vmatpush.msra.mxu0 %v1060
        %2443 = vmatpush.msra.mxu0 %v1059
        %2444 = vmatpush.msra.mxu0 %v1058
        %2445 = vmatpush.msra.mxu0 %v1057
        %2446 = vmatmul.f32.gmra.mxu0 %v2408
        %v2447 = vpop.f32.mrf.mxu0
        %v2448 = vadd.f32 %v2428, %v2447
        %2449 = vdwg.mxu0
        %v2450 = vmul.f32 %v2448, %v1710
        %v2452 = vsel %vm1712, %v2450, 0
        %2454 = vmatpush.msra.mxu0 0.0
        %2455 = vmatpush.msra.mxu0 0.0
        %2456 = vmatpush.msra.mxu0 0.0
        %2457 = vmatpush.msra.mxu0 0.0
        %2458 = vmatpush.msra.mxu0 0.0
        %2459 = vmatpush.msra.mxu0 0.0
        %2460 = vmatpush.msra.mxu0 0.0
        %2461 = vmatpush.msra.mxu0 0.0
        %2462 = vmatpush.msra.mxu0 0.0
        %2463 = vmatpush.msra.mxu0 0.0
        %2464 = vmatpush.msra.mxu0 0.0
        %2465 = vmatpush.msra.mxu0 0.0
        %2466 = vmatpush.msra.mxu0 0.0
        %2467 = vmatpush.msra.mxu0 0.0
        %2468 = vmatpush.msra.mxu0 %v1718
        %2469 = vmatpush.msra.mxu0 %v1065
        %2470 = vmatmul.f32.gmra.mxu0 %v2452
        %v2471 = vpop.f32.mrf.mxu0
        %v2472 = vadd.f32 0.0, %v2471
        %2473 = vdwg.mxu0
        %2474 = vmatpush.msra.mxu0 0.0
        %2475 = vmatpush.msra.mxu0 0.0
        %2476 = vmatpush.msra.mxu0 0.0
        %2477 = vmatpush.msra.mxu0 0.0
        %2478 = vmatpush.msra.mxu0 0.0
        %2479 = vmatpush.msra.mxu0 0.0
        %2480 = vmatpush.msra.mxu0 0.0
        %2481 = vmatpush.msra.mxu0 0.0
        %2482 = vmatpush.msra.mxu0 0.0
        %2483 = vmatpush.msra.mxu0 0.0
        %2484 = vmatpush.msra.mxu0 0.0
        %2485 = vmatpush.msra.mxu0 0.0
        %2486 = vmatpush.msra.mxu0 0.0
        %2487 = vmatpush.msra.mxu0 0.0
        %2488 = vmatpush.msra.mxu0 %v1721
        %2489 = vmatpush.msra.mxu0 %v1066
        %2490 = vmatmul.f32.gmra.mxu0 %v2452
        %v2491 = vpop.f32.mrf.mxu0
        %v2492 = vadd.f32 0.0, %v2491
        %2493 = vdwg.mxu0
        %v2494 = vperm.slane %v2472, 0
        %v2495 = vperm.slane %v2492, 0
        %v2496 = vsub.f32 %v2390, %v2494
        %v2497 = vsub.f32 %v2391, %v2495
        %v2498 = vmul.f32 %v2496, %v2496
        %v2499 = vmul.f32 %v2497, %v2497
        %v2500 = vrot.slane %v2498, 4
        %v2501 = vadd.f32 %v2498, %v2500
        %v2502 = vrot.slane %v2501, 2
        %v2503 = vadd.f32 %v2501, %v2502
        %v2504 = vrot.slane %v2503, 1
        %v2505 = vadd.f32 %v2503, %v2504
        %v2506 = vsel %vm1653, %v2499, 0.0
        %v2507 = vrot.slane %v2506, 4
        %v2508 = vadd.f32 %v2506, %v2507
        %v2509 = vrot.slane %v2508, 2
        %v2510 = vadd.f32 %v2508, %v2509
        %v2511 = vrot.slane %v2510, 1
        %v2512 = vadd.f32 %v2510, %v2511
        %v2514 = vsel %vm1653, %v2512, 0
        %2516 = vmatpush.msra.mxu0 %v1056
        %2517 = vmatpush.msra.mxu0 %v1055
        %2518 = vmatpush.msra.mxu0 %v1054
        %2519 = vmatpush.msra.mxu0 %v1053
        %2520 = vmatpush.msra.mxu0 %v1052
        %2521 = vmatpush.msra.mxu0 %v1051
        %2522 = vmatpush.msra.mxu0 %v1050
        %2523 = vmatpush.msra.mxu0 %v1049
        %2524 = vmatpush.msra.mxu0 %v1048
        %2525 = vmatpush.msra.mxu0 %v1047
        %2526 = vmatpush.msra.mxu0 %v1046
        %2527 = vmatpush.msra.mxu0 %v1045
        %2528 = vmatpush.msra.mxu0 %v1044
        %2529 = vmatpush.msra.mxu0 %v1043
        %2530 = vmatpush.msra.mxu0 %v1042
        %2531 = vmatpush.msra.mxu0 %v1041
        %2532 = vmatmul.f32.gmra.mxu0 %v2505
        %v2533 = vpop.f32.mrf.mxu0
        %v2534 = vadd.f32 0.0, %v2533
        %2535 = vdwg.mxu0
        %2536 = vmatpush.msra.mxu0 0.0
        %2537 = vmatpush.msra.mxu0 0.0
        %2538 = vmatpush.msra.mxu0 0.0
        %2539 = vmatpush.msra.mxu0 0.0
        %2540 = vmatpush.msra.mxu0 0.0
        %2541 = vmatpush.msra.mxu0 0.0
        %2542 = vmatpush.msra.mxu0 0.0
        %2543 = vmatpush.msra.mxu0 0.0
        %2544 = vmatpush.msra.mxu0 0.0
        %2545 = vmatpush.msra.mxu0 0.0
        %2546 = vmatpush.msra.mxu0 0.0
        %2547 = vmatpush.msra.mxu0 0.0
        %2548 = vmatpush.msra.mxu0 %v1060
        %2549 = vmatpush.msra.mxu0 %v1059
        %2550 = vmatpush.msra.mxu0 %v1058
        %2551 = vmatpush.msra.mxu0 %v1057
        %2552 = vmatmul.f32.gmra.mxu0 %v2514
        %v2553 = vpop.f32.mrf.mxu0
        %v2554 = vadd.f32 %v2534, %v2553
        %2555 = vdwg.mxu0
        %v2556 = vmul.f32 %v2554, %v1710
        %v2558 = vsel %vm1712, %v2556, 0
        %2560 = vmatpush.msra.mxu0 0.0
        %2561 = vmatpush.msra.mxu0 0.0
        %2562 = vmatpush.msra.mxu0 0.0
        %2563 = vmatpush.msra.mxu0 0.0
        %2564 = vmatpush.msra.mxu0 0.0
        %2565 = vmatpush.msra.mxu0 0.0
        %2566 = vmatpush.msra.mxu0 0.0
        %2567 = vmatpush.msra.mxu0 0.0
        %2568 = vmatpush.msra.mxu0 0.0
        %2569 = vmatpush.msra.mxu0 0.0
        %2570 = vmatpush.msra.mxu0 0.0
        %2571 = vmatpush.msra.mxu0 0.0
        %2572 = vmatpush.msra.mxu0 0.0
        %2573 = vmatpush.msra.mxu0 0.0
        %2574 = vmatpush.msra.mxu0 %v1718
        %2575 = vmatpush.msra.mxu0 %v1065
        %2576 = vmatmul.f32.gmra.mxu0 %v2558
        %v2577 = vpop.f32.mrf.mxu0
        %v2578 = vadd.f32 1e-05, %v2577
        %2579 = vdwg.mxu0
        %2580 = vmatpush.msra.mxu0 0.0
        %2581 = vmatpush.msra.mxu0 0.0
        %2582 = vmatpush.msra.mxu0 0.0
        %2583 = vmatpush.msra.mxu0 0.0
        %2584 = vmatpush.msra.mxu0 0.0
        %2585 = vmatpush.msra.mxu0 0.0
        %2586 = vmatpush.msra.mxu0 0.0
        %2587 = vmatpush.msra.mxu0 0.0
        %2588 = vmatpush.msra.mxu0 0.0
        %2589 = vmatpush.msra.mxu0 0.0
        %2590 = vmatpush.msra.mxu0 0.0
        %2591 = vmatpush.msra.mxu0 0.0
        %2592 = vmatpush.msra.mxu0 0.0
        %2593 = vmatpush.msra.mxu0 0.0
        %2594 = vmatpush.msra.mxu0 %v1721
        %2595 = vmatpush.msra.mxu0 %v1066
        %2596 = vmatmul.f32.gmra.mxu0 %v2558
        %v2597 = vpop.f32.mrf.mxu0
        %v2598 = vadd.f32 1e-05, %v2597
        %2599 = vdwg.mxu0
        %v2600 = vrsqrt.pop %v2578
        %v2601 = vmul.f32 %v2600, %v2578
        %v2602 = vmul.f32 %v2601, %v2600
        %v2603 = vmul.f32 0.5, %v2602
        %v2604 = vsub.f32 1.5, %v2603
        %v2605 = vmul.f32 %v2600, %v2604
        %vm2606 = vweird.f32 %v2578
        %vm2607 = vweird.f32 %v2600
        %vm2608 = vmor %vm2606, %vm2607
        %v2609 = vsel %vm2608, %v2600, %v2605
        %v2610 = vrsqrt.pop %v2598
        %v2611 = vmul.f32 %v2610, %v2598
        %v2612 = vmul.f32 %v2611, %v2610
        %v2613 = vmul.f32 0.5, %v2612
        %v2614 = vsub.f32 1.5, %v2613
        %v2615 = vmul.f32 %v2610, %v2614
        %vm2616 = vweird.f32 %v2598
        %vm2617 = vweird.f32 %v2610
        %vm2618 = vmor %vm2616, %vm2617
        %v2619 = vsel %vm2618, %v2610, %v2615
        %v2620 = vperm.slane %v2609, 0
        %v2621 = vperm.slane %v2619, 0
        %v2622 = vmul.f32 %v2496, %v2620
        %v2623 = vmul.f32 %v2497, %v2621
        %v2625 = vperm.slane %v2392, 0
        %v2626 = vperm.slane %v2392, 1
        %v2629 = vmul.f32 %v2622, %v2625
        %v2630 = vmul.f32 %v2623, %v2626
        %v2632 = vperm.slane %v2393, 0
        %v2633 = vperm.slane %v2393, 1
        %v2636 = vadd.f32 %v2629, %v2632
        %v2637 = vadd.f32 %v2630, %v2633
        %v2638 = vmul.f32 %v2636, %v2636
        %v2639 = vmul.f32 %v2637, %v2637
        %v2640 = vmul.f32 %v2636, %v2638
        %v2641 = vmul.f32 %v2637, %v2639
        %v2642 = vmul.f32 %v2640, 0.044715
        %v2643 = vmul.f32 %v2641, 0.044715
        %v2644 = vadd.f32 %v2636, %v2642
        %v2645 = vadd.f32 %v2637, %v2643
        %v2646 = vmul.f32 %v2644, 0.7978846
        %v2647 = vmul.f32 %v2645, 0.7978846
        %v2648 = vtanh.pop %v2646
        %v2649 = vtanh.pop %v2647
        %v2650 = vadd.f32 %v2648, 1.0
        %v2651 = vadd.f32 %v2649, 1.0
        %v2652 = vmul.f32 %v2650, 0.5
        %v2653 = vmul.f32 %v2651, 0.5
        %v2654 = vmul.f32 %v2636, %v2652
        %v2655 = vmul.f32 %v2637, %v2653
        %v2656 = vld [vmem:[%s43] sm:$0xff]
        %v2657 = vld [vmem:[%s43 + $0x8] sm:$0xff]
        %v2658 = vld [vmem:[%s43 + $0x10] sm:$0xff]
        %v2659 = vld [vmem:[%s43 + $0x18] sm:$0xff]
        %v2660 = vld [vmem:[%s43 + $0x20] sm:$0xff]
        %v2661 = vld [vmem:[%s43 + $0x28] sm:$0xff]
        %v2662 = vld [vmem:[%s43 + $0x30] sm:$0xff]
        %v2663 = vld [vmem:[%s43 + $0x38] sm:$0xff]
        %v2664 = vld [vmem:[%s43 + $0x40] sm:$0xff]
        %v2665 = vld [vmem:[%s43 + $0x48] sm:$0xff]
        %v2666 = vld [vmem:[%s43 + $0x50] sm:$0xff]
        %v2667 = vld [vmem:[%s43 + $0x58] sm:$0xff]
        %v2668 = vld [vmem:[%s43 + $0x60] sm:$0xff]
        %v2669 = vld [vmem:[%s43 + $0x68] sm:$0xff]
        %v2670 = vld [vmem:[%s43 + $0x70] sm:$0xff]
        %v2671 = vld [vmem:[%s43 + $0x78] sm:$0xff]
        %v2672 = vld [vmem:[%s43 + $0x80] sm:$0xff]
        %v2673 = vld [vmem:[%s43 + $0x88] sm:$0xff]
        %v2674 = vld [vmem:[%s43 + $0x90] sm:$0xff]
        %v2675 = vld [vmem:[%s43 + $0x98] sm:$0xff]
        %v2676 = vld [vmem:[%s45] sm:$0x1]
        %v2678 = vperm.slane %v2676, 0
        %v2681 = vsel %vm1653, %v2655, 0
        %2683 = vmatpush.msra.mxu0 %v2671
        %2684 = vmatpush.msra.mxu0 %v2670
        %2685 = vmatpush.msra.mxu0 %v2669
        %2686 = vmatpush.msra.mxu0 %v2668
        %2687 = vmatpush.msra.mxu0 %v2667
        %2688 = vmatpush.msra.mxu0 %v2666
        %2689 = vmatpush.msra.mxu0 %v2665
        %2690 = vmatpush.msra.mxu0 %v2664
        %2691 = vmatpush.msra.mxu0 %v2663
        %2692 = vmatpush.msra.mxu0 %v2662
        %2693 = vmatpush.msra.mxu0 %v2661
        %2694 = vmatpush.msra.mxu0 %v2660
        %2695 = vmatpush.msra.mxu0 %v2659
        %2696 = vmatpush.msra.mxu0 %v2658
        %2697 = vmatpush.msra.mxu0 %v2657
        %2698 = vmatpush.msra.mxu0 %v2656
        %2699 = vmatmul.f32.gmra.mxu0 %v2654
        %v2700 = vpop.f32.mrf.mxu0
        %v2701 = vadd.f32 %v2678, %v2700
        %2702 = vdwg.mxu0
        %2703 = vmatpush.msra.mxu0 0.0
        %2704 = vmatpush.msra.mxu0 0.0
        %2705 = vmatpush.msra.mxu0 0.0
        %2706 = vmatpush.msra.mxu0 0.0
        %2707 = vmatpush.msra.mxu0 0.0
        %2708 = vmatpush.msra.mxu0 0.0
        %2709 = vmatpush.msra.mxu0 0.0
        %2710 = vmatpush.msra.mxu0 0.0
        %2711 = vmatpush.msra.mxu0 0.0
        %2712 = vmatpush.msra.mxu0 0.0
        %2713 = vmatpush.msra.mxu0 0.0
        %2714 = vmatpush.msra.mxu0 0.0
        %2715 = vmatpush.msra.mxu0 %v2675
        %2716 = vmatpush.msra.mxu0 %v2674
        %2717 = vmatpush.msra.mxu0 %v2673
        %2718 = vmatpush.msra.mxu0 %v2672
        %2719 = vmatmul.f32.gmra.mxu0 %v2681
        %v2720 = vpop.f32.mrf.mxu0
        %v2721 = vadd.f32 %v2701, %v2720
        %2722 = vdwg.mxu0
        %v2723 = vld [vmem:[%s47] sm:$0x1]
        %v2724 = vld [vmem:[%s49] sm:$0x1]
        %v2725 = vsel %vm1155, %v2721, 0.0
        %v2726 = vrot.slane %v2725, 4
        %v2727 = vadd.f32 %v2725, %v2726
        %v2728 = vrot.slane %v2727, 2
        %v2729 = vadd.f32 %v2727, %v2728
        %v2730 = vrot.slane %v2729, 1
        %v2731 = vadd.f32 %v2729, %v2730
        %v2733 = vsel %vm1155, %v2731, 0
        %2735 = vmatpush.msra.mxu0 0.0
        %2736 = vmatpush.msra.mxu0 0.0
        %2737 = vmatpush.msra.mxu0 0.0
        %2738 = vmatpush.msra.mxu0 0.0
        %2739 = vmatpush.msra.mxu0 0.0
        %2740 = vmatpush.msra.mxu0 0.0
        %2741 = vmatpush.msra.mxu0 0.0
        %2742 = vmatpush.msra.mxu0 0.0
        %2743 = vmatpush.msra.mxu0 0.0
        %2744 = vmatpush.msra.mxu0 0.0
        %2745 = vmatpush.msra.mxu0 0.0
        %2746 = vmatpush.msra.mxu0 %v1105
        %2747 = vmatpush.msra.mxu0 %v1104
        %2748 = vmatpush.msra.mxu0 %v1103
        %2749 = vmatpush.msra.mxu0 %v1102
        %2750 = vmatpush.msra.mxu0 %v1101
        %2751 = vmatmul.f32.gmra.mxu0 %v2733
        %v2752 = vpop.f32.mrf.mxu0
        %v2753 = vadd.f32 0.0, %v2752
        %2754 = vdwg.mxu0
        %v2755 = vrcp.pop 32.0
        %v2756 = vmul.f32 32.0, %v2755
        %v2757 = vsub.f32 1.0, %v2756
        %v2758 = vmul.f32 %v2755, %v2757
        %v2759 = vadd.f32 %v2755, %v2758
        %vm2760 = vweird.f32 %v2755
        %v2761 = vsel %vm2760, %v2755, %v2759
        %v2762 = vmul.f32 %v2753, %v2761
        %v2764 = vsel %vm1712, %v2762, 0
        %v2767 = vsel %vm1716, %v1109, 0
        %2769 = vmatpush.msra.mxu0 0.0
        %2770 = vmatpush.msra.mxu0 0.0
        %2771 = vmatpush.msra.mxu0 0.0
        %2772 = vmatpush.msra.mxu0 0.0
        %2773 = vmatpush.msra.mxu0 0.0
        %2774 = vmatpush.msra.mxu0 0.0
        %2775 = vmatpush.msra.mxu0 0.0
        %2776 = vmatpush.msra.mxu0 0.0
        %2777 = vmatpush.msra.mxu0 0.0
        %2778 = vmatpush.msra.mxu0 0.0
        %2779 = vmatpush.msra.mxu0 0.0
        %2780 = vmatpush.msra.mxu0 0.0
        %2781 = vmatpush.msra.mxu0 0.0
        %2782 = vmatpush.msra.mxu0 0.0
        %2783 = vmatpush.msra.mxu0 %v2767
        %2784 = vmatpush.msra.mxu0 %v1108
        %2785 = vmatmul.f32.gmra.mxu0 %v2764
        %v2786 = vpop.f32.mrf.mxu0
        %v2787 = vadd.f32 0.0, %v2786
        %2788 = vdwg.mxu0
        %v2789 = vperm.slane %v2787, 0
        %v2790 = vsub.f32 %v2721, %v2789
        %v2791 = vmul.f32 %v2790, %v2790
        %v2792 = vsel %vm1155, %v2791, 0.0
        %v2793 = vrot.slane %v2792, 4
        %v2794 = vadd.f32 %v2792, %v2793
        %v2795 = vrot.slane %v2794, 2
        %v2796 = vadd.f32 %v2794, %v2795
        %v2797 = vrot.slane %v2796, 1
        %v2798 = vadd.f32 %v2796, %v2797
        %v2800 = vsel %vm1155, %v2798, 0
        %2802 = vmatpush.msra.mxu0 0.0
        %2803 = vmatpush.msra.mxu0 0.0
        %2804 = vmatpush.msra.mxu0 0.0
        %2805 = vmatpush.msra.mxu0 0.0
        %2806 = vmatpush.msra.mxu0 0.0
        %2807 = vmatpush.msra.mxu0 0.0
        %2808 = vmatpush.msra.mxu0 0.0
        %2809 = vmatpush.msra.mxu0 0.0
        %2810 = vmatpush.msra.mxu0 0.0
        %2811 = vmatpush.msra.mxu0 0.0
        %2812 = vmatpush.msra.mxu0 0.0
        %2813 = vmatpush.msra.mxu0 %v1105
        %2814 = vmatpush.msra.mxu0 %v1104
        %2815 = vmatpush.msra.mxu0 %v1103
        %2816 = vmatpush.msra.mxu0 %v1102
        %2817 = vmatpush.msra.mxu0 %v1101
        %2818 = vmatmul.f32.gmra.mxu0 %v2800
        %v2819 = vpop.f32.mrf.mxu0
        %v2820 = vadd.f32 0.0, %v2819
        %2821 = vdwg.mxu0
        %v2822 = vmul.f32 %v2820, %v2761
        %v2824 = vsel %vm1712, %v2822, 0
        %2826 = vmatpush.msra.mxu0 0.0
        %2827 = vmatpush.msra.mxu0 0.0
        %2828 = vmatpush.msra.mxu0 0.0
        %2829 = vmatpush.msra.mxu0 0.0
        %2830 = vmatpush.msra.mxu0 0.0
        %2831 = vmatpush.msra.mxu0 0.0
        %2832 = vmatpush.msra.mxu0 0.0
        %2833 = vmatpush.msra.mxu0 0.0
        %2834 = vmatpush.msra.mxu0 0.0
        %2835 = vmatpush.msra.mxu0 0.0
        %2836 = vmatpush.msra.mxu0 0.0
        %2837 = vmatpush.msra.mxu0 0.0
        %2838 = vmatpush.msra.mxu0 0.0
        %2839 = vmatpush.msra.mxu0 0.0
        %2840 = vmatpush.msra.mxu0 %v2767
        %2841 = vmatpush.msra.mxu0 %v1108
        %2842 = vmatmul.f32.gmra.mxu0 %v2824
        %v2843 = vpop.f32.mrf.mxu0
        %v2844 = vadd.f32 1e-05, %v2843
        %2845 = vdwg.mxu0
        %v2846 = vrsqrt.pop %v2844
        %v2847 = vmul.f32 %v2846, %v2844
        %v2848 = vmul.f32 %v2847, %v2846
        %v2849 = vmul.f32 0.5, %v2848
        %v2850 = vsub.f32 1.5, %v2849
        %v2851 = vmul.f32 %v2846, %v2850
        %vm2852 = vweird.f32 %v2844
        %vm2853 = vweird.f32 %v2846
        %vm2854 = vmor %vm2852, %vm2853
        %v2855 = vsel %vm2854, %v2846, %v2851
        %v2856 = vperm.slane %v2855, 0
        %v2857 = vmul.f32 %v2790, %v2856
        %v2859 = vperm.slane %v2723, 0
        %v2861 = vmul.f32 %v2857, %v2859
        %v2863 = vperm.slane %v2724, 0
        %v2865 = vadd.f32 %v2861, %v2863
        %v2866 = vadd.f32 %v1553, %v2865
        %s2867 = scalar_lea.vmem %s9, 1
        %v2868 = vld [vmem:[%s2867] sm:$0x1]
        %s2869 = scalar_lea.vmem %s11, 1
        %v2870 = vld [vmem:[%s2869] sm:$0x1]
        %v2871 = vsel %vm1155, %v2866, 0.0
        %2872 = vadd.xlane.f32.xlu0 %v2871
        %v2873 = vpop.xlane.xlu0 %2872
        %v2874 = vmul.f32 %v2873, %v1165
        %v2875 = vsub.f32 %v2866, %v2874
        %v2876 = vmul.f32 %v2875, %v2875
        %v2877 = vsel %vm1155, %v2876, 0.0
        %2878 = vadd.xlane.f32.xlu0 %v2877
        %v2879 = vpop.xlane.xlu0 %2878
        %v2880 = vmul.f32 %v2879, %v1165
        %v2881 = vadd.f32 %v2880, 1e-05
        %v2882 = vrsqrt.pop %v2881
        %v2883 = vmul.f32 %v2882, %v2881
        %v2884 = vmul.f32 %v2883, %v2882
        %v2885 = vmul.f32 0.5, %v2884
        %v2886 = vsub.f32 1.5, %v2885
        %v2887 = vmul.f32 %v2882, %v2886
        %vm2888 = vweird.f32 %v2881
        %vm2889 = vweird.f32 %v2882
        %vm2890 = vmor %vm2888, %vm2889
        %v2891 = vsel %vm2890, %v2882, %v2887
        %v2892 = vmul.f32 %v2875, %v2891
        %v2894 = vperm.slane %v2868, 0
        %v2896 = vmul.f32 %v2892, %v2894
        %v2898 = vperm.slane %v2870, 0
        %v2900 = vadd.f32 %v2896, %v2898
        %s2901 = scalar_lea.vmem %s21, 1
        %v2902 = vld [vmem:[%s2901] sm:$0x1]
        %s2903 = scalar_lea.vmem %s13, 80
        %v2904 = vld [vmem:[%s2903] sm:$0xff]
        %v2905 = vld [vmem:[%s2903 + $0x8] sm:$0xff]
        %v2906 = vld [vmem:[%s2903 + $0x10] sm:$0xff]
        %v2907 = vld [vmem:[%s2903 + $0x18] sm:$0xff]
        %v2908 = vld [vmem:[%s2903 + $0x20] sm:$0xff]
        %v2910 = vsel %vm1155, %v2900, 0
        %2912 = vmatpush.msra.mxu0 0.0
        %2913 = vmatpush.msra.mxu0 0.0
        %2914 = vmatpush.msra.mxu0 0.0
        %2915 = vmatpush.msra.mxu0 0.0
        %2916 = vmatpush.msra.mxu0 0.0
        %2917 = vmatpush.msra.mxu0 0.0
        %2918 = vmatpush.msra.mxu0 0.0
        %2919 = vmatpush.msra.mxu0 0.0
        %2920 = vmatpush.msra.mxu0 0.0
        %2921 = vmatpush.msra.mxu0 0.0
        %2922 = vmatpush.msra.mxu0 0.0
        %2923 = vmatpush.msra.mxu0 %v2908
        %2924 = vmatpush.msra.mxu0 %v2907
        %2925 = vmatpush.msra.mxu0 %v2906
        %2926 = vmatpush.msra.mxu0 %v2905
        %2927 = vmatpush.msra.mxu0 %v2904
        %2928 = vmatmul.f32.gmra.mxu0 %v2910
        %v2929 = vpop.f32.mrf.mxu0
        %v2930 = vadd.f32 0.0, %v2929
        %2931 = vdwg.mxu0
        %s2932 = scalar_lea.vmem %s15, 80
        %v2933 = vld [vmem:[%s2932] sm:$0xff]
        %v2934 = vld [vmem:[%s2932 + $0x8] sm:$0xff]
        %v2935 = vld [vmem:[%s2932 + $0x10] sm:$0xff]
        %v2936 = vld [vmem:[%s2932 + $0x18] sm:$0xff]
        %v2937 = vld [vmem:[%s2932 + $0x20] sm:$0xff]
        %2938 = vmatpush.msra.mxu0 0.0
        %2939 = vmatpush.msra.mxu0 0.0
        %2940 = vmatpush.msra.mxu0 0.0
        %2941 = vmatpush.msra.mxu0 0.0
        %2942 = vmatpush.msra.mxu0 0.0
        %2943 = vmatpush.msra.mxu0 0.0
        %2944 = vmatpush.msra.mxu0 0.0
        %2945 = vmatpush.msra.mxu0 0.0
        %2946 = vmatpush.msra.mxu0 0.0
        %2947 = vmatpush.msra.mxu0 0.0
        %2948 = vmatpush.msra.mxu0 0.0
        %2949 = vmatpush.msra.mxu0 %v2937
        %2950 = vmatpush.msra.mxu0 %v2936
        %2951 = vmatpush.msra.mxu0 %v2935
        %2952 = vmatpush.msra.mxu0 %v2934
        %2953 = vmatpush.msra.mxu0 %v2933
        %2954 = vmatmul.f32.gmra.mxu0 %v2910
        %v2955 = vpop.f32.mrf.mxu0
        %v2956 = vadd.f32 0.0, %v2955
        %2957 = vdwg.mxu0
        %s2958 = scalar_lea.vmem %s17, 80
        %v2959 = vld [vmem:[%s2958] sm:$0xff]
        %v2960 = vld [vmem:[%s2958 + $0x8] sm:$0xff]
        %v2961 = vld [vmem:[%s2958 + $0x10] sm:$0xff]
        %v2962 = vld [vmem:[%s2958 + $0x18] sm:$0xff]
        %v2963 = vld [vmem:[%s2958 + $0x20] sm:$0xff]
        %2964 = vmatpush.msra.mxu0 0.0
        %2965 = vmatpush.msra.mxu0 0.0
        %2966 = vmatpush.msra.mxu0 0.0
        %2967 = vmatpush.msra.mxu0 0.0
        %2968 = vmatpush.msra.mxu0 0.0
        %2969 = vmatpush.msra.mxu0 0.0
        %2970 = vmatpush.msra.mxu0 0.0
        %2971 = vmatpush.msra.mxu0 0.0
        %2972 = vmatpush.msra.mxu0 0.0
        %2973 = vmatpush.msra.mxu0 0.0
        %2974 = vmatpush.msra.mxu0 0.0
        %2975 = vmatpush.msra.mxu0 %v2963
        %2976 = vmatpush.msra.mxu0 %v2962
        %2977 = vmatpush.msra.mxu0 %v2961
        %2978 = vmatpush.msra.mxu0 %v2960
        %2979 = vmatpush.msra.mxu0 %v2959
        %2980 = vmatmul.f32.gmra.mxu0 %v2910
        %v2981 = vpop.f32.mrf.mxu0
        %v2982 = vadd.f32 0.0, %v2981
        %2983 = vdwg.mxu0
        %v2985 = vsel %vm1272, %v2930, 0
        %v2988 = vsel %vm1272, %v2956, 0
        %2990 = vmatpush.xpose.msra.mxu0 0.0
        %2991 = vmatpush.xpose.msra.mxu0 0.0
        %2992 = vmatpush.xpose.msra.mxu0 0.0
        %2993 = vmatpush.xpose.msra.mxu0 0.0
        %2994 = vmatpush.xpose.msra.mxu0 0.0
        %2995 = vmatpush.xpose.msra.mxu0 0.0
        %2996 = vmatpush.xpose.msra.mxu0 0.0
        %2997 = vmatpush.xpose.msra.mxu0 0.0
        %2998 = vmatpush.xpose.msra.mxu0 0.0
        %2999 = vmatpush.xpose.msra.mxu0 0.0
        %3000 = vmatpush.xpose.msra.mxu0 0.0
        %3001 = vmatpush.xpose.msra.mxu0 0.0
        %3002 = vmatpush.xpose.msra.mxu0 0.0
        %3003 = vmatpush.xpose.msra.mxu0 0.0
        %3004 = vmatpush.xpose.msra.mxu0 0.0
        %3005 = vmatpush.xpose.msra.mxu0 %v2988
        %3006 = vmatmul.f32.gmra.mxu0 %v2985
        %v3007 = vpop.f32.mrf.mxu0
        %v3008 = vadd.f32 0.0, %v3007
        %3009 = vdwg.mxu0
        %v3010 = vmul.f32 %v3008, 0.35355338
        %v3011 = vsel %vm1272, %v3010, -inf
        %3012 = vmax.xlane.f32.xlu0 %v3011
        %v3013 = vpop.xlane.xlu0 %3012
        %v3014 = vsub.f32 %v3010, %v3013
        %v3015 = vmul.f32 %v3014, 1.442695
        %v3016 = vpow.pop %v3015
        %v3017 = vsel %vm1272, %v3016, 0.0
        %3018 = vadd.xlane.f32.xlu0 %v3017
        %v3019 = vpop.xlane.xlu0 %3018
        %v3020 = vrcp.pop %v3019
        %v3021 = vmul.f32 %v3019, %v3020
        %v3022 = vsub.f32 1.0, %v3021
        %v3023 = vmul.f32 %v3020, %v3022
        %v3024 = vadd.f32 %v3020, %v3023
        %vm3025 = vweird.f32 %v3019
        %vm3026 = vweird.f32 %v3020
        %vm3027 = vmor %vm3025, %vm3026
        %v3028 = vsel %vm3027, %v3020, %v3024
        %v3029 = vand.u32 2147483647, %v3019
        %vm3030 = vcmp.eq.f32.partialorder %v3029, 8.507059e+37
        %v3031 = vand.u32 %v3019, 2147483648
        %v3032 = vor.u32 1.1754944e-38, %v3031
        %v3033 = vsel %vm3030, %v3032, %v3028
        %v3034 = vmul.f32 %v3016, %v3033
        %v3036 = vsel %vm1272, %v3034, 0
        %3038 = vmatpush.msra.mxu0 0.0
        %3039 = vmatpush.msra.mxu0 0.0
        %3040 = vmatpush.msra.mxu0 0.0
        %3041 = vmatpush.msra.mxu0 0.0
        %3042 = vmatpush.msra.mxu0 0.0
        %3043 = vmatpush.msra.mxu0 0.0
        %3044 = vmatpush.msra.mxu0 0.0
        %3045 = vmatpush.msra.mxu0 0.0
        %3046 = vmatpush.msra.mxu0 0.0
        %3047 = vmatpush.msra.mxu0 0.0
        %3048 = vmatpush.msra.mxu0 0.0
        %3049 = vmatpush.msra.mxu0 0.0
        %3050 = vmatpush.msra.mxu0 0.0
        %3051 = vmatpush.msra.mxu0 0.0
        %3052 = vmatpush.msra.mxu0 0.0
        %3053 = vmatpush.msra.mxu0 %v2982
        %3054 = vmatmul.f32.gmra.mxu0 %v3036
        %v3055 = vpop.f32.mrf.mxu0
        %v3056 = vadd.f32 0.0, %v3055
        %3057 = vdwg.mxu0
        %s3058 = scalar_lea.vmem %s19, 16
        %v3059 = vld [vmem:[%s3058] sm:$0xff]
        %v3061 = vsel %vm1272, %v3056, 0
        %3063 = vmatpush.msra.mxu0 0.0
        %3064 = vmatpush.msra.mxu0 0.0
        %3065 = vmatpush.msra.mxu0 0.0
        %3066 = vmatpush.msra.mxu0 0.0
        %3067 = vmatpush.msra.mxu0 0.0
        %3068 = vmatpush.msra.mxu0 0.0
        %3069 = vmatpush.msra.mxu0 0.0
        %3070 = vmatpush.msra.mxu0 0.0
        %3071 = vmatpush.msra.mxu0 0.0
        %3072 = vmatpush.msra.mxu0 0.0
        %3073 = vmatpush.msra.mxu0 0.0
        %3074 = vmatpush.msra.mxu0 0.0
        %3075 = vmatpush.msra.mxu0 0.0
        %3076 = vmatpush.msra.mxu0 0.0
        %3077 = vmatpush.msra.mxu0 0.0
        %3078 = vmatpush.msra.mxu0 %v3059
        %3079 = vmatmul.f32.gmra.mxu0 %v3061
        %v3080 = vpop.f32.mrf.mxu0
        %v3081 = vadd.f32 0.0, %v3080
        %3082 = vdwg.mxu0
        %v3084 = vperm.slane %v2902, 0
        %v3086 = vadd.f32 %v3084, %v3081
        %s3087 = scalar_lea.vmem %s13, 120
        %v3088 = vld [vmem:[%s3087] sm:$0xff]
        %v3089 = vld [vmem:[%s3087 + $0x8] sm:$0xff]
        %v3090 = vld [vmem:[%s3087 + $0x10] sm:$0xff]
        %v3091 = vld [vmem:[%s3087 + $0x18] sm:$0xff]
        %v3092 = vld [vmem:[%s3087 + $0x20] sm:$0xff]
        %3093 = vmatpush.msra.mxu0 0.0
        %3094 = vmatpush.msra.mxu0 0.0
        %3095 = vmatpush.msra.mxu0 0.0
        %3096 = vmatpush.msra.mxu0 0.0
        %3097 = vmatpush.msra.mxu0 0.0
        %3098 = vmatpush.msra.mxu0 0.0
        %3099 = vmatpush.msra.mxu0 0.0
        %3100 = vmatpush.msra.mxu0 0.0
        %3101 = vmatpush.msra.mxu0 0.0
        %3102 = vmatpush.msra.mxu0 0.0
        %3103 = vmatpush.msra.mxu0 0.0
        %3104 = vmatpush.msra.mxu0 %v3092
        %3105 = vmatpush.msra.mxu0 %v3091
        %3106 = vmatpush.msra.mxu0 %v3090
        %3107 = vmatpush.msra.mxu0 %v3089
        %3108 = vmatpush.msra.mxu0 %v3088
        %3109 = vmatmul.f32.gmra.mxu0 %v2910
        %v3110 = vpop.f32.mrf.mxu0
        %v3111 = vadd.f32 0.0, %v3110
        %3112 = vdwg.mxu0
        %s3113 = scalar_lea.vmem %s15, 120
        %v3114 = vld [vmem:[%s3113] sm:$0xff]
        %v3115 = vld [vmem:[%s3113 + $0x8] sm:$0xff]
        %v3116 = vld [vmem:[%s3113 + $0x10] sm:$0xff]
        %v3117 = vld [vmem:[%s3113 + $0x18] sm:$0xff]
        %v3118 = vld [vmem:[%s3113 + $0x20] sm:$0xff]
        %3119 = vmatpush.msra.mxu0 0.0
        %3120 = vmatpush.msra.mxu0 0.0
        %3121 = vmatpush.msra.mxu0 0.0
        %3122 = vmatpush.msra.mxu0 0.0
        %3123 = vmatpush.msra.mxu0 0.0
        %3124 = vmatpush.msra.mxu0 0.0
        %3125 = vmatpush.msra.mxu0 0.0
        %3126 = vmatpush.msra.mxu0 0.0
        %3127 = vmatpush.msra.mxu0 0.0
        %3128 = vmatpush.msra.mxu0 0.0
        %3129 = vmatpush.msra.mxu0 0.0
        %3130 = vmatpush.msra.mxu0 %v3118
        %3131 = vmatpush.msra.mxu0 %v3117
        %3132 = vmatpush.msra.mxu0 %v3116
        %3133 = vmatpush.msra.mxu0 %v3115
        %3134 = vmatpush.msra.mxu0 %v3114
        %3135 = vmatmul.f32.gmra.mxu0 %v2910
        %v3136 = vpop.f32.mrf.mxu0
        %v3137 = vadd.f32 0.0, %v3136
        %3138 = vdwg.mxu0
        %s3139 = scalar_lea.vmem %s17, 120
        %v3140 = vld [vmem:[%s3139] sm:$0xff]
        %v3141 = vld [vmem:[%s3139 + $0x8] sm:$0xff]
        %v3142 = vld [vmem:[%s3139 + $0x10] sm:$0xff]
        %v3143 = vld [vmem:[%s3139 + $0x18] sm:$0xff]
        %v3144 = vld [vmem:[%s3139 + $0x20] sm:$0xff]
        %3145 = vmatpush.msra.mxu0 0.0
        %3146 = vmatpush.msra.mxu0 0.0
        %3147 = vmatpush.msra.mxu0 0.0
        %3148 = vmatpush.msra.mxu0 0.0
        %3149 = vmatpush.msra.mxu0 0.0
        %3150 = vmatpush.msra.mxu0 0.0
        %3151 = vmatpush.msra.mxu0 0.0
        %3152 = vmatpush.msra.mxu0 0.0
        %3153 = vmatpush.msra.mxu0 0.0
        %3154 = vmatpush.msra.mxu0 0.0
        %3155 = vmatpush.msra.mxu0 0.0
        %3156 = vmatpush.msra.mxu0 %v3144
        %3157 = vmatpush.msra.mxu0 %v3143
        %3158 = vmatpush.msra.mxu0 %v3142
        %3159 = vmatpush.msra.mxu0 %v3141
        %3160 = vmatpush.msra.mxu0 %v3140
        %3161 = vmatmul.f32.gmra.mxu0 %v2910
        %v3162 = vpop.f32.mrf.mxu0
        %v3163 = vadd.f32 0.0, %v3162
        %3164 = vdwg.mxu0
        %v3166 = vsel %vm1272, %v3111, 0
        %v3169 = vsel %vm1272, %v3137, 0
        %3171 = vmatpush.xpose.msra.mxu0 0.0
        %3172 = vmatpush.xpose.msra.mxu0 0.0
        %3173 = vmatpush.xpose.msra.mxu0 0.0
        %3174 = vmatpush.xpose.msra.mxu0 0.0
        %3175 = vmatpush.xpose.msra.mxu0 0.0
        %3176 = vmatpush.xpose.msra.mxu0 0.0
        %3177 = vmatpush.xpose.msra.mxu0 0.0
        %3178 = vmatpush.xpose.msra.mxu0 0.0
        %3179 = vmatpush.xpose.msra.mxu0 0.0
        %3180 = vmatpush.xpose.msra.mxu0 0.0
        %3181 = vmatpush.xpose.msra.mxu0 0.0
        %3182 = vmatpush.xpose.msra.mxu0 0.0
        %3183 = vmatpush.xpose.msra.mxu0 0.0
        %3184 = vmatpush.xpose.msra.mxu0 0.0
        %3185 = vmatpush.xpose.msra.mxu0 0.0
        %3186 = vmatpush.xpose.msra.mxu0 %v3169
        %3187 = vmatmul.f32.gmra.mxu0 %v3166
        %v3188 = vpop.f32.mrf.mxu0
        %v3189 = vadd.f32 0.0, %v3188
        %3190 = vdwg.mxu0
        %v3191 = vmul.f32 %v3189, 0.35355338
        %v3192 = vsel %vm1272, %v3191, -inf
        %3193 = vmax.xlane.f32.xlu0 %v3192
        %v3194 = vpop.xlane.xlu0 %3193
        %v3195 = vsub.f32 %v3191, %v3194
        %v3196 = vmul.f32 %v3195, 1.442695
        %v3197 = vpow.pop %v3196
        %v3198 = vsel %vm1272, %v3197, 0.0
        %3199 = vadd.xlane.f32.xlu0 %v3198
        %v3200 = vpop.xlane.xlu0 %3199
        %v3201 = vrcp.pop %v3200
        %v3202 = vmul.f32 %v3200, %v3201
        %v3203 = vsub.f32 1.0, %v3202
        %v3204 = vmul.f32 %v3201, %v3203
        %v3205 = vadd.f32 %v3201, %v3204
        %vm3206 = vweird.f32 %v3200
        %vm3207 = vweird.f32 %v3201
        %vm3208 = vmor %vm3206, %vm3207
        %v3209 = vsel %vm3208, %v3201, %v3205
        %v3210 = vand.u32 2147483647, %v3200
        %vm3211 = vcmp.eq.f32.partialorder %v3210, 8.507059e+37
        %v3212 = vand.u32 %v3200, 2147483648
        %v3213 = vor.u32 1.1754944e-38, %v3212
        %v3214 = vsel %vm3211, %v3213, %v3209
        %v3215 = vmul.f32 %v3197, %v3214
        %v3217 = vsel %vm1272, %v3215, 0
        %3219 = vmatpush.msra.mxu0 0.0
        %3220 = vmatpush.msra.mxu0 0.0
        %3221 = vmatpush.msra.mxu0 0.0
        %3222 = vmatpush.msra.mxu0 0.0
        %3223 = vmatpush.msra.mxu0 0.0
        %3224 = vmatpush.msra.mxu0 0.0
        %3225 = vmatpush.msra.mxu0 0.0
        %3226 = vmatpush.msra.mxu0 0.0
        %3227 = vmatpush.msra.mxu0 0.0
        %3228 = vmatpush.msra.mxu0 0.0
        %3229 = vmatpush.msra.mxu0 0.0
        %3230 = vmatpush.msra.mxu0 0.0
        %3231 = vmatpush.msra.mxu0 0.0
        %3232 = vmatpush.msra.mxu0 0.0
        %3233 = vmatpush.msra.mxu0 0.0
        %3234 = vmatpush.msra.mxu0 %v3163
        %3235 = vmatmul.f32.gmra.mxu0 %v3217
        %v3236 = vpop.f32.mrf.mxu0
        %v3237 = vadd.f32 0.0, %v3236
        %3238 = vdwg.mxu0
        %s3239 = scalar_lea.vmem %s19, 24
        %v3240 = vld [vmem:[%s3239] sm:$0xff]
        %v3242 = vsel %vm1272, %v3237, 0
        %3244 = vmatpush.msra.mxu0 0.0
        %3245 = vmatpush.msra.mxu0 0.0
        %3246 = vmatpush.msra.mxu0 0.0
        %3247 = vmatpush.msra.mxu0 0.0
        %3248 = vmatpush.msra.mxu0 0.0
        %3249 = vmatpush.msra.mxu0 0.0
        %3250 = vmatpush.msra.mxu0 0.0
        %3251 = vmatpush.msra.mxu0 0.0
        %3252 = vmatpush.msra.mxu0 0.0
        %3253 = vmatpush.msra.mxu0 0.0
        %3254 = vmatpush.msra.mxu0 0.0
        %3255 = vmatpush.msra.mxu0 0.0
        %3256 = vmatpush.msra.mxu0 0.0
        %3257 = vmatpush.msra.mxu0 0.0
        %3258 = vmatpush.msra.mxu0 0.0
        %3259 = vmatpush.msra.mxu0 %v3240
        %3260 = vmatmul.f32.gmra.mxu0 %v3242
        %v3261 = vpop.f32.mrf.mxu0
        %v3262 = vadd.f32 0.0, %v3261
        %3263 = vdwg.mxu0
        %v3264 = vadd.f32 %v3086, %v3262
        %v3265 = vadd.f32 %v2866, %v3264
        %s3266 = scalar_lea.vmem %s23, 1
        %v3267 = vld [vmem:[%s3266] sm:$0x1]
        %s3268 = scalar_lea.vmem %s25, 1
        %v3269 = vld [vmem:[%s3268] sm:$0x1]
        %v3270 = vsel %vm1155, %v3265, 0.0
        %3271 = vadd.xlane.f32.xlu0 %v3270
        %v3272 = vpop.xlane.xlu0 %3271
        %v3273 = vmul.f32 %v3272, %v1165
        %v3274 = vsub.f32 %v3265, %v3273
        %v3275 = vmul.f32 %v3274, %v3274
        %v3276 = vsel %vm1155, %v3275, 0.0
        %3277 = vadd.xlane.f32.xlu0 %v3276
        %v3278 = vpop.xlane.xlu0 %3277
        %v3279 = vmul.f32 %v3278, %v1165
        %v3280 = vadd.f32 %v3279, 1e-05
        %v3281 = vrsqrt.pop %v3280
        %v3282 = vmul.f32 %v3281, %v3280
        %v3283 = vmul.f32 %v3282, %v3281
        %v3284 = vmul.f32 0.5, %v3283
        %v3285 = vsub.f32 1.5, %v3284
        %v3286 = vmul.f32 %v3281, %v3285
        %vm3287 = vweird.f32 %v3280
        %vm3288 = vweird.f32 %v3281
        %vm3289 = vmor %vm3287, %vm3288
        %v3290 = vsel %vm3289, %v3281, %v3286
        %v3291 = vmul.f32 %v3274, %v3290
        %v3293 = vperm.slane %v3267, 0
        %v3295 = vmul.f32 %v3291, %v3293
        %v3297 = vperm.slane %v3269, 0
        %v3299 = vadd.f32 %v3295, %v3297
        %s3300 = scalar_lea.vmem %s27, 80
        %v3301 = vld [vmem:[%s3300] sm:$0xff]
        %v3302 = vld [vmem:[%s3300 + $0x8] sm:$0xff]
        %v3303 = vld [vmem:[%s3300 + $0x10] sm:$0xff]
        %v3304 = vld [vmem:[%s3300 + $0x18] sm:$0xff]
        %v3305 = vld [vmem:[%s3300 + $0x20] sm:$0xff]
        %v3306 = vld [vmem:[%s3300 + $0x28] sm:$0xff]
        %v3307 = vld [vmem:[%s3300 + $0x30] sm:$0xff]
        %v3308 = vld [vmem:[%s3300 + $0x38] sm:$0xff]
        %v3309 = vld [vmem:[%s3300 + $0x40] sm:$0xff]
        %v3310 = vld [vmem:[%s3300 + $0x48] sm:$0xff]
        %s3311 = scalar_lea.vmem %s29, 2
        %v3312 = vld [vmem:[%s3311] sm:$0x3]
        %v3314 = vperm.slane %v3312, 0
        %v3315 = vperm.slane %v3312, 1
        %v3319 = vsel %vm1155, %v3299, 0
        %3321 = vmatpush.msra.mxu0 0.0
        %3322 = vmatpush.msra.mxu0 0.0
        %3323 = vmatpush.msra.mxu0 0.0
        %3324 = vmatpush.msra.mxu0 0.0
        %3325 = vmatpush.msra.mxu0 0.0
        %3326 = vmatpush.msra.mxu0 0.0
        %3327 = vmatpush.msra.mxu0 0.0
        %3328 = vmatpush.msra.mxu0 0.0
        %3329 = vmatpush.msra.mxu0 0.0
        %3330 = vmatpush.msra.mxu0 0.0
        %3331 = vmatpush.msra.mxu0 0.0
        %3332 = vmatpush.msra.mxu0 %v3309
        %3333 = vmatpush.msra.mxu0 %v3307
        %3334 = vmatpush.msra.mxu0 %v3305
        %3335 = vmatpush.msra.mxu0 %v3303
        %3336 = vmatpush.msra.mxu0 %v3301
        %3337 = vmatmul.f32.gmra.mxu0 %v3319
        %v3338 = vpop.f32.mrf.mxu0
        %v3339 = vadd.f32 %v3314, %v3338
        %3340 = vdwg.mxu0
        %3341 = vmatpush.msra.mxu0 0.0
        %3342 = vmatpush.msra.mxu0 0.0
        %3343 = vmatpush.msra.mxu0 0.0
        %3344 = vmatpush.msra.mxu0 0.0
        %3345 = vmatpush.msra.mxu0 0.0
        %3346 = vmatpush.msra.mxu0 0.0
        %3347 = vmatpush.msra.mxu0 0.0
        %3348 = vmatpush.msra.mxu0 0.0
        %3349 = vmatpush.msra.mxu0 0.0
        %3350 = vmatpush.msra.mxu0 0.0
        %3351 = vmatpush.msra.mxu0 0.0
        %3352 = vmatpush.msra.mxu0 %v3310
        %3353 = vmatpush.msra.mxu0 %v3308
        %3354 = vmatpush.msra.mxu0 %v3306
        %3355 = vmatpush.msra.mxu0 %v3304
        %3356 = vmatpush.msra.mxu0 %v3302
        %3357 = vmatmul.f32.gmra.mxu0 %v3319
        %v3358 = vpop.f32.mrf.mxu0
        %v3359 = vadd.f32 %v3315, %v3358
        %3360 = vdwg.mxu0
        %s3361 = scalar_lea.vmem %s31, 2
        %v3362 = vld [vmem:[%s3361] sm:$0x3]
        %s3363 = scalar_lea.vmem %s33, 2
        %v3364 = vld [vmem:[%s3363] sm:$0x3]
        %v3365 = vrot.slane %v3339, 4
        %v3366 = vadd.f32 %v3339, %v3365
        %v3367 = vrot.slane %v3366, 2
        %v3368 = vadd.f32 %v3366, %v3367
        %v3369 = vrot.slane %v3368, 1
        %v3370 = vadd.f32 %v3368, %v3369
        %v3371 = vsel %vm1653, %v3359, 0.0
        %v3372 = vrot.slane %v3371, 4
        %v3373 = vadd.f32 %v3371, %v3372
        %v3374 = vrot.slane %v3373, 2
        %v3375 = vadd.f32 %v3373, %v3374
        %v3376 = vrot.slane %v3375, 1
        %v3377 = vadd.f32 %v3375, %v3376
        %v3379 = vsel %vm1653, %v3377, 0
        %3381 = vmatpush.msra.mxu0 %v1056
        %3382 = vmatpush.msra.mxu0 %v1055
        %3383 = vmatpush.msra.mxu0 %v1054
        %3384 = vmatpush.msra.mxu0 %v1053
        %3385 = vmatpush.msra.mxu0 %v1052
        %3386 = vmatpush.msra.mxu0 %v1051
        %3387 = vmatpush.msra.mxu0 %v1050
        %3388 = vmatpush.msra.mxu0 %v1049
        %3389 = vmatpush.msra.mxu0 %v1048
        %3390 = vmatpush.msra.mxu0 %v1047
        %3391 = vmatpush.msra.mxu0 %v1046
        %3392 = vmatpush.msra.mxu0 %v1045
        %3393 = vmatpush.msra.mxu0 %v1044
        %3394 = vmatpush.msra.mxu0 %v1043
        %3395 = vmatpush.msra.mxu0 %v1042
        %3396 = vmatpush.msra.mxu0 %v1041
        %3397 = vmatmul.f32.gmra.mxu0 %v3370
        %v3398 = vpop.f32.mrf.mxu0
        %v3399 = vadd.f32 0.0, %v3398
        %3400 = vdwg.mxu0
        %3401 = vmatpush.msra.mxu0 0.0
        %3402 = vmatpush.msra.mxu0 0.0
        %3403 = vmatpush.msra.mxu0 0.0
        %3404 = vmatpush.msra.mxu0 0.0
        %3405 = vmatpush.msra.mxu0 0.0
        %3406 = vmatpush.msra.mxu0 0.0
        %3407 = vmatpush.msra.mxu0 0.0
        %3408 = vmatpush.msra.mxu0 0.0
        %3409 = vmatpush.msra.mxu0 0.0
        %3410 = vmatpush.msra.mxu0 0.0
        %3411 = vmatpush.msra.mxu0 0.0
        %3412 = vmatpush.msra.mxu0 0.0
        %3413 = vmatpush.msra.mxu0 %v1060
        %3414 = vmatpush.msra.mxu0 %v1059
        %3415 = vmatpush.msra.mxu0 %v1058
        %3416 = vmatpush.msra.mxu0 %v1057
        %3417 = vmatmul.f32.gmra.mxu0 %v3379
        %v3418 = vpop.f32.mrf.mxu0
        %v3419 = vadd.f32 %v3399, %v3418
        %3420 = vdwg.mxu0
        %v3421 = vmul.f32 %v3419, %v1710
        %v3423 = vsel %vm1712, %v3421, 0
        %3425 = vmatpush.msra.mxu0 0.0
        %3426 = vmatpush.msra.mxu0 0.0
        %3427 = vmatpush.msra.mxu0 0.0
        %3428 = vmatpush.msra.mxu0 0.0
        %3429 = vmatpush.msra.mxu0 0.0
        %3430 = vmatpush.msra.mxu0 0.0
        %3431 = vmatpush.msra.mxu0 0.0
        %3432 = vmatpush.msra.mxu0 0.0
        %3433 = vmatpush.msra.mxu0 0.0
        %3434 = vmatpush.msra.mxu0 0.0
        %3435 = vmatpush.msra.mxu0 0.0
        %3436 = vmatpush.msra.mxu0 0.0
        %3437 = vmatpush.msra.mxu0 0.0
        %3438 = vmatpush.msra.mxu0 0.0
        %3439 = vmatpush.msra.mxu0 %v1718
        %3440 = vmatpush.msra.mxu0 %v1065
        %3441 = vmatmul.f32.gmra.mxu0 %v3423
        %v3442 = vpop.f32.mrf.mxu0
        %v3443 = vadd.f32 0.0, %v3442
        %3444 = vdwg.mxu0
        %3445 = vmatpush.msra.mxu0 0.0
        %3446 = vmatpush.msra.mxu0 0.0
        %3447 = vmatpush.msra.mxu0 0.0
        %3448 = vmatpush.msra.mxu0 0.0
        %3449 = vmatpush.msra.mxu0 0.0
        %3450 = vmatpush.msra.mxu0 0.0
        %3451 = vmatpush.msra.mxu0 0.0
        %3452 = vmatpush.msra.mxu0 0.0
        %3453 = vmatpush.msra.mxu0 0.0
        %3454 = vmatpush.msra.mxu0 0.0
        %3455 = vmatpush.msra.mxu0 0.0
        %3456 = vmatpush.msra.mxu0 0.0
        %3457 = vmatpush.msra.mxu0 0.0
        %3458 = vmatpush.msra.mxu0 0.0
        %3459 = vmatpush.msra.mxu0 %v1721
        %3460 = vmatpush.msra.mxu0 %v1066
        %3461 = vmatmul.f32.gmra.mxu0 %v3423
        %v3462 = vpop.f32.mrf.mxu0
        %v3463 = vadd.f32 0.0, %v3462
        %3464 = vdwg.mxu0
        %v3465 = vperm.slane %v3443, 0
        %v3466 = vperm.slane %v3463, 0
        %v3467 = vsub.f32 %v3339, %v3465
        %v3468 = vsub.f32 %v3359, %v3466
        %v3469 = vmul.f32 %v3467, %v3467
        %v3470 = vmul.f32 %v3468, %v3468
        %v3471 = vrot.slane %v3469, 4
        %v3472 = vadd.f32 %v3469, %v3471
        %v3473 = vrot.slane %v3472, 2
        %v3474 = vadd.f32 %v3472, %v3473
        %v3475 = vrot.slane %v3474, 1
        %v3476 = vadd.f32 %v3474, %v3475
        %v3477 = vsel %vm1653, %v3470, 0.0
        %v3478 = vrot.slane %v3477, 4
        %v3479 = vadd.f32 %v3477, %v3478
        %v3480 = vrot.slane %v3479, 2
        %v3481 = vadd.f32 %v3479, %v3480
        %v3482 = vrot.slane %v3481, 1
        %v3483 = vadd.f32 %v3481, %v3482
        %v3485 = vsel %vm1653, %v3483, 0
        %3487 = vmatpush.msra.mxu0 %v1056
        %3488 = vmatpush.msra.mxu0 %v1055
        %3489 = vmatpush.msra.mxu0 %v1054
        %3490 = vmatpush.msra.mxu0 %v1053
        %3491 = vmatpush.msra.mxu0 %v1052
        %3492 = vmatpush.msra.mxu0 %v1051
        %3493 = vmatpush.msra.mxu0 %v1050
        %3494 = vmatpush.msra.mxu0 %v1049
        %3495 = vmatpush.msra.mxu0 %v1048
        %3496 = vmatpush.msra.mxu0 %v1047
        %3497 = vmatpush.msra.mxu0 %v1046
        %3498 = vmatpush.msra.mxu0 %v1045
        %3499 = vmatpush.msra.mxu0 %v1044
        %3500 = vmatpush.msra.mxu0 %v1043
        %3501 = vmatpush.msra.mxu0 %v1042
        %3502 = vmatpush.msra.mxu0 %v1041
        %3503 = vmatmul.f32.gmra.mxu0 %v3476
        %v3504 = vpop.f32.mrf.mxu0
        %v3505 = vadd.f32 0.0, %v3504
        %3506 = vdwg.mxu0
        %3507 = vmatpush.msra.mxu0 0.0
        %3508 = vmatpush.msra.mxu0 0.0
        %3509 = vmatpush.msra.mxu0 0.0
        %3510 = vmatpush.msra.mxu0 0.0
        %3511 = vmatpush.msra.mxu0 0.0
        %3512 = vmatpush.msra.mxu0 0.0
        %3513 = vmatpush.msra.mxu0 0.0
        %3514 = vmatpush.msra.mxu0 0.0
        %3515 = vmatpush.msra.mxu0 0.0
        %3516 = vmatpush.msra.mxu0 0.0
        %3517 = vmatpush.msra.mxu0 0.0
        %3518 = vmatpush.msra.mxu0 0.0
        %3519 = vmatpush.msra.mxu0 %v1060
        %3520 = vmatpush.msra.mxu0 %v1059
        %3521 = vmatpush.msra.mxu0 %v1058
        %3522 = vmatpush.msra.mxu0 %v1057
        %3523 = vmatmul.f32.gmra.mxu0 %v3485
        %v3524 = vpop.f32.mrf.mxu0
        %v3525 = vadd.f32 %v3505, %v3524
        %3526 = vdwg.mxu0
        %v3527 = vmul.f32 %v3525, %v1710
        %v3529 = vsel %vm1712, %v3527, 0
        %3531 = vmatpush.msra.mxu0 0.0
        %3532 = vmatpush.msra.mxu0 0.0
        %3533 = vmatpush.msra.mxu0 0.0
        %3534 = vmatpush.msra.mxu0 0.0
        %3535 = vmatpush.msra.mxu0 0.0
        %3536 = vmatpush.msra.mxu0 0.0
        %3537 = vmatpush.msra.mxu0 0.0
        %3538 = vmatpush.msra.mxu0 0.0
        %3539 = vmatpush.msra.mxu0 0.0
        %3540 = vmatpush.msra.mxu0 0.0
        %3541 = vmatpush.msra.mxu0 0.0
        %3542 = vmatpush.msra.mxu0 0.0
        %3543 = vmatpush.msra.mxu0 0.0
        %3544 = vmatpush.msra.mxu0 0.0
        %3545 = vmatpush.msra.mxu0 %v1718
        %3546 = vmatpush.msra.mxu0 %v1065
        %3547 = vmatmul.f32.gmra.mxu0 %v3529
        %v3548 = vpop.f32.mrf.mxu0
        %v3549 = vadd.f32 1e-05, %v3548
        %3550 = vdwg.mxu0
        %3551 = vmatpush.msra.mxu0 0.0
        %3552 = vmatpush.msra.mxu0 0.0
        %3553 = vmatpush.msra.mxu0 0.0
        %3554 = vmatpush.msra.mxu0 0.0
        %3555 = vmatpush.msra.mxu0 0.0
        %3556 = vmatpush.msra.mxu0 0.0
        %3557 = vmatpush.msra.mxu0 0.0
        %3558 = vmatpush.msra.mxu0 0.0
        %3559 = vmatpush.msra.mxu0 0.0
        %3560 = vmatpush.msra.mxu0 0.0
        %3561 = vmatpush.msra.mxu0 0.0
        %3562 = vmatpush.msra.mxu0 0.0
        %3563 = vmatpush.msra.mxu0 0.0
        %3564 = vmatpush.msra.mxu0 0.0
        %3565 = vmatpush.msra.mxu0 %v1721
        %3566 = vmatpush.msra.mxu0 %v1066
        %3567 = vmatmul.f32.gmra.mxu0 %v3529
        %v3568 = vpop.f32.mrf.mxu0
        %v3569 = vadd.f32 1e-05, %v3568
        %3570 = vdwg.mxu0
        %v3571 = vrsqrt.pop %v3549
        %v3572 = vmul.f32 %v3571, %v3549
        %v3573 = vmul.f32 %v3572, %v3571
        %v3574 = vmul.f32 0.5, %v3573
        %v3575 = vsub.f32 1.5, %v3574
        %v3576 = vmul.f32 %v3571, %v3575
        %vm3577 = vweird.f32 %v3549
        %vm3578 = vweird.f32 %v3571
        %vm3579 = vmor %vm3577, %vm3578
        %v3580 = vsel %vm3579, %v3571, %v3576
        %v3581 = vrsqrt.pop %v3569
        %v3582 = vmul.f32 %v3581, %v3569
        %v3583 = vmul.f32 %v3582, %v3581
        %v3584 = vmul.f32 0.5, %v3583
        %v3585 = vsub.f32 1.5, %v3584
        %v3586 = vmul.f32 %v3581, %v3585
        %vm3587 = vweird.f32 %v3569
        %vm3588 = vweird.f32 %v3581
        %vm3589 = vmor %vm3587, %vm3588
        %v3590 = vsel %vm3589, %v3581, %v3586
        %v3591 = vperm.slane %v3580, 0
        %v3592 = vperm.slane %v3590, 0
        %v3593 = vmul.f32 %v3467, %v3591
        %v3594 = vmul.f32 %v3468, %v3592
        %v3596 = vperm.slane %v3362, 0
        %v3597 = vperm.slane %v3362, 1
        %v3600 = vmul.f32 %v3593, %v3596
        %v3601 = vmul.f32 %v3594, %v3597
        %v3603 = vperm.slane %v3364, 0
        %v3604 = vperm.slane %v3364, 1
        %v3607 = vadd.f32 %v3600, %v3603
        %v3608 = vadd.f32 %v3601, %v3604
        %v3609 = vmul.f32 %v3607, %v3607
        %v3610 = vmul.f32 %v3608, %v3608
        %v3611 = vmul.f32 %v3607, %v3609
        %v3612 = vmul.f32 %v3608, %v3610
        %v3613 = vmul.f32 %v3611, 0.044715
        %v3614 = vmul.f32 %v3612, 0.044715
        %v3615 = vadd.f32 %v3607, %v3613
        %v3616 = vadd.f32 %v3608, %v3614
        %v3617 = vmul.f32 %v3615, 0.7978846
        %v3618 = vmul.f32 %v3616, 0.7978846
        %v3619 = vtanh.pop %v3617
        %v3620 = vtanh.pop %v3618
        %v3621 = vadd.f32 %v3619, 1.0
        %v3622 = vadd.f32 %v3620, 1.0
        %v3623 = vmul.f32 %v3621, 0.5
        %v3624 = vmul.f32 %v3622, 0.5
        %v3625 = vmul.f32 %v3607, %v3623
        %v3626 = vmul.f32 %v3608, %v3624
        %3627 = vmatpush.msra.mxu0 0.0
        %3628 = vmatpush.msra.mxu0 0.0
        %3629 = vmatpush.msra.mxu0 0.0
        %3630 = vmatpush.msra.mxu0 0.0
        %3631 = vmatpush.msra.mxu0 0.0
        %3632 = vmatpush.msra.mxu0 0.0
        %3633 = vmatpush.msra.mxu0 0.0
        %3634 = vmatpush.msra.mxu0 0.0
        %3635 = vmatpush.msra.mxu0 0.0
        %3636 = vmatpush.msra.mxu0 0.0
        %3637 = vmatpush.msra.mxu0 0.0
        %3638 = vmatpush.msra.mxu0 0.0
        %3639 = vmatpush.msra.mxu0 0.0
        %3640 = vmatpush.msra.mxu0 0.0
        %3641 = vmatpush.msra.mxu0 0.0
        %3642 = vmatpush.msra.mxu0 %v3625
        %3643 = vmatmul.f32.gmra.mxu0 %v1926
        %v3644 = vpop.f32.mrf.mxu0
        %v3645 = vadd.f32 0.0, %v3644
        %3646 = vdwg.mxu0
        %3647 = vmatpush.msra.mxu0 0.0
        %3648 = vmatpush.msra.mxu0 0.0
        %3649 = vmatpush.msra.mxu0 0.0
        %3650 = vmatpush.msra.mxu0 0.0
        %3651 = vmatpush.msra.mxu0 0.0
        %3652 = vmatpush.msra.mxu0 0.0
        %3653 = vmatpush.msra.mxu0 0.0
        %3654 = vmatpush.msra.mxu0 0.0
        %3655 = vmatpush.msra.mxu0 0.0
        %3656 = vmatpush.msra.mxu0 0.0
        %3657 = vmatpush.msra.mxu0 0.0
        %3658 = vmatpush.msra.mxu0 0.0
        %3659 = vmatpush.msra.mxu0 0.0
        %3660 = vmatpush.msra.mxu0 0.0
        %3661 = vmatpush.msra.mxu0 0.0
        %3662 = vmatpush.msra.mxu0 %v3626
        %3663 = vmatmul.f32.gmra.mxu0 %v1926
        %v3664 = vpop.f32.mrf.mxu0
        %v3665 = vadd.f32 0.0, %v3664
        %3666 = vdwg.mxu0
        %3667 = vmatpush.msra.mxu0 0.0
        %3668 = vmatpush.msra.mxu0 0.0
        %3669 = vmatpush.msra.mxu0 0.0
        %3670 = vmatpush.msra.mxu0 0.0
        %3671 = vmatpush.msra.mxu0 0.0
        %3672 = vmatpush.msra.mxu0 0.0
        %3673 = vmatpush.msra.mxu0 0.0
        %3674 = vmatpush.msra.mxu0 0.0
        %3675 = vmatpush.msra.mxu0 0.0
        %3676 = vmatpush.msra.mxu0 0.0
        %3677 = vmatpush.msra.mxu0 0.0
        %3678 = vmatpush.msra.mxu0 0.0
        %3679 = vmatpush.msra.mxu0 0.0
        %3680 = vmatpush.msra.mxu0 0.0
        %3681 = vmatpush.msra.mxu0 0.0
        %3682 = vmatpush.msra.mxu0 %v3625
        %3683 = vmatmul.f32.gmra.mxu0 %v1969
        %v3684 = vpop.f32.mrf.mxu0
        %v3685 = vadd.f32 0.0, %v3684
        %3686 = vdwg.mxu0
        %3687 = vmatpush.msra.mxu0 0.0
        %3688 = vmatpush.msra.mxu0 0.0
        %3689 = vmatpush.msra.mxu0 0.0
        %3690 = vmatpush.msra.mxu0 0.0
        %3691 = vmatpush.msra.mxu0 0.0
        %3692 = vmatpush.msra.mxu0 0.0
        %3693 = vmatpush.msra.mxu0 0.0
        %3694 = vmatpush.msra.mxu0 0.0
        %3695 = vmatpush.msra.mxu0 0.0
        %3696 = vmatpush.msra.mxu0 0.0
        %3697 = vmatpush.msra.mxu0 0.0
        %3698 = vmatpush.msra.mxu0 0.0
        %3699 = vmatpush.msra.mxu0 0.0
        %3700 = vmatpush.msra.mxu0 0.0
        %3701 = vmatpush.msra.mxu0 0.0
        %3702 = vmatpush.msra.mxu0 %v3626
        %3703 = vmatmul.f32.gmra.mxu0 %v1969
        %v3704 = vpop.f32.mrf.mxu0
        %v3705 = vadd.f32 0.0, %v3704
        %3706 = vdwg.mxu0
        %s3707 = scalar_lea.vmem [#allocation2], 960
        %v3708 = vld [vmem:[%s3707] sm:$0xff]
        %v3709 = vld [vmem:[%s3707 + $0x8] sm:$0xff]
        %v3710 = vld [vmem:[%s3707 + $0x10] sm:$0xff]
        %v3711 = vld [vmem:[%s3707 + $0x18] sm:$0xff]
        %v3712 = vld [vmem:[%s3707 + $0x20] sm:$0xff]
        %v3713 = vld [vmem:[%s3707 + $0x28] sm:$0xff]
        %v3714 = vld [vmem:[%s3707 + $0x30] sm:$0xff]
        %v3715 = vld [vmem:[%s3707 + $0x38] sm:$0xff]
        %v3716 = vld [vmem:[%s3707 + $0x40] sm:$0xff]
        %v3717 = vld [vmem:[%s3707 + $0x48] sm:$0xff]
        %v3718 = vld [vmem:[%s3707 + $0x50] sm:$0xff]
        %v3719 = vld [vmem:[%s3707 + $0x58] sm:$0xff]
        %v3720 = vld [vmem:[%s3707 + $0x60] sm:$0xff]
        %v3721 = vld [vmem:[%s3707 + $0x68] sm:$0xff]
        %v3722 = vld [vmem:[%s3707 + $0x70] sm:$0xff]
        %v3723 = vld [vmem:[%s3707 + $0x78] sm:$0xff]
        %v3724 = vld [vmem:[%s3707 + $0x80] sm:$0xff]
        %v3725 = vld [vmem:[%s3707 + $0x88] sm:$0xff]
        %v3726 = vld [vmem:[%s3707 + $0x90] sm:$0xff]
        %v3727 = vld [vmem:[%s3707 + $0x98] sm:$0xff]
        %v3728 = vld [vmem:[%s3707 + $0xa0] sm:$0xff]
        %v3729 = vld [vmem:[%s3707 + $0xa8] sm:$0xff]
        %v3730 = vld [vmem:[%s3707 + $0xb0] sm:$0xff]
        %v3731 = vld [vmem:[%s3707 + $0xb8] sm:$0xff]
        %v3732 = vld [vmem:[%s3707 + $0xc0] sm:$0xff]
        %v3733 = vld [vmem:[%s3707 + $0xc8] sm:$0xff]
        %v3734 = vld [vmem:[%s3707 + $0xd0] sm:$0xff]
        %v3735 = vld [vmem:[%s3707 + $0xd8] sm:$0xff]
        %v3736 = vld [vmem:[%s3707 + $0xe0] sm:$0xff]
        %v3737 = vld [vmem:[%s3707 + $0xe8] sm:$0xff]
        %v3738 = vld [vmem:[%s3707 + $0xf0] sm:$0xff]
        %v3739 = vld [vmem:[%s3707 + $0xf8] sm:$0xff]
        %v3740 = vld [vmem:[%s3707 + $0x100] sm:$0xff]
        %v3741 = vld [vmem:[%s3707 + $0x108] sm:$0xff]
        %v3742 = vld [vmem:[%s3707 + $0x110] sm:$0xff]
        %v3743 = vld [vmem:[%s3707 + $0x118] sm:$0xff]
        %v3744 = vld [vmem:[%s3707 + $0x120] sm:$0xff]
        %v3745 = vld [vmem:[%s3707 + $0x128] sm:$0xff]
        %v3746 = vld [vmem:[%s3707 + $0x130] sm:$0xff]
        %v3747 = vld [vmem:[%s3707 + $0x138] sm:$0xff]
        %s3748 = scalar_lea.vmem [#allocation2], 1280
        %v3749 = vld [vmem:[%s3748] sm:$0xff]
        %v3750 = vld [vmem:[%s3748 + $0x8] sm:$0xff]
        %v3751 = vld [vmem:[%s3748 + $0x10] sm:$0xff]
        %v3752 = vld [vmem:[%s3748 + $0x18] sm:$0xff]
        %v3753 = vld [vmem:[%s3748 + $0x20] sm:$0xff]
        %v3754 = vld [vmem:[%s3748 + $0x28] sm:$0xff]
        %v3755 = vld [vmem:[%s3748 + $0x30] sm:$0xff]
        %v3756 = vld [vmem:[%s3748 + $0x38] sm:$0xff]
        %v3757 = vld [vmem:[%s3748 + $0x40] sm:$0xff]
        %v3758 = vld [vmem:[%s3748 + $0x48] sm:$0xff]
        %v3759 = vld [vmem:[%s3748 + $0x50] sm:$0xff]
        %v3760 = vld [vmem:[%s3748 + $0x58] sm:$0xff]
        %v3761 = vld [vmem:[%s3748 + $0x60] sm:$0xff]
        %v3762 = vld [vmem:[%s3748 + $0x68] sm:$0xff]
        %v3763 = vld [vmem:[%s3748 + $0x70] sm:$0xff]
        %v3764 = vld [vmem:[%s3748 + $0x78] sm:$0xff]
        %v3765 = vld [vmem:[%s3748 + $0x80] sm:$0xff]
        %v3766 = vld [vmem:[%s3748 + $0x88] sm:$0xff]
        %v3767 = vld [vmem:[%s3748 + $0x90] sm:$0xff]
        %v3768 = vld [vmem:[%s3748 + $0x98] sm:$0xff]
        %v3769 = vld [vmem:[%s3748 + $0xa0] sm:$0xff]
        %v3770 = vld [vmem:[%s3748 + $0xa8] sm:$0xff]
        %v3771 = vld [vmem:[%s3748 + $0xb0] sm:$0xff]
        %v3772 = vld [vmem:[%s3748 + $0xb8] sm:$0xff]
        %v3773 = vld [vmem:[%s3748 + $0xc0] sm:$0xff]
        %v3774 = vld [vmem:[%s3748 + $0xc8] sm:$0xff]
        %v3775 = vld [vmem:[%s3748 + $0xd0] sm:$0xff]
        %v3776 = vld [vmem:[%s3748 + $0xd8] sm:$0xff]
        %v3777 = vld [vmem:[%s3748 + $0xe0] sm:$0xff]
        %v3778 = vld [vmem:[%s3748 + $0xe8] sm:$0xff]
        %v3779 = vld [vmem:[%s3748 + $0xf0] sm:$0xff]
        %v3780 = vld [vmem:[%s3748 + $0xf8] sm:$0xff]
        %v3781 = vld [vmem:[%s3748 + $0x100] sm:$0xff]
        %v3782 = vld [vmem:[%s3748 + $0x108] sm:$0xff]
        %v3783 = vld [vmem:[%s3748 + $0x110] sm:$0xff]
        %v3784 = vld [vmem:[%s3748 + $0x118] sm:$0xff]
        %v3785 = vld [vmem:[%s3748 + $0x120] sm:$0xff]
        %v3786 = vld [vmem:[%s3748 + $0x128] sm:$0xff]
        %v3787 = vld [vmem:[%s3748 + $0x130] sm:$0xff]
        %v3788 = vld [vmem:[%s3748 + $0x138] sm:$0xff]
        %v3790 = vsel %vm1653, %v3626, 0
        %3792 = vmatpush.msra.mxu0 %v3779
        %3793 = vmatpush.msra.mxu0 %v3777
        %3794 = vmatpush.msra.mxu0 %v3775
        %3795 = vmatpush.msra.mxu0 %v3773
        %3796 = vmatpush.msra.mxu0 %v3771
        %3797 = vmatpush.msra.mxu0 %v3769
        %3798 = vmatpush.msra.mxu0 %v3767
        %3799 = vmatpush.msra.mxu0 %v3765
        %3800 = vmatpush.msra.mxu0 %v3763
        %3801 = vmatpush.msra.mxu0 %v3761
        %3802 = vmatpush.msra.mxu0 %v3759
        %3803 = vmatpush.msra.mxu0 %v3757
        %3804 = vmatpush.msra.mxu0 %v3755
        %3805 = vmatpush.msra.mxu0 %v3753
        %3806 = vmatpush.msra.mxu0 %v3751
        %3807 = vmatpush.msra.mxu0 %v3749
        %3808 = vmatmul.f32.gmra.mxu0 %v3625
        %v3809 = vpop.f32.mrf.mxu0
        %v3810 = vadd.f32 0.0, %v3809
        %3811 = vdwg.mxu0
        %3812 = vmatpush.msra.mxu0 0.0
        %3813 = vmatpush.msra.mxu0 0.0
        %3814 = vmatpush.msra.mxu0 0.0
        %3815 = vmatpush.msra.mxu0 0.0
        %3816 = vmatpush.msra.mxu0 0.0
        %3817 = vmatpush.msra.mxu0 0.0
        %3818 = vmatpush.msra.mxu0 0.0
        %3819 = vmatpush.msra.mxu0 0.0
        %3820 = vmatpush.msra.mxu0 0.0
        %3821 = vmatpush.msra.mxu0 0.0
        %3822 = vmatpush.msra.mxu0 0.0
        %3823 = vmatpush.msra.mxu0 0.0
        %3824 = vmatpush.msra.mxu0 %v3787
        %3825 = vmatpush.msra.mxu0 %v3785
        %3826 = vmatpush.msra.mxu0 %v3783
        %3827 = vmatpush.msra.mxu0 %v3781
        %3828 = vmatmul.f32.gmra.mxu0 %v3790
        %v3829 = vpop.f32.mrf.mxu0
        %v3830 = vadd.f32 %v3810, %v3829
        %3831 = vdwg.mxu0
        %3832 = vmatpush.msra.mxu0 %v3780
        %3833 = vmatpush.msra.mxu0 %v3778
        %3834 = vmatpush.msra.mxu0 %v3776
        %3835 = vmatpush.msra.mxu0 %v3774
        %3836 = vmatpush.msra.mxu0 %v3772
        %3837 = vmatpush.msra.mxu0 %v3770
        %3838 = vmatpush.msra.mxu0 %v3768
        %3839 = vmatpush.msra.mxu0 %v3766
        %3840 = vmatpush.msra.mxu0 %v3764
        %3841 = vmatpush.msra.mxu0 %v3762
        %3842 = vmatpush.msra.mxu0 %v3760
        %3843 = vmatpush.msra.mxu0 %v3758
        %3844 = vmatpush.msra.mxu0 %v3756
        %3845 = vmatpush.msra.mxu0 %v3754
        %3846 = vmatpush.msra.mxu0 %v3752
        %3847 = vmatpush.msra.mxu0 %v3750
        %3848 = vmatmul.f32.gmra.mxu0 %v3625
        %v3849 = vpop.f32.mrf.mxu0
        %v3850 = vadd.f32 0.0, %v3849
        %3851 = vdwg.mxu0
        %3852 = vmatpush.msra.mxu0 0.0
        %3853 = vmatpush.msra.mxu0 0.0
        %3854 = vmatpush.msra.mxu0 0.0
        %3855 = vmatpush.msra.mxu0 0.0
        %3856 = vmatpush.msra.mxu0 0.0
        %3857 = vmatpush.msra.mxu0 0.0
        %3858 = vmatpush.msra.mxu0 0.0
        %3859 = vmatpush.msra.mxu0 0.0
        %3860 = vmatpush.msra.mxu0 0.0
        %3861 = vmatpush.msra.mxu0 0.0
        %3862 = vmatpush.msra.mxu0 0.0
        %3863 = vmatpush.msra.mxu0 0.0
        %3864 = vmatpush.msra.mxu0 %v3788
        %3865 = vmatpush.msra.mxu0 %v3786
        %3866 = vmatpush.msra.mxu0 %v3784
        %3867 = vmatpush.msra.mxu0 %v3782
        %3868 = vmatmul.f32.gmra.mxu0 %v3790
        %v3869 = vpop.f32.mrf.mxu0
        %v3870 = vadd.f32 %v3850, %v3869
        %3871 = vdwg.mxu0
        %v3873 = vsel %vm1653, %v3665, 0
        %3875 = vmatpush.msra.mxu0 %v3738
        %3876 = vmatpush.msra.mxu0 %v3736
        %3877 = vmatpush.msra.mxu0 %v3734
        %3878 = vmatpush.msra.mxu0 %v3732
        %3879 = vmatpush.msra.mxu0 %v3730
        %3880 = vmatpush.msra.mxu0 %v3728
        %3881 = vmatpush.msra.mxu0 %v3726
        %3882 = vmatpush.msra.mxu0 %v3724
        %3883 = vmatpush.msra.mxu0 %v3722
        %3884 = vmatpush.msra.mxu0 %v3720
        %3885 = vmatpush.msra.mxu0 %v3718
        %3886 = vmatpush.msra.mxu0 %v3716
        %3887 = vmatpush.msra.mxu0 %v3714
        %3888 = vmatpush.msra.mxu0 %v3712
        %3889 = vmatpush.msra.mxu0 %v3710
        %3890 = vmatpush.msra.mxu0 %v3708
        %3891 = vmatmul.f32.gmra.mxu0 %v3645
        %v3892 = vpop.f32.mrf.mxu0
        %v3893 = vadd.f32 %v3830, %v3892
        %3894 = vdwg.mxu0
        %3895 = vmatpush.msra.mxu0 0.0
        %3896 = vmatpush.msra.mxu0 0.0
        %3897 = vmatpush.msra.mxu0 0.0
        %3898 = vmatpush.msra.mxu0 0.0
        %3899 = vmatpush.msra.mxu0 0.0
        %3900 = vmatpush.msra.mxu0 0.0
        %3901 = vmatpush.msra.mxu0 0.0
        %3902 = vmatpush.msra.mxu0 0.0
        %3903 = vmatpush.msra.mxu0 0.0
        %3904 = vmatpush.msra.mxu0 0.0
        %3905 = vmatpush.msra.mxu0 0.0
        %3906 = vmatpush.msra.mxu0 0.0
        %3907 = vmatpush.msra.mxu0 %v3746
        %3908 = vmatpush.msra.mxu0 %v3744
        %3909 = vmatpush.msra.mxu0 %v3742
        %3910 = vmatpush.msra.mxu0 %v3740
        %3911 = vmatmul.f32.gmra.mxu0 %v3873
        %v3912 = vpop.f32.mrf.mxu0
        %v3913 = vadd.f32 %v3893, %v3912
        %3914 = vdwg.mxu0
        %3915 = vmatpush.msra.mxu0 %v3739
        %3916 = vmatpush.msra.mxu0 %v3737
        %3917 = vmatpush.msra.mxu0 %v3735
        %3918 = vmatpush.msra.mxu0 %v3733
        %3919 = vmatpush.msra.mxu0 %v3731
        %3920 = vmatpush.msra.mxu0 %v3729
        %3921 = vmatpush.msra.mxu0 %v3727
        %3922 = vmatpush.msra.mxu0 %v3725
        %3923 = vmatpush.msra.mxu0 %v3723
        %3924 = vmatpush.msra.mxu0 %v3721
        %3925 = vmatpush.msra.mxu0 %v3719
        %3926 = vmatpush.msra.mxu0 %v3717
        %3927 = vmatpush.msra.mxu0 %v3715
        %3928 = vmatpush.msra.mxu0 %v3713
        %3929 = vmatpush.msra.mxu0 %v3711
        %3930 = vmatpush.msra.mxu0 %v3709
        %3931 = vmatmul.f32.gmra.mxu0 %v3645
        %v3932 = vpop.f32.mrf.mxu0
        %v3933 = vadd.f32 %v3870, %v3932
        %3934 = vdwg.mxu0
        %3935 = vmatpush.msra.mxu0 0.0
        %3936 = vmatpush.msra.mxu0 0.0
        %3937 = vmatpush.msra.mxu0 0.0
        %3938 = vmatpush.msra.mxu0 0.0
        %3939 = vmatpush.msra.mxu0 0.0
        %3940 = vmatpush.msra.mxu0 0.0
        %3941 = vmatpush.msra.mxu0 0.0
        %3942 = vmatpush.msra.mxu0 0.0
        %3943 = vmatpush.msra.mxu0 0.0
        %3944 = vmatpush.msra.mxu0 0.0
        %3945 = vmatpush.msra.mxu0 0.0
        %3946 = vmatpush.msra.mxu0 0.0
        %3947 = vmatpush.msra.mxu0 %v3747
        %3948 = vmatpush.msra.mxu0 %v3745
        %3949 = vmatpush.msra.mxu0 %v3743
        %3950 = vmatpush.msra.mxu0 %v3741
        %3951 = vmatmul.f32.gmra.mxu0 %v3873
        %v3952 = vpop.f32.mrf.mxu0
        %v3953 = vadd.f32 %v3933, %v3952
        %3954 = vdwg.mxu0
        %s3955 = scalar_lea.vmem [#allocation2], 1600
        %v3956 = vld [vmem:[%s3955] sm:$0xff]
        %v3957 = vld [vmem:[%s3955 + $0x8] sm:$0xff]
        %v3958 = vld [vmem:[%s3955 + $0x10] sm:$0xff]
        %v3959 = vld [vmem:[%s3955 + $0x18] sm:$0xff]
        %v3960 = vld [vmem:[%s3955 + $0x20] sm:$0xff]
        %v3961 = vld [vmem:[%s3955 + $0x28] sm:$0xff]
        %v3962 = vld [vmem:[%s3955 + $0x30] sm:$0xff]
        %v3963 = vld [vmem:[%s3955 + $0x38] sm:$0xff]
        %v3964 = vld [vmem:[%s3955 + $0x40] sm:$0xff]
        %v3965 = vld [vmem:[%s3955 + $0x48] sm:$0xff]
        %v3966 = vld [vmem:[%s3955 + $0x50] sm:$0xff]
        %v3967 = vld [vmem:[%s3955 + $0x58] sm:$0xff]
        %v3968 = vld [vmem:[%s3955 + $0x60] sm:$0xff]
        %v3969 = vld [vmem:[%s3955 + $0x68] sm:$0xff]
        %v3970 = vld [vmem:[%s3955 + $0x70] sm:$0xff]
        %v3971 = vld [vmem:[%s3955 + $0x78] sm:$0xff]
        %v3972 = vld [vmem:[%s3955 + $0x80] sm:$0xff]
        %v3973 = vld [vmem:[%s3955 + $0x88] sm:$0xff]
        %v3974 = vld [vmem:[%s3955 + $0x90] sm:$0xff]
        %v3975 = vld [vmem:[%s3955 + $0x98] sm:$0xff]
        %v3976 = vld [vmem:[%s3955 + $0xa0] sm:$0xff]
        %v3977 = vld [vmem:[%s3955 + $0xa8] sm:$0xff]
        %v3978 = vld [vmem:[%s3955 + $0xb0] sm:$0xff]
        %v3979 = vld [vmem:[%s3955 + $0xb8] sm:$0xff]
        %v3980 = vld [vmem:[%s3955 + $0xc0] sm:$0xff]
        %v3981 = vld [vmem:[%s3955 + $0xc8] sm:$0xff]
        %v3982 = vld [vmem:[%s3955 + $0xd0] sm:$0xff]
        %v3983 = vld [vmem:[%s3955 + $0xd8] sm:$0xff]
        %v3984 = vld [vmem:[%s3955 + $0xe0] sm:$0xff]
        %v3985 = vld [vmem:[%s3955 + $0xe8] sm:$0xff]
        %v3986 = vld [vmem:[%s3955 + $0xf0] sm:$0xff]
        %v3987 = vld [vmem:[%s3955 + $0xf8] sm:$0xff]
        %v3988 = vld [vmem:[%s3955 + $0x100] sm:$0xff]
        %v3989 = vld [vmem:[%s3955 + $0x108] sm:$0xff]
        %v3990 = vld [vmem:[%s3955 + $0x110] sm:$0xff]
        %v3991 = vld [vmem:[%s3955 + $0x118] sm:$0xff]
        %v3992 = vld [vmem:[%s3955 + $0x120] sm:$0xff]
        %v3993 = vld [vmem:[%s3955 + $0x128] sm:$0xff]
        %v3994 = vld [vmem:[%s3955 + $0x130] sm:$0xff]
        %v3995 = vld [vmem:[%s3955 + $0x138] sm:$0xff]
        %v3997 = vsel %vm1653, %v3705, 0
        %3999 = vmatpush.msra.mxu0 %v3986
        %4000 = vmatpush.msra.mxu0 %v3984
        %4001 = vmatpush.msra.mxu0 %v3982
        %4002 = vmatpush.msra.mxu0 %v3980
        %4003 = vmatpush.msra.mxu0 %v3978
        %4004 = vmatpush.msra.mxu0 %v3976
        %4005 = vmatpush.msra.mxu0 %v3974
        %4006 = vmatpush.msra.mxu0 %v3972
        %4007 = vmatpush.msra.mxu0 %v3970
        %4008 = vmatpush.msra.mxu0 %v3968
        %4009 = vmatpush.msra.mxu0 %v3966
        %4010 = vmatpush.msra.mxu0 %v3964
        %4011 = vmatpush.msra.mxu0 %v3962
        %4012 = vmatpush.msra.mxu0 %v3960
        %4013 = vmatpush.msra.mxu0 %v3958
        %4014 = vmatpush.msra.mxu0 %v3956
        %4015 = vmatmul.f32.gmra.mxu0 %v3685
        %v4016 = vpop.f32.mrf.mxu0
        %v4017 = vadd.f32 0.0, %v4016
        %4018 = vdwg.mxu0
        %4019 = vmatpush.msra.mxu0 0.0
        %4020 = vmatpush.msra.mxu0 0.0
        %4021 = vmatpush.msra.mxu0 0.0
        %4022 = vmatpush.msra.mxu0 0.0
        %4023 = vmatpush.msra.mxu0 0.0
        %4024 = vmatpush.msra.mxu0 0.0
        %4025 = vmatpush.msra.mxu0 0.0
        %4026 = vmatpush.msra.mxu0 0.0
        %4027 = vmatpush.msra.mxu0 0.0
        %4028 = vmatpush.msra.mxu0 0.0
        %4029 = vmatpush.msra.mxu0 0.0
        %4030 = vmatpush.msra.mxu0 0.0
        %4031 = vmatpush.msra.mxu0 %v3994
        %4032 = vmatpush.msra.mxu0 %v3992
        %4033 = vmatpush.msra.mxu0 %v3990
        %4034 = vmatpush.msra.mxu0 %v3988
        %4035 = vmatmul.f32.gmra.mxu0 %v3997
        %v4036 = vpop.f32.mrf.mxu0
        %v4037 = vadd.f32 %v4017, %v4036
        %4038 = vdwg.mxu0
        %4039 = vmatpush.msra.mxu0 %v3987
        %4040 = vmatpush.msra.mxu0 %v3985
        %4041 = vmatpush.msra.mxu0 %v3983
        %4042 = vmatpush.msra.mxu0 %v3981
        %4043 = vmatpush.msra.mxu0 %v3979
        %4044 = vmatpush.msra.mxu0 %v3977
        %4045 = vmatpush.msra.mxu0 %v3975
        %4046 = vmatpush.msra.mxu0 %v3973
        %4047 = vmatpush.msra.mxu0 %v3971
        %4048 = vmatpush.msra.mxu0 %v3969
        %4049 = vmatpush.msra.mxu0 %v3967
        %4050 = vmatpush.msra.mxu0 %v3965
        %4051 = vmatpush.msra.mxu0 %v3963
        %4052 = vmatpush.msra.mxu0 %v3961
        %4053 = vmatpush.msra.mxu0 %v3959
        %4054 = vmatpush.msra.mxu0 %v3957
        %4055 = vmatmul.f32.gmra.mxu0 %v3685
        %v4056 = vpop.f32.mrf.mxu0
        %v4057 = vadd.f32 0.0, %v4056
        %4058 = vdwg.mxu0
        %4059 = vmatpush.msra.mxu0 0.0
        %4060 = vmatpush.msra.mxu0 0.0
        %4061 = vmatpush.msra.mxu0 0.0
        %4062 = vmatpush.msra.mxu0 0.0
        %4063 = vmatpush.msra.mxu0 0.0
        %4064 = vmatpush.msra.mxu0 0.0
        %4065 = vmatpush.msra.mxu0 0.0
        %4066 = vmatpush.msra.mxu0 0.0
        %4067 = vmatpush.msra.mxu0 0.0
        %4068 = vmatpush.msra.mxu0 0.0
        %4069 = vmatpush.msra.mxu0 0.0
        %4070 = vmatpush.msra.mxu0 0.0
        %4071 = vmatpush.msra.mxu0 %v3995
        %4072 = vmatpush.msra.mxu0 %v3993
        %4073 = vmatpush.msra.mxu0 %v3991
        %4074 = vmatpush.msra.mxu0 %v3989
        %4075 = vmatmul.f32.gmra.mxu0 %v3997
        %v4076 = vpop.f32.mrf.mxu0
        %v4077 = vadd.f32 %v4057, %v4076
        %4078 = vdwg.mxu0
        %v4079 = vadd.f32 %v3913, %v4037
        %v4080 = vadd.f32 %v3953, %v4077
        %s4081 = scalar_lea.vmem %s37, 2
        %v4082 = vld [vmem:[%s4081] sm:$0x3]
        %v4084 = vperm.slane %v4082, 0
        %v4085 = vperm.slane %v4082, 1
        %v4088 = vadd.f32 %v4079, %v4084
        %v4089 = vadd.f32 %v4080, %v4085
        %s4090 = scalar_lea.vmem %s39, 2
        %v4091 = vld [vmem:[%s4090] sm:$0x3]
        %s4092 = scalar_lea.vmem %s41, 2
        %v4093 = vld [vmem:[%s4092] sm:$0x3]
        %v4094 = vrot.slane %v4088, 4
        %v4095 = vadd.f32 %v4088, %v4094
        %v4096 = vrot.slane %v4095, 2
        %v4097 = vadd.f32 %v4095, %v4096
        %v4098 = vrot.slane %v4097, 1
        %v4099 = vadd.f32 %v4097, %v4098
        %v4100 = vsel %vm1653, %v4089, 0.0
        %v4101 = vrot.slane %v4100, 4
        %v4102 = vadd.f32 %v4100, %v4101
        %v4103 = vrot.slane %v4102, 2
        %v4104 = vadd.f32 %v4102, %v4103
        %v4105 = vrot.slane %v4104, 1
        %v4106 = vadd.f32 %v4104, %v4105
        %v4108 = vsel %vm1653, %v4106, 0
        %4110 = vmatpush.msra.mxu0 %v1056
        %4111 = vmatpush.msra.mxu0 %v1055
        %4112 = vmatpush.msra.mxu0 %v1054
        %4113 = vmatpush.msra.mxu0 %v1053
        %4114 = vmatpush.msra.mxu0 %v1052
        %4115 = vmatpush.msra.mxu0 %v1051
        %4116 = vmatpush.msra.mxu0 %v1050
        %4117 = vmatpush.msra.mxu0 %v1049
        %4118 = vmatpush.msra.mxu0 %v1048
        %4119 = vmatpush.msra.mxu0 %v1047
        %4120 = vmatpush.msra.mxu0 %v1046
        %4121 = vmatpush.msra.mxu0 %v1045
        %4122 = vmatpush.msra.mxu0 %v1044
        %4123 = vmatpush.msra.mxu0 %v1043
        %4124 = vmatpush.msra.mxu0 %v1042
        %4125 = vmatpush.msra.mxu0 %v1041
        %4126 = vmatmul.f32.gmra.mxu0 %v4099
        %v4127 = vpop.f32.mrf.mxu0
        %v4128 = vadd.f32 0.0, %v4127
        %4129 = vdwg.mxu0
        %4130 = vmatpush.msra.mxu0 0.0
        %4131 = vmatpush.msra.mxu0 0.0
        %4132 = vmatpush.msra.mxu0 0.0
        %4133 = vmatpush.msra.mxu0 0.0
        %4134 = vmatpush.msra.mxu0 0.0
        %4135 = vmatpush.msra.mxu0 0.0
        %4136 = vmatpush.msra.mxu0 0.0
        %4137 = vmatpush.msra.mxu0 0.0
        %4138 = vmatpush.msra.mxu0 0.0
        %4139 = vmatpush.msra.mxu0 0.0
        %4140 = vmatpush.msra.mxu0 0.0
        %4141 = vmatpush.msra.mxu0 0.0
        %4142 = vmatpush.msra.mxu0 %v1060
        %4143 = vmatpush.msra.mxu0 %v1059
        %4144 = vmatpush.msra.mxu0 %v1058
        %4145 = vmatpush.msra.mxu0 %v1057
        %4146 = vmatmul.f32.gmra.mxu0 %v4108
        %v4147 = vpop.f32.mrf.mxu0
        %v4148 = vadd.f32 %v4128, %v4147
        %4149 = vdwg.mxu0
        %v4150 = vmul.f32 %v4148, %v1710
        %v4152 = vsel %vm1712, %v4150, 0
        %4154 = vmatpush.msra.mxu0 0.0
        %4155 = vmatpush.msra.mxu0 0.0
        %4156 = vmatpush.msra.mxu0 0.0
        %4157 = vmatpush.msra.mxu0 0.0
        %4158 = vmatpush.msra.mxu0 0.0
        %4159 = vmatpush.msra.mxu0 0.0
        %4160 = vmatpush.msra.mxu0 0.0
        %4161 = vmatpush.msra.mxu0 0.0
        %4162 = vmatpush.msra.mxu0 0.0
        %4163 = vmatpush.msra.mxu0 0.0
        %4164 = vmatpush.msra.mxu0 0.0
        %4165 = vmatpush.msra.mxu0 0.0
        %4166 = vmatpush.msra.mxu0 0.0
        %4167 = vmatpush.msra.mxu0 0.0
        %4168 = vmatpush.msra.mxu0 %v1718
        %4169 = vmatpush.msra.mxu0 %v1065
        %4170 = vmatmul.f32.gmra.mxu0 %v4152
        %v4171 = vpop.f32.mrf.mxu0
        %v4172 = vadd.f32 0.0, %v4171
        %4173 = vdwg.mxu0
        %4174 = vmatpush.msra.mxu0 0.0
        %4175 = vmatpush.msra.mxu0 0.0
        %4176 = vmatpush.msra.mxu0 0.0
        %4177 = vmatpush.msra.mxu0 0.0
        %4178 = vmatpush.msra.mxu0 0.0
        %4179 = vmatpush.msra.mxu0 0.0
        %4180 = vmatpush.msra.mxu0 0.0
        %4181 = vmatpush.msra.mxu0 0.0
        %4182 = vmatpush.msra.mxu0 0.0
        %4183 = vmatpush.msra.mxu0 0.0
        %4184 = vmatpush.msra.mxu0 0.0
        %4185 = vmatpush.msra.mxu0 0.0
        %4186 = vmatpush.msra.mxu0 0.0
        %4187 = vmatpush.msra.mxu0 0.0
        %4188 = vmatpush.msra.mxu0 %v1721
        %4189 = vmatpush.msra.mxu0 %v1066
        %4190 = vmatmul.f32.gmra.mxu0 %v4152
        %v4191 = vpop.f32.mrf.mxu0
        %v4192 = vadd.f32 0.0, %v4191
        %4193 = vdwg.mxu0
        %v4194 = vperm.slane %v4172, 0
        %v4195 = vperm.slane %v4192, 0
        %v4196 = vsub.f32 %v4088, %v4194
        %v4197 = vsub.f32 %v4089, %v4195
        %v4198 = vmul.f32 %v4196, %v4196
        %v4199 = vmul.f32 %v4197, %v4197
        %v4200 = vrot.slane %v4198, 4
        %v4201 = vadd.f32 %v4198, %v4200
        %v4202 = vrot.slane %v4201, 2
        %v4203 = vadd.f32 %v4201, %v4202
        %v4204 = vrot.slane %v4203, 1
        %v4205 = vadd.f32 %v4203, %v4204
        %v4206 = vsel %vm1653, %v4199, 0.0
        %v4207 = vrot.slane %v4206, 4
        %v4208 = vadd.f32 %v4206, %v4207
        %v4209 = vrot.slane %v4208, 2
        %v4210 = vadd.f32 %v4208, %v4209
        %v4211 = vrot.slane %v4210, 1
        %v4212 = vadd.f32 %v4210, %v4211
        %v4214 = vsel %vm1653, %v4212, 0
        %4216 = vmatpush.msra.mxu0 %v1056
        %4217 = vmatpush.msra.mxu0 %v1055
        %4218 = vmatpush.msra.mxu0 %v1054
        %4219 = vmatpush.msra.mxu0 %v1053
        %4220 = vmatpush.msra.mxu0 %v1052
        %4221 = vmatpush.msra.mxu0 %v1051
        %4222 = vmatpush.msra.mxu0 %v1050
        %4223 = vmatpush.msra.mxu0 %v1049
        %4224 = vmatpush.msra.mxu0 %v1048
        %4225 = vmatpush.msra.mxu0 %v1047
        %4226 = vmatpush.msra.mxu0 %v1046
        %4227 = vmatpush.msra.mxu0 %v1045
        %4228 = vmatpush.msra.mxu0 %v1044
        %4229 = vmatpush.msra.mxu0 %v1043
        %4230 = vmatpush.msra.mxu0 %v1042
        %4231 = vmatpush.msra.mxu0 %v1041
        %4232 = vmatmul.f32.gmra.mxu0 %v4205
        %v4233 = vpop.f32.mrf.mxu0
        %v4234 = vadd.f32 0.0, %v4233
        %4235 = vdwg.mxu0
        %4236 = vmatpush.msra.mxu0 0.0
        %4237 = vmatpush.msra.mxu0 0.0
        %4238 = vmatpush.msra.mxu0 0.0
        %4239 = vmatpush.msra.mxu0 0.0
        %4240 = vmatpush.msra.mxu0 0.0
        %4241 = vmatpush.msra.mxu0 0.0
        %4242 = vmatpush.msra.mxu0 0.0
        %4243 = vmatpush.msra.mxu0 0.0
        %4244 = vmatpush.msra.mxu0 0.0
        %4245 = vmatpush.msra.mxu0 0.0
        %4246 = vmatpush.msra.mxu0 0.0
        %4247 = vmatpush.msra.mxu0 0.0
        %4248 = vmatpush.msra.mxu0 %v1060
        %4249 = vmatpush.msra.mxu0 %v1059
        %4250 = vmatpush.msra.mxu0 %v1058
        %4251 = vmatpush.msra.mxu0 %v1057
        %4252 = vmatmul.f32.gmra.mxu0 %v4214
        %v4253 = vpop.f32.mrf.mxu0
        %v4254 = vadd.f32 %v4234, %v4253
        %4255 = vdwg.mxu0
        %v4256 = vmul.f32 %v4254, %v1710
        %v4258 = vsel %vm1712, %v4256, 0
        %4260 = vmatpush.msra.mxu0 0.0
        %4261 = vmatpush.msra.mxu0 0.0
        %4262 = vmatpush.msra.mxu0 0.0
        %4263 = vmatpush.msra.mxu0 0.0
        %4264 = vmatpush.msra.mxu0 0.0
        %4265 = vmatpush.msra.mxu0 0.0
        %4266 = vmatpush.msra.mxu0 0.0
        %4267 = vmatpush.msra.mxu0 0.0
        %4268 = vmatpush.msra.mxu0 0.0
        %4269 = vmatpush.msra.mxu0 0.0
        %4270 = vmatpush.msra.mxu0 0.0
        %4271 = vmatpush.msra.mxu0 0.0
        %4272 = vmatpush.msra.mxu0 0.0
        %4273 = vmatpush.msra.mxu0 0.0
        %4274 = vmatpush.msra.mxu0 %v1718
        %4275 = vmatpush.msra.mxu0 %v1065
        %4276 = vmatmul.f32.gmra.mxu0 %v4258
        %v4277 = vpop.f32.mrf.mxu0
        %v4278 = vadd.f32 1e-05, %v4277
        %4279 = vdwg.mxu0
        %4280 = vmatpush.msra.mxu0 0.0
        %4281 = vmatpush.msra.mxu0 0.0
        %4282 = vmatpush.msra.mxu0 0.0
        %4283 = vmatpush.msra.mxu0 0.0
        %4284 = vmatpush.msra.mxu0 0.0
        %4285 = vmatpush.msra.mxu0 0.0
        %4286 = vmatpush.msra.mxu0 0.0
        %4287 = vmatpush.msra.mxu0 0.0
        %4288 = vmatpush.msra.mxu0 0.0
        %4289 = vmatpush.msra.mxu0 0.0
        %4290 = vmatpush.msra.mxu0 0.0
        %4291 = vmatpush.msra.mxu0 0.0
        %4292 = vmatpush.msra.mxu0 0.0
        %4293 = vmatpush.msra.mxu0 0.0
        %4294 = vmatpush.msra.mxu0 %v1721
        %4295 = vmatpush.msra.mxu0 %v1066
        %4296 = vmatmul.f32.gmra.mxu0 %v4258
        %v4297 = vpop.f32.mrf.mxu0
        %v4298 = vadd.f32 1e-05, %v4297
        %4299 = vdwg.mxu0
        %v4300 = vrsqrt.pop %v4278
        %v4301 = vmul.f32 %v4300, %v4278
        %v4302 = vmul.f32 %v4301, %v4300
        %v4303 = vmul.f32 0.5, %v4302
        %v4304 = vsub.f32 1.5, %v4303
        %v4305 = vmul.f32 %v4300, %v4304
        %vm4306 = vweird.f32 %v4278
        %vm4307 = vweird.f32 %v4300
        %vm4308 = vmor %vm4306, %vm4307
        %v4309 = vsel %vm4308, %v4300, %v4305
        %v4310 = vrsqrt.pop %v4298
        %v4311 = vmul.f32 %v4310, %v4298
        %v4312 = vmul.f32 %v4311, %v4310
        %v4313 = vmul.f32 0.5, %v4312
        %v4314 = vsub.f32 1.5, %v4313
        %v4315 = vmul.f32 %v4310, %v4314
        %vm4316 = vweird.f32 %v4298
        %vm4317 = vweird.f32 %v4310
        %vm4318 = vmor %vm4316, %vm4317
        %v4319 = vsel %vm4318, %v4310, %v4315
        %v4320 = vperm.slane %v4309, 0
        %v4321 = vperm.slane %v4319, 0
        %v4322 = vmul.f32 %v4196, %v4320
        %v4323 = vmul.f32 %v4197, %v4321
        %v4325 = vperm.slane %v4091, 0
        %v4326 = vperm.slane %v4091, 1
        %v4329 = vmul.f32 %v4322, %v4325
        %v4330 = vmul.f32 %v4323, %v4326
        %v4332 = vperm.slane %v4093, 0
        %v4333 = vperm.slane %v4093, 1
        %v4336 = vadd.f32 %v4329, %v4332
        %v4337 = vadd.f32 %v4330, %v4333
        %v4338 = vmul.f32 %v4336, %v4336
        %v4339 = vmul.f32 %v4337, %v4337
        %v4340 = vmul.f32 %v4336, %v4338
        %v4341 = vmul.f32 %v4337, %v4339
        %v4342 = vmul.f32 %v4340, 0.044715
        %v4343 = vmul.f32 %v4341, 0.044715
        %v4344 = vadd.f32 %v4336, %v4342
        %v4345 = vadd.f32 %v4337, %v4343
        %v4346 = vmul.f32 %v4344, 0.7978846
        %v4347 = vmul.f32 %v4345, 0.7978846
        %v4348 = vtanh.pop %v4346
        %v4349 = vtanh.pop %v4347
        %v4350 = vadd.f32 %v4348, 1.0
        %v4351 = vadd.f32 %v4349, 1.0
        %v4352 = vmul.f32 %v4350, 0.5
        %v4353 = vmul.f32 %v4351, 0.5
        %v4354 = vmul.f32 %v4336, %v4352
        %v4355 = vmul.f32 %v4337, %v4353
        %s4356 = scalar_lea.vmem %s43, 160
        %v4357 = vld [vmem:[%s4356] sm:$0xff]
        %v4358 = vld [vmem:[%s4356 + $0x8] sm:$0xff]
        %v4359 = vld [vmem:[%s4356 + $0x10] sm:$0xff]
        %v4360 = vld [vmem:[%s4356 + $0x18] sm:$0xff]
        %v4361 = vld [vmem:[%s4356 + $0x20] sm:$0xff]
        %v4362 = vld [vmem:[%s4356 + $0x28] sm:$0xff]
        %v4363 = vld [vmem:[%s4356 + $0x30] sm:$0xff]
        %v4364 = vld [vmem:[%s4356 + $0x38] sm:$0xff]
        %v4365 = vld [vmem:[%s4356 + $0x40] sm:$0xff]
        %v4366 = vld [vmem:[%s4356 + $0x48] sm:$0xff]
        %v4367 = vld [vmem:[%s4356 + $0x50] sm:$0xff]
        %v4368 = vld [vmem:[%s4356 + $0x58] sm:$0xff]
        %v4369 = vld [vmem:[%s4356 + $0x60] sm:$0xff]
        %v4370 = vld [vmem:[%s4356 + $0x68] sm:$0xff]
        %v4371 = vld [vmem:[%s4356 + $0x70] sm:$0xff]
        %v4372 = vld [vmem:[%s4356 + $0x78] sm:$0xff]
        %v4373 = vld [vmem:[%s4356 + $0x80] sm:$0xff]
        %v4374 = vld [vmem:[%s4356 + $0x88] sm:$0xff]
        %v4375 = vld [vmem:[%s4356 + $0x90] sm:$0xff]
        %v4376 = vld [vmem:[%s4356 + $0x98] sm:$0xff]
        %s4377 = scalar_lea.vmem %s45, 1
        %v4378 = vld [vmem:[%s4377] sm:$0x1]
        %v4380 = vperm.slane %v4378, 0
        %v4383 = vsel %vm1653, %v4355, 0
        %4385 = vmatpush.msra.mxu0 %v4372
        %4386 = vmatpush.msra.mxu0 %v4371
        %4387 = vmatpush.msra.mxu0 %v4370
        %4388 = vmatpush.msra.mxu0 %v4369
        %4389 = vmatpush.msra.mxu0 %v4368
        %4390 = vmatpush.msra.mxu0 %v4367
        %4391 = vmatpush.msra.mxu0 %v4366
        %4392 = vmatpush.msra.mxu0 %v4365
        %4393 = vmatpush.msra.mxu0 %v4364
        %4394 = vmatpush.msra.mxu0 %v4363
        %4395 = vmatpush.msra.mxu0 %v4362
        %4396 = vmatpush.msra.mxu0 %v4361
        %4397 = vmatpush.msra.mxu0 %v4360
        %4398 = vmatpush.msra.mxu0 %v4359
        %4399 = vmatpush.msra.mxu0 %v4358
        %4400 = vmatpush.msra.mxu0 %v4357
        %4401 = vmatmul.f32.gmra.mxu0 %v4354
        %v4402 = vpop.f32.mrf.mxu0
        %v4403 = vadd.f32 %v4380, %v4402
        %4404 = vdwg.mxu0
        %4405 = vmatpush.msra.mxu0 0.0
        %4406 = vmatpush.msra.mxu0 0.0
        %4407 = vmatpush.msra.mxu0 0.0
        %4408 = vmatpush.msra.mxu0 0.0
        %4409 = vmatpush.msra.mxu0 0.0
        %4410 = vmatpush.msra.mxu0 0.0
        %4411 = vmatpush.msra.mxu0 0.0
        %4412 = vmatpush.msra.mxu0 0.0
        %4413 = vmatpush.msra.mxu0 0.0
        %4414 = vmatpush.msra.mxu0 0.0
        %4415 = vmatpush.msra.mxu0 0.0
        %4416 = vmatpush.msra.mxu0 0.0
        %4417 = vmatpush.msra.mxu0 %v4376
        %4418 = vmatpush.msra.mxu0 %v4375
        %4419 = vmatpush.msra.mxu0 %v4374
        %4420 = vmatpush.msra.mxu0 %v4373
        %4421 = vmatmul.f32.gmra.mxu0 %v4383
        %v4422 = vpop.f32.mrf.mxu0
        %v4423 = vadd.f32 %v4403, %v4422
        %4424 = vdwg.mxu0
        %s4425 = scalar_lea.vmem %s47, 1
        %v4426 = vld [vmem:[%s4425] sm:$0x1]
        %s4427 = scalar_lea.vmem %s49, 1
        %v4428 = vld [vmem:[%s4427] sm:$0x1]
        %v4429 = vsel %vm1155, %v4423, 0.0
        %v4430 = vrot.slane %v4429, 4
        %v4431 = vadd.f32 %v4429, %v4430
        %v4432 = vrot.slane %v4431, 2
        %v4433 = vadd.f32 %v4431, %v4432
        %v4434 = vrot.slane %v4433, 1
        %v4435 = vadd.f32 %v4433, %v4434
        %v4437 = vsel %vm1155, %v4435, 0
        %4439 = vmatpush.msra.mxu0 0.0
        %4440 = vmatpush.msra.mxu0 0.0
        %4441 = vmatpush.msra.mxu0 0.0
        %4442 = vmatpush.msra.mxu0 0.0
        %4443 = vmatpush.msra.mxu0 0.0
        %4444 = vmatpush.msra.mxu0 0.0
        %4445 = vmatpush.msra.mxu0 0.0
        %4446 = vmatpush.msra.mxu0 0.0
        %4447 = vmatpush.msra.mxu0 0.0
        %4448 = vmatpush.msra.mxu0 0.0
        %4449 = vmatpush.msra.mxu0 0.0
        %4450 = vmatpush.msra.mxu0 %v1105
        %4451 = vmatpush.msra.mxu0 %v1104
        %4452 = vmatpush.msra.mxu0 %v1103
        %4453 = vmatpush.msra.mxu0 %v1102
        %4454 = vmatpush.msra.mxu0 %v1101
        %4455 = vmatmul.f32.gmra.mxu0 %v4437
        %v4456 = vpop.f32.mrf.mxu0
        %v4457 = vadd.f32 0.0, %v4456
        %4458 = vdwg.mxu0
        %v4459 = vmul.f32 %v4457, %v2761
        %v4461 = vsel %vm1712, %v4459, 0
        %4463 = vmatpush.msra.mxu0 0.0
        %4464 = vmatpush.msra.mxu0 0.0
        %4465 = vmatpush.msra.mxu0 0.0
        %4466 = vmatpush.msra.mxu0 0.0
        %4467 = vmatpush.msra.mxu0 0.0
        %4468 = vmatpush.msra.mxu0 0.0
        %4469 = vmatpush.msra.mxu0 0.0
        %4470 = vmatpush.msra.mxu0 0.0
        %4471 = vmatpush.msra.mxu0 0.0
        %4472 = vmatpush.msra.mxu0 0.0
        %4473 = vmatpush.msra.mxu0 0.0
        %4474 = vmatpush.msra.mxu0 0.0
        %4475 = vmatpush.msra.mxu0 0.0
        %4476 = vmatpush.msra.mxu0 0.0
        %4477 = vmatpush.msra.mxu0 %v2767
        %4478 = vmatpush.msra.mxu0 %v1108
        %4479 = vmatmul.f32.gmra.mxu0 %v4461
        %v4480 = vpop.f32.mrf.mxu0
        %v4481 = vadd.f32 0.0, %v4480
        %4482 = vdwg.mxu0
        %v4483 = vperm.slane %v4481, 0
        %v4484 = vsub.f32 %v4423, %v4483
        %v4485 = vmul.f32 %v4484, %v4484
        %v4486 = vsel %vm1155, %v4485, 0.0
        %v4487 = vrot.slane %v4486, 4
        %v4488 = vadd.f32 %v4486, %v4487
        %v4489 = vrot.slane %v4488, 2
        %v4490 = vadd.f32 %v4488, %v4489
        %v4491 = vrot.slane %v4490, 1
        %v4492 = vadd.f32 %v4490, %v4491
        %v4494 = vsel %vm1155, %v4492, 0
        %4496 = vmatpush.msra.mxu0 0.0
        %4497 = vmatpush.msra.mxu0 0.0
        %4498 = vmatpush.msra.mxu0 0.0
        %4499 = vmatpush.msra.mxu0 0.0
        %4500 = vmatpush.msra.mxu0 0.0
        %4501 = vmatpush.msra.mxu0 0.0
        %4502 = vmatpush.msra.mxu0 0.0
        %4503 = vmatpush.msra.mxu0 0.0
        %4504 = vmatpush.msra.mxu0 0.0
        %4505 = vmatpush.msra.mxu0 0.0
        %4506 = vmatpush.msra.mxu0 0.0
        %4507 = vmatpush.msra.mxu0 %v1105
        %4508 = vmatpush.msra.mxu0 %v1104
        %4509 = vmatpush.msra.mxu0 %v1103
        %4510 = vmatpush.msra.mxu0 %v1102
        %4511 = vmatpush.msra.mxu0 %v1101
        %4512 = vmatmul.f32.gmra.mxu0 %v4494
        %v4513 = vpop.f32.mrf.mxu0
        %v4514 = vadd.f32 0.0, %v4513
        %4515 = vdwg.mxu0
        %v4516 = vmul.f32 %v4514, %v2761
        %v4518 = vsel %vm1712, %v4516, 0
        %4520 = vmatpush.msra.mxu0 0.0
        %4521 = vmatpush.msra.mxu0 0.0
        %4522 = vmatpush.msra.mxu0 0.0
        %4523 = vmatpush.msra.mxu0 0.0
        %4524 = vmatpush.msra.mxu0 0.0
        %4525 = vmatpush.msra.mxu0 0.0
        %4526 = vmatpush.msra.mxu0 0.0
        %4527 = vmatpush.msra.mxu0 0.0
        %4528 = vmatpush.msra.mxu0 0.0
        %4529 = vmatpush.msra.mxu0 0.0
        %4530 = vmatpush.msra.mxu0 0.0
        %4531 = vmatpush.msra.mxu0 0.0
        %4532 = vmatpush.msra.mxu0 0.0
        %4533 = vmatpush.msra.mxu0 0.0
        %4534 = vmatpush.msra.mxu0 %v2767
        %4535 = vmatpush.msra.mxu0 %v1108
        %4536 = vmatmul.f32.gmra.mxu0 %v4518
        %v4537 = vpop.f32.mrf.mxu0
        %v4538 = vadd.f32 1e-05, %v4537
        %4539 = vdwg.mxu0
        %v4540 = vrsqrt.pop %v4538
        %v4541 = vmul.f32 %v4540, %v4538
        %v4542 = vmul.f32 %v4541, %v4540
        %v4543 = vmul.f32 0.5, %v4542
        %v4544 = vsub.f32 1.5, %v4543
        %v4545 = vmul.f32 %v4540, %v4544
        %vm4546 = vweird.f32 %v4538
        %vm4547 = vweird.f32 %v4540
        %vm4548 = vmor %vm4546, %vm4547
        %v4549 = vsel %vm4548, %v4540, %v4545
        %v4550 = vperm.slane %v4549, 0
        %v4551 = vmul.f32 %v4484, %v4550
        %v4553 = vperm.slane %v4426, 0
        %v4555 = vmul.f32 %v4551, %v4553
        %v4557 = vperm.slane %v4428, 0
        %v4559 = vadd.f32 %v4555, %v4557
        %v4560 = vadd.f32 %v3265, %v4559
        %v4561 = vld [vmem:[%s51] sm:$0x1]
        %v4562 = vld [vmem:[%s53] sm:$0x1]
        %v4563 = vsel %vm1155, %v4560, 0.0
        %4564 = vadd.xlane.f32.xlu0 %v4563
        %v4565 = vpop.xlane.xlu0 %4564
        %v4566 = vmul.f32 %v4565, %v1165
        %v4567 = vsub.f32 %v4560, %v4566
        %v4568 = vmul.f32 %v4567, %v4567
        %v4569 = vsel %vm1155, %v4568, 0.0
        %4570 = vadd.xlane.f32.xlu0 %v4569
        %v4571 = vpop.xlane.xlu0 %4570
        %v4572 = vmul.f32 %v4571, %v1165
        %v4573 = vadd.f32 %v4572, 1e-05
        %v4574 = vrsqrt.pop %v4573
        %v4575 = vmul.f32 %v4574, %v4573
        %v4576 = vmul.f32 %v4575, %v4574
        %v4577 = vmul.f32 0.5, %v4576
        %v4578 = vsub.f32 1.5, %v4577
        %v4579 = vmul.f32 %v4574, %v4578
        %vm4580 = vweird.f32 %v4573
        %vm4581 = vweird.f32 %v4574
        %vm4582 = vmor %vm4580, %vm4581
        %v4583 = vsel %vm4582, %v4574, %v4579
        %v4584 = vmul.f32 %v4567, %v4583
        %v4586 = vperm.slane %v4561, 0
        %v4588 = vmul.f32 %v4584, %v4586
        %v4590 = vperm.slane %v4562, 0
        %v4592 = vadd.f32 %v4588, %v4590
        %v4593 = vld [vmem:[%s55] sm:$0xff]
        %v4594 = vld [vmem:[%s55 + $0x8] sm:$0xff]
        %v4595 = vld [vmem:[%s55 + $0x10] sm:$0xff]
        %v4596 = vld [vmem:[%s55 + $0x18] sm:$0xff]
        %v4597 = vld [vmem:[%s55 + $0x20] sm:$0xff]
        %v4598 = vld [vmem:[%s57] sm:$0x1]
        %v4600 = vperm.slane %v4598, 0
        %v4603 = vsel %vm1155, %v4592, 0
        %4605 = vmatpush.msra.mxu0 0.0
        %4606 = vmatpush.msra.mxu0 0.0
        %4607 = vmatpush.msra.mxu0 0.0
        %4608 = vmatpush.msra.mxu0 0.0
        %4609 = vmatpush.msra.mxu0 0.0
        %4610 = vmatpush.msra.mxu0 0.0
        %4611 = vmatpush.msra.mxu0 0.0
        %4612 = vmatpush.msra.mxu0 0.0
        %4613 = vmatpush.msra.mxu0 0.0
        %4614 = vmatpush.msra.mxu0 0.0
        %4615 = vmatpush.msra.mxu0 0.0
        %4616 = vmatpush.msra.mxu0 %v4597
        %4617 = vmatpush.msra.mxu0 %v4596
        %4618 = vmatpush.msra.mxu0 %v4595
        %4619 = vmatpush.msra.mxu0 %v4594
        %4620 = vmatpush.msra.mxu0 %v4593
        %4621 = vmatmul.f32.gmra.mxu0 %v4603
        %v4622 = vpop.f32.mrf.mxu0
        %v4623 = vadd.f32 %v4600, %v4622
        %4624 = vdwg.mxu0
        %4625 = vst [vmem:[%s914] sm:$0xff] %v4623
        %p4626 = scmp.lt.s32.totalorder %s71, 1
        %s4627 = scalar_select %p4626, %s71, 1
        %s4628 = smul.addr %s4627, 8
        %s4629 = scalar_lea.vmem %s59, %s4628
        // Predicated region
        $region141: #{model_forward.1} parent=135 // pred_check
          %p4630 = pneg %p703
        $region142: #{model_forward.1} parent=135 // pred_check_branch
          %4632 = sbr.rel (%p4630) target = $region144
        $region143: #{model_forward.1} parent=135 // pred_region
          _
        $region144: #{model_forward.1} parent=135 // pred_fallthru
          _
      $region136: #{model_forward.1} parent=5 // pred_fallthru
        _
      %p4633 = scmp.le.s32.totalorder 2, %s66
      // Predicated region
      $region145: #{model_forward.1} parent=5 // pred_check
        %p4634 = pneg %p4633
      $region146: #{model_forward.1} parent=5 // pred_check_branch
        %4636 = sbr.rel (%p4634) target = $region148
      $region147: #{model_forward.1} parent=5 // pred_region
        %s4637 = ssub.s32 %s66, 2
        // Predicated region
        $region149: #{model_forward.1} parent=147 // pred_check
          %p4638 = pneg %p709
        $region150: #{model_forward.1} parent=147 // pred_check_branch
          %4640 = sbr.rel (%p4638) target = $region152
        $region151: #{model_forward.1} parent=147 // pred_region
          %p4641 = scmp.lt.s32.totalorder %s72, 1
          %s4642 = scalar_select %p4641, %s72, 1
          %s4643 = smul.addr %s4642, 8
          %s4644 = scalar_lea.vmem %s59, %s4643
        $region152: #{model_forward.1} parent=147 // pred_fallthru
          _
      $region148: #{model_forward.1} parent=5 // pred_fallthru
        _
    $region6: #{model_forward.1} parent=1 // loop_footer
      %s70 = sadd.s32 1, %s66
    $region7: #{model_forward.1} parent=1 // loop_footer_branch
      %65 = sbr.rel target = $region3
    $region8: #{model_forward.1} parent=1 // loop_exit
      _
    %4645 = vsyncpa [#allocation3], 1
    %s4646 = scalar_lea.sflag [#allocation3], 1
    %4647 = vsyncpa %s4646, 1

</llo_original>
